<compile_context>
chip_gen: v5e
topology: v5e:2x2
jax: 0.10.0
libtpu: 0.0.40
codegen_flags: <defaults>
</compile_context>

<pallas_src>
import functools

import jax
import jax.numpy as jnp
import numpy as np
from jax.experimental import pallas as pl
from jax.experimental.pallas import tpu as pltpu

LN_EPS = 1e-5


def _layer_norm(y, gamma, beta):
    # f32 epilogue math (v5e has no bf16 VPU/EUP; negligible cost on v6e/v7x).
    mean = jnp.mean(y, axis=-1, keepdims=True)
    var = jnp.mean(jnp.square(y - mean), axis=-1, keepdims=True)
    return (y - mean) * jax.lax.rsqrt(var + LN_EPS) * gamma + beta


def _mm(a, w_bf16):
    """Single full-width MXU matmul: bf16 inputs, f32 accumulation."""
    return jnp.dot(a.astype(jnp.bfloat16), w_bf16,
                   preferred_element_type=jnp.float32)


def _attn_core(x_res, q, k, v, wo, bo, gamma, beta, num_heads, *, masked):
    """LayerNorm(x_res + softmax(q k^T / sqrt(Dh)) v @ Wo + bo).

    q : (S, D) f32,  k/v : (Skv, D) f32  (already projected, biases added).
    Heads are split only here; the PV result is rearranged back to (S, H*Dh) so the
    output projection is one lane-dense (S, D) @ (D, D) matmul.
    """
    S, D = q.shape
    Skv = k.shape[0]
    Dh = D // num_heads
    scale = 1.0 / float(np.sqrt(Dh))

    # Head split (layout plumbing only; tiny at these shapes).
    qh = jnp.transpose((q * scale).reshape(S, num_heads, Dh), (1, 0, 2))   # (H,S,Dh)
    kh = jnp.transpose(k.reshape(Skv, num_heads, Dh), (1, 0, 2))           # (H,Skv,Dh)
    vh = jnp.transpose(v.reshape(Skv, num_heads, Dh), (1, 0, 2))           # (H,Skv,Dh)

    # Scores for all heads in one batched contraction (flash-attention form).
    s = jnp.einsum("hqe,hke->hqk",
                   qh.astype(jnp.bfloat16), kh.astype(jnp.bfloat16),
                   preferred_element_type=jnp.float32)                     # (H,S,Skv)

    if masked:
        # Causal mask built ONCE and broadcast over the (leading) head axis.
        row = jax.lax.broadcasted_iota(jnp.int32, (S, Skv), 0)
        col = jax.lax.broadcasted_iota(jnp.int32, (S, Skv), 1)
        s = jnp.where((col > row)[None], jnp.float32(-1e30), s)

    # Softmax in f32; normalization via the (otherwise idle) EUP reciprocal.
    # At production S, switch to an online (flash-style) max/sum over Skv blocks.
    m = jnp.max(s, axis=-1, keepdims=True)
    p = jnp.exp(s - m)
    p = p * pl.reciprocal(jnp.sum(p, axis=-1, keepdims=True), approx=True)

    o = jnp.einsum("hqk,hke->hqe",
                   p.astype(jnp.bfloat16), vh.astype(jnp.bfloat16),
                   preferred_element_type=jnp.float32)                     # (H,S,Dh)

    # Recombine heads contiguously in lanes -> single (S, D) @ (D, D) projection.
    attn = jnp.transpose(o, (1, 0, 2)).reshape(S, D)
    proj = _mm(attn, wo) + bo
    return _layer_norm(x_res + proj, gamma, beta)


def _decoder_block_kernel(
        num_heads,
        x_ref, ckv_ref,
        sa_wqkv, sa_bqkv, sa_wo, sa_bo, sa_g, sa_b,
        ca_wq, ca_bq, ca_wkv, ca_bkv, ca_wo, ca_bo, ca_g, ca_b,
        w1_ref, b1_ref, w2_ref, b2_ref, ff_g, ff_b,
        o_ref):
    x = x_ref[0]        # (S, D)   f32
    ckv = ckv_ref[0]    # (Skv, D) f32
    D = x.shape[-1]

    # 1) masked self-attention + Add&Norm (fused QKV projection, lane-dense output)
    qkv = _mm(x, sa_wqkv[...]) + sa_bqkv[...]                  # (S, 3D) f32
    x = _attn_core(x, qkv[:, :D], qkv[:, D:2 * D], qkv[:, 2 * D:],
                   sa_wo[...], sa_bo[...], sa_g[...], sa_b[...],
                   num_heads, masked=True)

    # 2) cross-attention + Add&Norm (fused KV projection on the cross input)
    q = _mm(x, ca_wq[...]) + ca_bq[...]                        # (S, D)
    kvp = _mm(ckv, ca_wkv[...]) + ca_bkv[...]                  # (Skv, 2D)
    x = _attn_core(x, q, kvp[:, :D], kvp[:, D:],
                   ca_wo[...], ca_bo[...], ca_g[...], ca_b[...],
                   num_heads, masked=False)

    # 3) feed-forward + Add&Norm (at production F, tile over F in 256-wide blocks)
    h = jnp.maximum(_mm(x, w1_ref[...]) + b1_ref[...], 0.0)
    y = _mm(h, w2_ref[...]) + b2_ref[...]
    o_ref[0] = _layer_norm(x + y, ff_g[...], ff_b[...])


# ----------------------------------------------------------------------------
# One-time host-side weight preparation (hoisted OUT of the jit'ed forward)
# ----------------------------------------------------------------------------
_WEIGHT_ORDER = ("sa_wqkv", "sa_bqkv", "sa_wo", "sa_bo", "sa_g", "sa_b",
                 "ca_wq", "ca_bq", "ca_wkv", "ca_bkv", "ca_wo", "ca_bo",
                 "ca_g", "ca_b",
                 "ff_w1", "ff_b1", "ff_w2", "ff_b2", "ff_g", "ff_b")


def prepare_params(params):
    """Fuse QKV / KV weights and cast matmul weights to bf16. Call ONCE at init."""
    bf = jnp.bfloat16
    sa, ca, ff = params["self_attn"], params["cross_attn"], params["ff"]
    return dict(
        sa_wqkv=jnp.concatenate([sa["wq"], sa["wk"], sa["wv"]], axis=1).astype(bf),
        sa_bqkv=jnp.concatenate([sa["bq"], sa["bk"], sa["bv"]], axis=1),
        sa_wo=sa["wo"].astype(bf), sa_bo=sa["bo"],
        sa_g=sa["ln_g"], sa_b=sa["ln_b"],
        ca_wq=ca["wq"].astype(bf), ca_bq=ca["bq"],
        ca_wkv=jnp.concatenate([ca["wk"], ca["wv"]], axis=1).astype(bf),
        ca_bkv=jnp.concatenate([ca["bk"], ca["bv"]], axis=1),
        ca_wo=ca["wo"].astype(bf), ca_bo=ca["bo"],
        ca_g=ca["ln_g"], ca_b=ca["ln_b"],
        ff_w1=ff["w1"].astype(bf), ff_b1=ff["b1"],
        ff_w2=ff["w2"].astype(bf), ff_b2=ff["b2"],
        ff_g=ff["ln_g"], ff_b=ff["ln_b"],
    )


def _const_spec(shape):
    # Full (untiled) weight block; same block for every grid step.
    # At production sizes add pipeline_mode=pl.Buffered(1) (constant index_map,
    # so double-buffering these only wastes VMEM).
    return pl.BlockSpec(shape, lambda b: tuple(0 for _ in shape))


def transformer_decoder_block(x, cross_kv, prepped, *, num_heads):
    B, S, D = x.shape
    Skv = cross_kv.shape[1]
    weights = tuple(prepped[name] for name in _WEIGHT_ORDER)

    return pl.pallas_call(
        functools.partial(_decoder_block_kernel, num_heads),
        out_shape=jax.ShapeDtypeStruct((B, S, D), jnp.float32),
        grid=(B,),  # "parallel" so v7x's 2 TensorCores split the batch
        in_specs=[pl.BlockSpec((1, S, D), lambda b: (b, 0, 0)),
                  pl.BlockSpec((1, Skv, D), lambda b: (b, 0, 0))]
                 + [_const_spec(w.shape) for w in weights],
        out_specs=pl.BlockSpec((1, S, D), lambda b: (b, 0, 0)),
        compiler_params=pltpu.CompilerParams(
            dimension_semantics=("parallel",),
            vmem_limit_bytes=32 * 1024 * 1024),
    )(x, cross_kv, *weights)


# ----------------------------------------------------------------------------
# Pure-JAX reference (for correctness checks)
# ----------------------------------------------------------------------------
def _reference_block(x, cross_kv, params, num_heads, *, mxu_dtype=jnp.float32):
    """mxu_dtype=float32   -> the original full-f32 PyTorch-module numerics.
       mxu_dtype=bfloat16  -> mirrors the kernel's mixed precision
                              (bf16 MXU inputs, f32 accumulation/softmax/LayerNorm)."""
    def mm(a, b):
        return jnp.einsum("...ik,...kj->...ij",
                          a.astype(mxu_dtype), b.astype(mxu_dtype),
                          preferred_element_type=jnp.float32)

    def layer_norm(y, g, b):
        mean = y.mean(-1, keepdims=True)
        var = ((y - mean) ** 2).mean(-1, keepdims=True)
        return (y - mean) / jnp.sqrt(var + LN_EPS) * g + b

    def attn(xq, kv, p, masked):
        B, S, D = xq.shape
        Skv = kv.shape[1]
        Dh = D // num_heads
        q = mm(xq, p["wq"]) + p["bq"]
        k = mm(kv, p["wk"]) + p["bk"]
        v = mm(kv, p["wv"]) + p["bv"]

        def heads(t):
            return t.reshape(B, -1, num_heads, Dh).transpose(0, 2, 1, 3)

        qh = heads(q) * (1.0 / float(np.sqrt(Dh)))
        kh, vh = heads(k), heads(v)
        s = mm(qh, kh.transpose(0, 1, 3, 2))             # (B, H, S, Skv)
        if masked:
            mask = np.triu(np.ones((S, Skv), dtype=bool), 1)
            s = jnp.where(mask[None, None], -1e30, s)
        pw = jax.nn.softmax(s, axis=-1)
        o = mm(pw, vh).transpose(0, 2, 1, 3).reshape(B, S, D)
        o = mm(o, p["wo"]) + p["bo"]
        return layer_norm(xq + o, p["ln_g"], p["ln_b"])

    def ffn(xq, p):
        h = jnp.maximum(mm(xq, p["w1"]) + p["b1"], 0.0)
        y = xq + mm(h, p["w2"]) + p["b2"]
        return layer_norm(y, p["ln_g"], p["ln_b"])

    x = attn(x, x, params["self_attn"], masked=True)
    x = attn(x, cross_kv, params["cross_attn"], masked=False)
    return ffn(x, params["ff"])


# ----------------------------------------------------------------------------
# Deterministic parameter init
# ----------------------------------------------------------------------------
def init_params(key, embed_dim, feed_forward_dim):
    def lin(k, din, dout):
        kw, kb = jax.random.split(k)
        w = jax.random.normal(kw, (din, dout), jnp.float32) * (1.0 / np.sqrt(din))
        b = 0.1 * jax.random.normal(kb, (1, dout), jnp.float32)
        return w, b

    def ln(k, dim):
        kg, kb = jax.random.split(k)
        return (1.0 + 0.1 * jax.random.normal(kg, (1, dim), jnp.float32),
                0.1 * jax.random.normal(kb, (1, dim), jnp.float32))

    ks = jax.random.split(key, 13)

    def attn_params(k0, k1, k2, k3, kln):
        wq, bq = lin(k0, embed_dim, embed_dim)
        wk, bk = lin(k1, embed_dim, embed_dim)
        wv, bv = lin(k2, embed_dim, embed_dim)
        wo, bo = lin(k3, embed_dim, embed_dim)
        g, b = ln(kln, embed_dim)
        return dict(wq=wq, wk=wk, wv=wv, wo=wo, bq=bq, bk=bk, bv=bv, bo=bo,
                    ln_g=g, ln_b=b)

    w1, b1 = lin(ks[8], embed_dim, feed_forward_dim)
    w2, b2 = lin(ks[9], feed_forward_dim, embed_dim)
    ffg, ffb = ln(ks[10], embed_dim)
    return dict(
        self_attn=attn_params(ks[0], ks[1], ks[2], ks[3], ks[11]),
        cross_attn=attn_params(ks[4], ks[5], ks[6], ks[7], ks[12]),
        ff=dict(w1=w1, b1=b1, w2=w2, b2=b2, ln_g=ffg, ln_b=ffb),
    )


if __name__ == "__main__":
    B, S, D = 2, 8, 32       # batch, seq, embed_dim
    H, F = 4, 64             # num_heads, feed_forward_dim

    key = jax.random.PRNGKey(0)
    kx, kkv, kp = jax.random.split(key, 3)
    x = jax.random.normal(kx, (B, S, D), jnp.float32)
    cross_kv = jax.random.normal(kkv, (B, S, D), jnp.float32)
    params = init_params(kp, D, F)

    # One-time weight prep (fused QKV/KV + bf16 casts) OUTSIDE the jit'ed forward.
    prepped = jax.tree_util.tree_map(jax.block_until_ready, prepare_params(params))

    fwd = jax.jit(functools.partial(transformer_decoder_block, num_heads=H))
    out = jax.block_until_ready(fwd(x, cross_kv, prepped))
    out_np = np.asarray(out)

    # (1) Tight check against a reference that mirrors the kernel's mixed precision
    #     (bf16 MXU inputs, f32 accumulation / softmax / LayerNorm).
    ref_mixed = _reference_block(x, cross_kv, params, H, mxu_dtype=jnp.bfloat16)
    np.testing.assert_allclose(out_np, np.asarray(ref_mixed), rtol=2e-2, atol=2e-2)

    # (2) Sanity check against the full-f32 reference (the PyTorch module's numerics);
    #     the tolerance reflects the deliberate bf16 cast at the MXU inputs.
    ref_f32 = _reference_block(x, cross_kv, params, H, mxu_dtype=jnp.float32)
    np.testing.assert_allclose(out_np, np.asarray(ref_f32), rtol=6e-2, atol=6e-2)

    print("KERNEL_OK")
</pallas_src>

<mosaic_0001>
module attributes {stable_mosaic.version = 11 : i64} {
  func.func @_decoder_block_kernel(%arg0: i32, %arg1: memref<1x8x32xf32, #tpu.memory_space<vmem>>, %arg2: memref<1x8x32xf32, #tpu.memory_space<vmem>>, %arg3: memref<32x96xbf16, #tpu.memory_space<vmem>>, %arg4: memref<1x96xf32, #tpu.memory_space<vmem>>, %arg5: memref<32x32xbf16, #tpu.memory_space<vmem>>, %arg6: memref<1x32xf32, #tpu.memory_space<vmem>>, %arg7: memref<1x32xf32, #tpu.memory_space<vmem>>, %arg8: memref<1x32xf32, #tpu.memory_space<vmem>>, %arg9: memref<32x32xbf16, #tpu.memory_space<vmem>>, %arg10: memref<1x32xf32, #tpu.memory_space<vmem>>, %arg11: memref<32x64xbf16, #tpu.memory_space<vmem>>, %arg12: memref<1x64xf32, #tpu.memory_space<vmem>>, %arg13: memref<32x32xbf16, #tpu.memory_space<vmem>>, %arg14: memref<1x32xf32, #tpu.memory_space<vmem>>, %arg15: memref<1x32xf32, #tpu.memory_space<vmem>>, %arg16: memref<1x32xf32, #tpu.memory_space<vmem>>, %arg17: memref<32x64xbf16, #tpu.memory_space<vmem>>, %arg18: memref<1x64xf32, #tpu.memory_space<vmem>>, %arg19: memref<64x32xbf16, #tpu.memory_space<vmem>>, %arg20: memref<1x32xf32, #tpu.memory_space<vmem>>, %arg21: memref<1x32xf32, #tpu.memory_space<vmem>>, %arg22: memref<1x32xf32, #tpu.memory_space<vmem>>, %arg23: memref<1x8x32xf32, #tpu.memory_space<vmem>>) attributes {dimension_semantics = [#tpu.dimension_semantics<parallel>], iteration_bounds = array<i64: 2>, scalar_prefetch = 0 : i64, scratch_operands = 0 : i64, tpu.core_type = #tpu.core_type<tc>, window_params = [{transform_indices = @transform_0, window_bounds = array<i64: 1, 8, 32>}, {transform_indices = @transform_1, window_bounds = array<i64: 1, 8, 32>}, {pipeline_mode = #tpu.pipeline_mode<synchronous>, transform_indices = @transform_2, window_bounds = array<i64: 32, 96>}, {pipeline_mode = #tpu.pipeline_mode<synchronous>, transform_indices = @transform_3, window_bounds = array<i64: 1, 96>}, {pipeline_mode = #tpu.pipeline_mode<synchronous>, transform_indices = @transform_4, window_bounds = array<i64: 32, 32>}, {pipeline_mode = #tpu.pipeline_mode<synchronous>, transform_indices = @transform_5, window_bounds = array<i64: 1, 32>}, {pipeline_mode = #tpu.pipeline_mode<synchronous>, transform_indices = @transform_6, window_bounds = array<i64: 1, 32>}, {pipeline_mode = #tpu.pipeline_mode<synchronous>, transform_indices = @transform_7, window_bounds = array<i64: 1, 32>}, {pipeline_mode = #tpu.pipeline_mode<synchronous>, transform_indices = @transform_8, window_bounds = array<i64: 32, 32>}, {pipeline_mode = #tpu.pipeline_mode<synchronous>, transform_indices = @transform_9, window_bounds = array<i64: 1, 32>}, {pipeline_mode = #tpu.pipeline_mode<synchronous>, transform_indices = @transform_10, window_bounds = array<i64: 32, 64>}, {pipeline_mode = #tpu.pipeline_mode<synchronous>, transform_indices = @transform_11, window_bounds = array<i64: 1, 64>}, {pipeline_mode = #tpu.pipeline_mode<synchronous>, transform_indices = @transform_12, window_bounds = array<i64: 32, 32>}, {pipeline_mode = #tpu.pipeline_mode<synchronous>, transform_indices = @transform_13, window_bounds = array<i64: 1, 32>}, {pipeline_mode = #tpu.pipeline_mode<synchronous>, transform_indices = @transform_14, window_bounds = array<i64: 1, 32>}, {pipeline_mode = #tpu.pipeline_mode<synchronous>, transform_indices = @transform_15, window_bounds = array<i64: 1, 32>}, {pipeline_mode = #tpu.pipeline_mode<synchronous>, transform_indices = @transform_16, window_bounds = array<i64: 32, 64>}, {pipeline_mode = #tpu.pipeline_mode<synchronous>, transform_indices = @transform_17, window_bounds = array<i64: 1, 64>}, {pipeline_mode = #tpu.pipeline_mode<synchronous>, transform_indices = @transform_18, window_bounds = array<i64: 64, 32>}, {pipeline_mode = #tpu.pipeline_mode<synchronous>, transform_indices = @transform_19, window_bounds = array<i64: 1, 32>}, {pipeline_mode = #tpu.pipeline_mode<synchronous>, transform_indices = @transform_20, window_bounds = array<i64: 1, 32>}, {pipeline_mode = #tpu.pipeline_mode<synchronous>, transform_indices = @transform_21, window_bounds = array<i64: 1, 32>}, {transform_indices = @transform_22, window_bounds = array<i64: 1, 8, 32>}]} {
    %c0 = arith.constant 0 : index
    %c0_0 = arith.constant 0 : index
    %c0_1 = arith.constant 0 : index
    %0 = vector.load %arg1[%c0, %c0_0, %c0_1] : memref<1x8x32xf32, #tpu.memory_space<vmem>>, vector<1x8x32xf32>
    %1 = vector.shape_cast %0 : vector<1x8x32xf32> to vector<8x32xf32>
    %c0_2 = arith.constant 0 : index
    %c0_3 = arith.constant 0 : index
    %c0_4 = arith.constant 0 : index
    %2 = vector.load %arg2[%c0_2, %c0_3, %c0_4] : memref<1x8x32xf32, #tpu.memory_space<vmem>>, vector<1x8x32xf32>
    %3 = vector.shape_cast %2 : vector<1x8x32xf32> to vector<8x32xf32>
    %c0_5 = arith.constant 0 : index
    %c0_6 = arith.constant 0 : index
    %4 = vector.load %arg3[%c0_5, %c0_6] : memref<32x96xbf16, #tpu.memory_space<vmem>>, vector<32x96xbf16>
    %5 = arith.truncf %1 : vector<8x32xf32> to vector<8x32xbf16>
    %cst = arith.constant dense<0.000000e+00> : vector<8x96xf32>
    %6 = tpu.matmul %5, %4, %cst {dimension_numbers = #tpu.dot_dimension_numbers<[1], [0], [0], [1], [0, 0, 1, 1], [], []>} : vector<8x32xbf16>, vector<32x96xbf16>, vector<8x96xf32> -> vector<8x96xf32>
    %c0_7 = arith.constant 0 : index
    %c0_8 = arith.constant 0 : index
    %7 = vector.load %arg4[%c0_7, %c0_8] : memref<1x96xf32, #tpu.memory_space<vmem>>, vector<1x96xf32>
    %8 = vector.broadcast %7 : vector<1x96xf32> to vector<8x96xf32>
    %9 = arith.addf %6, %8 : vector<8x96xf32>
    %10 = vector.extract_strided_slice %9 {offsets = [0, 0], sizes = [8, 32], strides = [1, 1]} : vector<8x96xf32> to vector<8x32xf32>
    %11 = vector.extract_strided_slice %9 {offsets = [0, 32], sizes = [8, 32], strides = [1, 1]} : vector<8x96xf32> to vector<8x32xf32>
    %12 = vector.extract_strided_slice %9 {offsets = [0, 64], sizes = [8, 32], strides = [1, 1]} : vector<8x96xf32> to vector<8x32xf32>
    %c0_9 = arith.constant 0 : index
    %c0_10 = arith.constant 0 : index
    %13 = vector.load %arg5[%c0_9, %c0_10] : memref<32x32xbf16, #tpu.memory_space<vmem>>, vector<32x32xbf16>
    %c0_11 = arith.constant 0 : index
    %c0_12 = arith.constant 0 : index
    %14 = vector.load %arg6[%c0_11, %c0_12] : memref<1x32xf32, #tpu.memory_space<vmem>>, vector<1x32xf32>
    %c0_13 = arith.constant 0 : index
    %c0_14 = arith.constant 0 : index
    %15 = vector.load %arg7[%c0_13, %c0_14] : memref<1x32xf32, #tpu.memory_space<vmem>>, vector<1x32xf32>
    %c0_15 = arith.constant 0 : index
    %c0_16 = arith.constant 0 : index
    %16 = vector.load %arg8[%c0_15, %c0_16] : memref<1x32xf32, #tpu.memory_space<vmem>>, vector<1x32xf32>
    %cst_17 = arith.constant 0.353553385 : f32
    %17 = vector.broadcast %cst_17 : f32 to vector<8x32xf32>
    %18 = arith.mulf %10, %17 : vector<8x32xf32>
    %19 = vector.shape_cast %18 : vector<8x32xf32> to vector<8x4x8xf32>
    %20 = tpu.transpose %19, [1, 0, 2] : vector<8x4x8xf32> -> vector<4x8x8xf32>
    %21 = vector.shape_cast %11 : vector<8x32xf32> to vector<8x4x8xf32>
    %22 = tpu.transpose %21, [1, 0, 2] : vector<8x4x8xf32> -> vector<4x8x8xf32>
    %23 = vector.shape_cast %12 : vector<8x32xf32> to vector<8x4x8xf32>
    %24 = tpu.transpose %23, [1, 0, 2] : vector<8x4x8xf32> -> vector<4x8x8xf32>
    %25 = arith.truncf %20 : vector<4x8x8xf32> to vector<4x8x8xbf16>
    %26 = arith.truncf %22 : vector<4x8x8xf32> to vector<4x8x8xbf16>
    "tpu.trace_start"() <{level = 10 : i32, message = "hqe,hke->hqk"}> : () -> ()
    %cst_18 = arith.constant dense<0.000000e+00> : vector<4x8x8xf32>
    %27 = tpu.matmul %25, %26, %cst_18 {dimension_numbers = #tpu.dot_dimension_numbers<[2], [2], [1], [1], [0, 0, 0, 1, 1, 1], [0], [0]>} : vector<4x8x8xbf16>, vector<4x8x8xbf16>, vector<4x8x8xf32> -> vector<4x8x8xf32>
    "tpu.trace_stop"() : () -> ()
    %28 = tpu.iota {dimensions = array<i32: 0>} : vector<8x8xi32>
    %29 = tpu.iota {dimensions = array<i32: 1>} : vector<8x8xi32>
    %30 = arith.cmpi sgt, %29, %28 : vector<8x8xi32>
    %31 = vector.shape_cast %30 : vector<8x8xi1> to vector<1x8x8xi1>
    %cst_19 = arith.constant -1.000000e+30 : f32
    %32 = vector.shape_cast %31 : vector<1x8x8xi1> to vector<1x8x8xi1>
    %33 = vector.broadcast %32 : vector<1x8x8xi1> to vector<4x8x8xi1>
    %34 = vector.broadcast %cst_19 : f32 to vector<4x8x8xf32>
    %35 = arith.select %33, %34, %27 : vector<4x8x8xi1>, vector<4x8x8xf32>
    %cst_20 = arith.constant dense<0xFF800000> : vector<4x8xf32>
    %36 = vector.multi_reduction <maximumf>, %35, %cst_20 [2] : vector<4x8x8xf32> to vector<4x8xf32>
    %37 = vector.shape_cast %36 : vector<4x8xf32> to vector<4x8x1xf32>
    %38 = vector.broadcast %37 : vector<4x8x1xf32> to vector<4x8x8xf32>
    %39 = arith.subf %35, %38 : vector<4x8x8xf32>
    %40 = math.exp %39 : vector<4x8x8xf32>
    %cst_21 = arith.constant dense<0.000000e+00> : vector<4x8xf32>
    %41 = vector.multi_reduction <add>, %40, %cst_21 [2] : vector<4x8x8xf32> to vector<4x8xf32>
    %42 = vector.shape_cast %41 : vector<4x8xf32> to vector<4x8x1xf32>
    %43 = tpu.reciprocal %42 {approx = true} : vector<4x8x1xf32> -> vector<4x8x1xf32>
    %44 = vector.broadcast %43 : vector<4x8x1xf32> to vector<4x8x8xf32>
    %45 = arith.mulf %40, %44 : vector<4x8x8xf32>
    %46 = arith.truncf %45 : vector<4x8x8xf32> to vector<4x8x8xbf16>
    %47 = arith.truncf %24 : vector<4x8x8xf32> to vector<4x8x8xbf16>
    "tpu.trace_start"() <{level = 10 : i32, message = "hqk,hke->hqe"}> : () -> ()
    %cst_22 = arith.constant dense<0.000000e+00> : vector<4x8x8xf32>
    %48 = tpu.matmul %46, %47, %cst_22 {dimension_numbers = #tpu.dot_dimension_numbers<[2], [1], [1], [2], [0, 0, 0, 1, 1, 2], [0], [0]>} : vector<4x8x8xbf16>, vector<4x8x8xbf16>, vector<4x8x8xf32> -> vector<4x8x8xf32>
    "tpu.trace_stop"() : () -> ()
    %49 = tpu.transpose %48, [1, 0, 2] : vector<4x8x8xf32> -> vector<8x4x8xf32>
    %50 = vector.shape_cast %49 : vector<8x4x8xf32> to vector<8x32xf32>
    %51 = arith.truncf %50 : vector<8x32xf32> to vector<8x32xbf16>
    %cst_23 = arith.constant dense<0.000000e+00> : vector<8x32xf32>
    %52 = tpu.matmul %51, %13, %cst_23 {dimension_numbers = #tpu.dot_dimension_numbers<[1], [0], [0], [1], [0, 0, 1, 1], [], []>} : vector<8x32xbf16>, vector<32x32xbf16>, vector<8x32xf32> -> vector<8x32xf32>
    %53 = vector.broadcast %14 : vector<1x32xf32> to vector<8x32xf32>
    %54 = arith.addf %52, %53 : vector<8x32xf32>
    %55 = arith.addf %1, %54 : vector<8x32xf32>
    %cst_24 = arith.constant dense<0.000000e+00> : vector<8xf32>
    %56 = vector.multi_reduction <add>, %55, %cst_24 [1] : vector<8x32xf32> to vector<8xf32>
    %57 = vector.shape_cast %56 : vector<8xf32> to vector<8x1xf32>
    %cst_25 = arith.constant 3.200000e+01 : f32
    %58 = vector.broadcast %cst_25 : f32 to vector<8x1xf32>
    %59 = arith.divf %57, %58 : vector<8x1xf32>
    %60 = vector.broadcast %59 : vector<8x1xf32> to vector<8x32xf32>
    %61 = arith.subf %55, %60 : vector<8x32xf32>
    %62 = arith.mulf %61, %61 : vector<8x32xf32>
    %cst_26 = arith.constant dense<0.000000e+00> : vector<8xf32>
    %63 = vector.multi_reduction <add>, %62, %cst_26 [1] : vector<8x32xf32> to vector<8xf32>
    %64 = vector.shape_cast %63 : vector<8xf32> to vector<8x1xf32>
    %cst_27 = arith.constant 3.200000e+01 : f32
    %65 = vector.broadcast %cst_27 : f32 to vector<8x1xf32>
    %66 = arith.divf %64, %65 : vector<8x1xf32>
    %67 = vector.broadcast %59 : vector<8x1xf32> to vector<8x32xf32>
    %68 = arith.subf %55, %67 : vector<8x32xf32>
    %cst_28 = arith.constant 9.99999974E-6 : f32
    %69 = vector.broadcast %cst_28 : f32 to vector<8x1xf32>
    %70 = arith.addf %66, %69 : vector<8x1xf32>
    %71 = math.rsqrt %70 : vector<8x1xf32>
    %72 = vector.broadcast %71 : vector<8x1xf32> to vector<8x32xf32>
    %73 = arith.mulf %68, %72 : vector<8x32xf32>
    %74 = vector.broadcast %15 : vector<1x32xf32> to vector<8x32xf32>
    %75 = arith.mulf %73, %74 : vector<8x32xf32>
    %76 = vector.broadcast %16 : vector<1x32xf32> to vector<8x32xf32>
    %77 = arith.addf %75, %76 : vector<8x32xf32>
    %c0_29 = arith.constant 0 : index
    %c0_30 = arith.constant 0 : index
    %78 = vector.load %arg9[%c0_29, %c0_30] : memref<32x32xbf16, #tpu.memory_space<vmem>>, vector<32x32xbf16>
    %79 = arith.truncf %77 : vector<8x32xf32> to vector<8x32xbf16>
    %cst_31 = arith.constant dense<0.000000e+00> : vector<8x32xf32>
    %80 = tpu.matmul %79, %78, %cst_31 {dimension_numbers = #tpu.dot_dimension_numbers<[1], [0], [0], [1], [0, 0, 1, 1], [], []>} : vector<8x32xbf16>, vector<32x32xbf16>, vector<8x32xf32> -> vector<8x32xf32>
    %c0_32 = arith.constant 0 : index
    %c0_33 = arith.constant 0 : index
    %81 = vector.load %arg10[%c0_32, %c0_33] : memref<1x32xf32, #tpu.memory_space<vmem>>, vector<1x32xf32>
    %82 = vector.broadcast %81 : vector<1x32xf32> to vector<8x32xf32>
    %83 = arith.addf %80, %82 : vector<8x32xf32>
    %c0_34 = arith.constant 0 : index
    %c0_35 = arith.constant 0 : index
    %84 = vector.load %arg11[%c0_34, %c0_35] : memref<32x64xbf16, #tpu.memory_space<vmem>>, vector<32x64xbf16>
    %85 = arith.truncf %3 : vector<8x32xf32> to vector<8x32xbf16>
    %cst_36 = arith.constant dense<0.000000e+00> : vector<8x64xf32>
    %86 = tpu.matmul %85, %84, %cst_36 {dimension_numbers = #tpu.dot_dimension_numbers<[1], [0], [0], [1], [0, 0, 1, 1], [], []>} : vector<8x32xbf16>, vector<32x64xbf16>, vector<8x64xf32> -> vector<8x64xf32>
    %c0_37 = arith.constant 0 : index
    %c0_38 = arith.constant 0 : index
    %87 = vector.load %arg12[%c0_37, %c0_38] : memref<1x64xf32, #tpu.memory_space<vmem>>, vector<1x64xf32>
    %88 = vector.broadcast %87 : vector<1x64xf32> to vector<8x64xf32>
    %89 = arith.addf %86, %88 : vector<8x64xf32>
    %90 = vector.extract_strided_slice %89 {offsets = [0, 0], sizes = [8, 32], strides = [1, 1]} : vector<8x64xf32> to vector<8x32xf32>
    %91 = vector.extract_strided_slice %89 {offsets = [0, 32], sizes = [8, 32], strides = [1, 1]} : vector<8x64xf32> to vector<8x32xf32>
    %c0_39 = arith.constant 0 : index
    %c0_40 = arith.constant 0 : index
    %92 = vector.load %arg13[%c0_39, %c0_40] : memref<32x32xbf16, #tpu.memory_space<vmem>>, vector<32x32xbf16>
    %c0_41 = arith.constant 0 : index
    %c0_42 = arith.constant 0 : index
    %93 = vector.load %arg14[%c0_41, %c0_42] : memref<1x32xf32, #tpu.memory_space<vmem>>, vector<1x32xf32>
    %c0_43 = arith.constant 0 : index
    %c0_44 = arith.constant 0 : index
    %94 = vector.load %arg15[%c0_43, %c0_44] : memref<1x32xf32, #tpu.memory_space<vmem>>, vector<1x32xf32>
    %c0_45 = arith.constant 0 : index
    %c0_46 = arith.constant 0 : index
    %95 = vector.load %arg16[%c0_45, %c0_46] : memref<1x32xf32, #tpu.memory_space<vmem>>, vector<1x32xf32>
    %cst_47 = arith.constant 0.353553385 : f32
    %96 = vector.broadcast %cst_47 : f32 to vector<8x32xf32>
    %97 = arith.mulf %83, %96 : vector<8x32xf32>
    %98 = vector.shape_cast %97 : vector<8x32xf32> to vector<8x4x8xf32>
    %99 = tpu.transpose %98, [1, 0, 2] : vector<8x4x8xf32> -> vector<4x8x8xf32>
    %100 = vector.shape_cast %90 : vector<8x32xf32> to vector<8x4x8xf32>
    %101 = tpu.transpose %100, [1, 0, 2] : vector<8x4x8xf32> -> vector<4x8x8xf32>
    %102 = vector.shape_cast %91 : vector<8x32xf32> to vector<8x4x8xf32>
    %103 = tpu.transpose %102, [1, 0, 2] : vector<8x4x8xf32> -> vector<4x8x8xf32>
    %104 = arith.truncf %99 : vector<4x8x8xf32> to vector<4x8x8xbf16>
    %105 = arith.truncf %101 : vector<4x8x8xf32> to vector<4x8x8xbf16>
    "tpu.trace_start"() <{level = 10 : i32, message = "hqe,hke->hqk"}> : () -> ()
    %cst_48 = arith.constant dense<0.000000e+00> : vector<4x8x8xf32>
    %106 = tpu.matmul %104, %105, %cst_48 {dimension_numbers = #tpu.dot_dimension_numbers<[2], [2], [1], [1], [0, 0, 0, 1, 1, 1], [0], [0]>} : vector<4x8x8xbf16>, vector<4x8x8xbf16>, vector<4x8x8xf32> -> vector<4x8x8xf32>
    "tpu.trace_stop"() : () -> ()
    %cst_49 = arith.constant dense<0xFF800000> : vector<4x8xf32>
    %107 = vector.multi_reduction <maximumf>, %106, %cst_49 [2] : vector<4x8x8xf32> to vector<4x8xf32>
    %108 = vector.shape_cast %107 : vector<4x8xf32> to vector<4x8x1xf32>
    %109 = vector.broadcast %108 : vector<4x8x1xf32> to vector<4x8x8xf32>
    %110 = arith.subf %106, %109 : vector<4x8x8xf32>
    %111 = math.exp %110 : vector<4x8x8xf32>
    %cst_50 = arith.constant dense<0.000000e+00> : vector<4x8xf32>
    %112 = vector.multi_reduction <add>, %111, %cst_50 [2] : vector<4x8x8xf32> to vector<4x8xf32>
    %113 = vector.shape_cast %112 : vector<4x8xf32> to vector<4x8x1xf32>
    %114 = tpu.reciprocal %113 {approx = true} : vector<4x8x1xf32> -> vector<4x8x1xf32>
    %115 = vector.broadcast %114 : vector<4x8x1xf32> to vector<4x8x8xf32>
    %116 = arith.mulf %111, %115 : vector<4x8x8xf32>
    %117 = arith.truncf %116 : vector<4x8x8xf32> to vector<4x8x8xbf16>
    %118 = arith.truncf %103 : vector<4x8x8xf32> to vector<4x8x8xbf16>
    "tpu.trace_start"() <{level = 10 : i32, message = "hqk,hke->hqe"}> : () -> ()
    %cst_51 = arith.constant dense<0.000000e+00> : vector<4x8x8xf32>
    %119 = tpu.matmul %117, %118, %cst_51 {dimension_numbers = #tpu.dot_dimension_numbers<[2], [1], [1], [2], [0, 0, 0, 1, 1, 2], [0], [0]>} : vector<4x8x8xbf16>, vector<4x8x8xbf16>, vector<4x8x8xf32> -> vector<4x8x8xf32>
    "tpu.trace_stop"() : () -> ()
    %120 = tpu.transpose %119, [1, 0, 2] : vector<4x8x8xf32> -> vector<8x4x8xf32>
    %121 = vector.shape_cast %120 : vector<8x4x8xf32> to vector<8x32xf32>
    %122 = arith.truncf %121 : vector<8x32xf32> to vector<8x32xbf16>
    %cst_52 = arith.constant dense<0.000000e+00> : vector<8x32xf32>
    %123 = tpu.matmul %122, %92, %cst_52 {dimension_numbers = #tpu.dot_dimension_numbers<[1], [0], [0], [1], [0, 0, 1, 1], [], []>} : vector<8x32xbf16>, vector<32x32xbf16>, vector<8x32xf32> -> vector<8x32xf32>
    %124 = vector.broadcast %93 : vector<1x32xf32> to vector<8x32xf32>
    %125 = arith.addf %123, %124 : vector<8x32xf32>
    %126 = arith.addf %77, %125 : vector<8x32xf32>
    %cst_53 = arith.constant dense<0.000000e+00> : vector<8xf32>
    %127 = vector.multi_reduction <add>, %126, %cst_53 [1] : vector<8x32xf32> to vector<8xf32>
    %128 = vector.shape_cast %127 : vector<8xf32> to vector<8x1xf32>
    %cst_54 = arith.constant 3.200000e+01 : f32
    %129 = vector.broadcast %cst_54 : f32 to vector<8x1xf32>
    %130 = arith.divf %128, %129 : vector<8x1xf32>
    %131 = vector.broadcast %130 : vector<8x1xf32> to vector<8x32xf32>
    %132 = arith.subf %126, %131 : vector<8x32xf32>
    %133 = arith.mulf %132, %132 : vector<8x32xf32>
    %cst_55 = arith.constant dense<0.000000e+00> : vector<8xf32>
    %134 = vector.multi_reduction <add>, %133, %cst_55 [1] : vector<8x32xf32> to vector<8xf32>
    %135 = vector.shape_cast %134 : vector<8xf32> to vector<8x1xf32>
    %cst_56 = arith.constant 3.200000e+01 : f32
    %136 = vector.broadcast %cst_56 : f32 to vector<8x1xf32>
    %137 = arith.divf %135, %136 : vector<8x1xf32>
    %138 = vector.broadcast %130 : vector<8x1xf32> to vector<8x32xf32>
    %139 = arith.subf %126, %138 : vector<8x32xf32>
    %cst_57 = arith.constant 9.99999974E-6 : f32
    %140 = vector.broadcast %cst_57 : f32 to vector<8x1xf32>
    %141 = arith.addf %137, %140 : vector<8x1xf32>
    %142 = math.rsqrt %141 : vector<8x1xf32>
    %143 = vector.broadcast %142 : vector<8x1xf32> to vector<8x32xf32>
    %144 = arith.mulf %139, %143 : vector<8x32xf32>
    %145 = vector.broadcast %94 : vector<1x32xf32> to vector<8x32xf32>
    %146 = arith.mulf %144, %145 : vector<8x32xf32>
    %147 = vector.broadcast %95 : vector<1x32xf32> to vector<8x32xf32>
    %148 = arith.addf %146, %147 : vector<8x32xf32>
    %c0_58 = arith.constant 0 : index
    %c0_59 = arith.constant 0 : index
    %149 = vector.load %arg17[%c0_58, %c0_59] : memref<32x64xbf16, #tpu.memory_space<vmem>>, vector<32x64xbf16>
    %150 = arith.truncf %148 : vector<8x32xf32> to vector<8x32xbf16>
    %cst_60 = arith.constant dense<0.000000e+00> : vector<8x64xf32>
    %151 = tpu.matmul %150, %149, %cst_60 {dimension_numbers = #tpu.dot_dimension_numbers<[1], [0], [0], [1], [0, 0, 1, 1], [], []>} : vector<8x32xbf16>, vector<32x64xbf16>, vector<8x64xf32> -> vector<8x64xf32>
    %c0_61 = arith.constant 0 : index
    %c0_62 = arith.constant 0 : index
    %152 = vector.load %arg18[%c0_61, %c0_62] : memref<1x64xf32, #tpu.memory_space<vmem>>, vector<1x64xf32>
    %153 = vector.broadcast %152 : vector<1x64xf32> to vector<8x64xf32>
    %154 = arith.addf %151, %153 : vector<8x64xf32>
    %cst_63 = arith.constant 0.000000e+00 : f32
    %155 = vector.broadcast %cst_63 : f32 to vector<8x64xf32>
    %156 = arith.maximumf %154, %155 : vector<8x64xf32>
    %c0_64 = arith.constant 0 : index
    %c0_65 = arith.constant 0 : index
    %157 = vector.load %arg19[%c0_64, %c0_65] : memref<64x32xbf16, #tpu.memory_space<vmem>>, vector<64x32xbf16>
    %158 = arith.truncf %156 : vector<8x64xf32> to vector<8x64xbf16>
    %cst_66 = arith.constant dense<0.000000e+00> : vector<8x32xf32>
    %159 = tpu.matmul %158, %157, %cst_66 {dimension_numbers = #tpu.dot_dimension_numbers<[1], [0], [0], [1], [0, 0, 1, 1], [], []>} : vector<8x64xbf16>, vector<64x32xbf16>, vector<8x32xf32> -> vector<8x32xf32>
    %c0_67 = arith.constant 0 : index
    %c0_68 = arith.constant 0 : index
    %160 = vector.load %arg20[%c0_67, %c0_68] : memref<1x32xf32, #tpu.memory_space<vmem>>, vector<1x32xf32>
    %161 = vector.broadcast %160 : vector<1x32xf32> to vector<8x32xf32>
    %162 = arith.addf %159, %161 : vector<8x32xf32>
    %163 = arith.addf %148, %162 : vector<8x32xf32>
    %c0_69 = arith.constant 0 : index
    %c0_70 = arith.constant 0 : index
    %164 = vector.load %arg21[%c0_69, %c0_70] : memref<1x32xf32, #tpu.memory_space<vmem>>, vector<1x32xf32>
    %c0_71 = arith.constant 0 : index
    %c0_72 = arith.constant 0 : index
    %165 = vector.load %arg22[%c0_71, %c0_72] : memref<1x32xf32, #tpu.memory_space<vmem>>, vector<1x32xf32>
    %cst_73 = arith.constant dense<0.000000e+00> : vector<8xf32>
    %166 = vector.multi_reduction <add>, %163, %cst_73 [1] : vector<8x32xf32> to vector<8xf32>
    %167 = vector.shape_cast %166 : vector<8xf32> to vector<8x1xf32>
    %cst_74 = arith.constant 3.200000e+01 : f32
    %168 = vector.broadcast %cst_74 : f32 to vector<8x1xf32>
    %169 = arith.divf %167, %168 : vector<8x1xf32>
    %170 = vector.broadcast %169 : vector<8x1xf32> to vector<8x32xf32>
    %171 = arith.subf %163, %170 : vector<8x32xf32>
    %172 = arith.mulf %171, %171 : vector<8x32xf32>
    %cst_75 = arith.constant dense<0.000000e+00> : vector<8xf32>
    %173 = vector.multi_reduction <add>, %172, %cst_75 [1] : vector<8x32xf32> to vector<8xf32>
    %174 = vector.shape_cast %173 : vector<8xf32> to vector<8x1xf32>
    %cst_76 = arith.constant 3.200000e+01 : f32
    %175 = vector.broadcast %cst_76 : f32 to vector<8x1xf32>
    %176 = arith.divf %174, %175 : vector<8x1xf32>
    %177 = vector.broadcast %169 : vector<8x1xf32> to vector<8x32xf32>
    %178 = arith.subf %163, %177 : vector<8x32xf32>
    %cst_77 = arith.constant 9.99999974E-6 : f32
    %179 = vector.broadcast %cst_77 : f32 to vector<8x1xf32>
    %180 = arith.addf %176, %179 : vector<8x1xf32>
    %181 = math.rsqrt %180 : vector<8x1xf32>
    %182 = vector.broadcast %181 : vector<8x1xf32> to vector<8x32xf32>
    %183 = arith.mulf %178, %182 : vector<8x32xf32>
    %184 = vector.broadcast %164 : vector<1x32xf32> to vector<8x32xf32>
    %185 = arith.mulf %183, %184 : vector<8x32xf32>
    %186 = vector.broadcast %165 : vector<1x32xf32> to vector<8x32xf32>
    %187 = arith.addf %185, %186 : vector<8x32xf32>
    %c0_78 = arith.constant 0 : index
    %c0_79 = arith.constant 0 : index
    %c0_80 = arith.constant 0 : index
    %188 = vector.load %arg23[%c0_78, %c0_79, %c0_80] : memref<1x8x32xf32, #tpu.memory_space<vmem>>, vector<1x8x32xf32>
    %189 = vector.shape_cast %188 : vector<1x8x32xf32> to vector<8x32xf32>
    %190 = vector.shape_cast %187 : vector<8x32xf32> to vector<1x8x32xf32>
    tpu.vector_store %arg23[%c0_78, %c0_79, %c0_80], %190 {strides = array<i32>} : memref<1x8x32xf32, #tpu.memory_space<vmem>>, vector<1x8x32xf32>,
    return
  }
  func.func @transform_0(%arg0: i32) -> (i32, i32, i32) {
    %c0_i32 = arith.constant 0 : i32
    %c0_i32_0 = arith.constant 0 : i32
    %c0_i32_1 = arith.constant 0 : i32
    return %arg0, %c0_i32, %c0_i32_0 : i32, i32, i32
  }
  func.func @transform_1(%arg0: i32) -> (i32, i32, i32) {
    %c0_i32 = arith.constant 0 : i32
    %c0_i32_0 = arith.constant 0 : i32
    %c0_i32_1 = arith.constant 0 : i32
    return %arg0, %c0_i32, %c0_i32_0 : i32, i32, i32
  }
  func.func @transform_2(%arg0: i32) -> (i32, i32) {
    %c0_i32 = arith.constant 0 : i32
    %c0_i32_0 = arith.constant 0 : i32
    %c0_i32_1 = arith.constant 0 : i32
    return %c0_i32, %c0_i32_0 : i32, i32
  }
  func.func @transform_3(%arg0: i32) -> (i32, i32) {
    %c0_i32 = arith.constant 0 : i32
    %c0_i32_0 = arith.constant 0 : i32
    %c0_i32_1 = arith.constant 0 : i32
    return %c0_i32, %c0_i32_0 : i32, i32
  }
  func.func @transform_4(%arg0: i32) -> (i32, i32) {
    %c0_i32 = arith.constant 0 : i32
    %c0_i32_0 = arith.constant 0 : i32
    %c0_i32_1 = arith.constant 0 : i32
    return %c0_i32, %c0_i32_0 : i32, i32
  }
  func.func @transform_5(%arg0: i32) -> (i32, i32) {
    %c0_i32 = arith.constant 0 : i32
    %c0_i32_0 = arith.constant 0 : i32
    %c0_i32_1 = arith.constant 0 : i32
    return %c0_i32, %c0_i32_0 : i32, i32
  }
  func.func @transform_6(%arg0: i32) -> (i32, i32) {
    %c0_i32 = arith.constant 0 : i32
    %c0_i32_0 = arith.constant 0 : i32
    %c0_i32_1 = arith.constant 0 : i32
    return %c0_i32, %c0_i32_0 : i32, i32
  }
  func.func @transform_7(%arg0: i32) -> (i32, i32) {
    %c0_i32 = arith.constant 0 : i32
    %c0_i32_0 = arith.constant 0 : i32
    %c0_i32_1 = arith.constant 0 : i32
    return %c0_i32, %c0_i32_0 : i32, i32
  }
  func.func @transform_8(%arg0: i32) -> (i32, i32) {
    %c0_i32 = arith.constant 0 : i32
    %c0_i32_0 = arith.constant 0 : i32
    %c0_i32_1 = arith.constant 0 : i32
    return %c0_i32, %c0_i32_0 : i32, i32
  }
  func.func @transform_9(%arg0: i32) -> (i32, i32) {
    %c0_i32 = arith.constant 0 : i32
    %c0_i32_0 = arith.constant 0 : i32
    %c0_i32_1 = arith.constant 0 : i32
    return %c0_i32, %c0_i32_0 : i32, i32
  }
  func.func @transform_10(%arg0: i32) -> (i32, i32) {
    %c0_i32 = arith.constant 0 : i32
    %c0_i32_0 = arith.constant 0 : i32
    %c0_i32_1 = arith.constant 0 : i32
    return %c0_i32, %c0_i32_0 : i32, i32
  }
  func.func @transform_11(%arg0: i32) -> (i32, i32) {
    %c0_i32 = arith.constant 0 : i32
    %c0_i32_0 = arith.constant 0 : i32
    %c0_i32_1 = arith.constant 0 : i32
    return %c0_i32, %c0_i32_0 : i32, i32
  }
  func.func @transform_12(%arg0: i32) -> (i32, i32) {
    %c0_i32 = arith.constant 0 : i32
    %c0_i32_0 = arith.constant 0 : i32
    %c0_i32_1 = arith.constant 0 : i32
    return %c0_i32, %c0_i32_0 : i32, i32
  }
  func.func @transform_13(%arg0: i32) -> (i32, i32) {
    %c0_i32 = arith.constant 0 : i32
    %c0_i32_0 = arith.constant 0 : i32
    %c0_i32_1 = arith.constant 0 : i32
    return %c0_i32, %c0_i32_0 : i32, i32
  }
  func.func @transform_14(%arg0: i32) -> (i32, i32) {
    %c0_i32 = arith.constant 0 : i32
    %c0_i32_0 = arith.constant 0 : i32
    %c0_i32_1 = arith.constant 0 : i32
    return %c0_i32, %c0_i32_0 : i32, i32
  }
  func.func @transform_15(%arg0: i32) -> (i32, i32) {
    %c0_i32 = arith.constant 0 : i32
    %c0_i32_0 = arith.constant 0 : i32
    %c0_i32_1 = arith.constant 0 : i32
    return %c0_i32, %c0_i32_0 : i32, i32
  }
  func.func @transform_16(%arg0: i32) -> (i32, i32) {
    %c0_i32 = arith.constant 0 : i32
    %c0_i32_0 = arith.constant 0 : i32
    %c0_i32_1 = arith.constant 0 : i32
    return %c0_i32, %c0_i32_0 : i32, i32
  }
  func.func @transform_17(%arg0: i32) -> (i32, i32) {
    %c0_i32 = arith.constant 0 : i32
    %c0_i32_0 = arith.constant 0 : i32
    %c0_i32_1 = arith.constant 0 : i32
    return %c0_i32, %c0_i32_0 : i32, i32
  }
  func.func @transform_18(%arg0: i32) -> (i32, i32) {
    %c0_i32 = arith.constant 0 : i32
    %c0_i32_0 = arith.constant 0 : i32
    %c0_i32_1 = arith.constant 0 : i32
    return %c0_i32, %c0_i32_0 : i32, i32
  }
  func.func @transform_19(%arg0: i32) -> (i32, i32) {
    %c0_i32 = arith.constant 0 : i32
    %c0_i32_0 = arith.constant 0 : i32
    %c0_i32_1 = arith.constant 0 : i32
    return %c0_i32, %c0_i32_0 : i32, i32
  }
  func.func @transform_20(%arg0: i32) -> (i32, i32) {
    %c0_i32 = arith.constant 0 : i32
    %c0_i32_0 = arith.constant 0 : i32
    %c0_i32_1 = arith.constant 0 : i32
    return %c0_i32, %c0_i32_0 : i32, i32
  }
  func.func @transform_21(%arg0: i32) -> (i32, i32) {
    %c0_i32 = arith.constant 0 : i32
    %c0_i32_0 = arith.constant 0 : i32
    %c0_i32_1 = arith.constant 0 : i32
    return %c0_i32, %c0_i32_0 : i32, i32
  }
  func.func @transform_22(%arg0: i32) -> (i32, i32, i32) {
    %c0_i32 = arith.constant 0 : i32
    %c0_i32_0 = arith.constant 0 : i32
    %c0_i32_1 = arith.constant 0 : i32
    return %arg0, %c0_i32, %c0_i32_0 : i32, i32, i32
  }
}

</mosaic_0001>

<llo_original>
// kernel: transformer_decoder_block.1
$region0: #{transformer_decoder_block.1}
  #allocation0 [shape = 'u32[]', space=smem, size = 0x4, offset = 0x4, fixed_abs, tag = 'smem constant byte address 0x4 - core index']
  #allocation1 [shape = 'u32[72,128]{1,0:T(1,128)}', space=vmem, size = 0x9000, scoped, tag = 'internal scratch']
  %s0 = inlined_call_operand.vmem [shape: f32[2,8,32], index: 0, kind: input, shape index: {}]
  %s1 = inlined_call_operand.vmem [shape: f32[2,8,32], index: 1, kind: input, shape index: {}]
  %s2 = inlined_call_operand.vmem [shape: bf16[32,96], index: 2, kind: input, shape index: {}]
  %s3 = inlined_call_operand.vmem [shape: f32[1,96], index: 3, kind: input, shape index: {}]
  %s4 = inlined_call_operand.vmem [shape: bf16[32,32], index: 4, kind: input, shape index: {}]
  %s5 = inlined_call_operand.hbm [shape: f32[1,32], index: 5, kind: input, shape index: {}]
  %s6 = inlined_call_operand.vmem [shape: f32[1,32], index: 6, kind: input, shape index: {}]
  %s7 = inlined_call_operand.hbm [shape: f32[1,32], index: 7, kind: input, shape index: {}]
  %s8 = inlined_call_operand.hbm [shape: bf16[32,32], index: 8, kind: input, shape index: {}]
  %s9 = inlined_call_operand.hbm [shape: f32[1,32], index: 9, kind: input, shape index: {}]
  %s10 = inlined_call_operand.hbm [shape: bf16[32,64], index: 10, kind: input, shape index: {}]
  %s11 = inlined_call_operand.hbm [shape: f32[1,64], index: 11, kind: input, shape index: {}]
  %s12 = inlined_call_operand.hbm [shape: bf16[32,32], index: 12, kind: input, shape index: {}]
  %s13 = inlined_call_operand.hbm [shape: f32[1,32], index: 13, kind: input, shape index: {}]
  %s14 = inlined_call_operand.hbm [shape: f32[1,32], index: 14, kind: input, shape index: {}]
  %s15 = inlined_call_operand.hbm [shape: f32[1,32], index: 15, kind: input, shape index: {}]
  %s16 = inlined_call_operand.hbm [shape: bf16[32,64], index: 16, kind: input, shape index: {}]
  %s17 = inlined_call_operand.hbm [shape: f32[1,64], index: 17, kind: input, shape index: {}]
  %s18 = inlined_call_operand.vmem [shape: bf16[64,32], index: 18, kind: input, shape index: {}]
  %s19 = inlined_call_operand.hbm [shape: f32[1,32], index: 19, kind: input, shape index: {}]
  %s20 = inlined_call_operand.hbm [shape: f32[1,32], index: 20, kind: input, shape index: {}]
  %s21 = inlined_call_operand.hbm [shape: f32[1,32], index: 21, kind: input, shape index: {}]
  %s22 = inlined_call_operand.hbm [shape: f32[2,8,32], index: 22, kind: output, shape index: {}]
  %s23 = sld [smem:[#allocation0]]
  $region181: #{transformer_decoder_block.1} parent=0
    _
  %s25 = ssub.s32 1, %s23
  %s26 = scalar_select 0, %s25, %s23
  $region1: #{transformer_decoder_block.1} parent=0
    #allocation2 [shape = 'u8[512]{0}', space=vmem, size = 0x400, scoped, tag = 'input window, operand 5, single buffered']
    #allocation3 [shape = 's32[2]{0}', space=sflag, size = 0x8, scoped, tag = 'scoped memory for transformer_decoder_block.1']
    #allocation4 [shape = 's32[2]{0}', space=sflag, size = 0x8, scoped, tag = 'scoped memory for transformer_decoder_block.1']
    #allocation5 [shape = 'u8[512]{0}', space=vmem, size = 0x400, scoped, tag = 'input window, operand 7, single buffered']
    #allocation6 [shape = 's32[1]{0}', space=sflag, size = 0x4, scoped, tag = 'scoped memory for transformer_decoder_block.1']
    #allocation7 [shape = 'u8[8192]{0}', space=vmem, size = 0x2000, scoped, tag = 'input window, operand 8, single buffered']
    #allocation8 [shape = 'u8[512]{0}', space=vmem, size = 0x400, scoped, tag = 'input window, operand 9, single buffered']
    #allocation9 [shape = 's32[1]{0}', space=sflag, size = 0x4, scoped, tag = 'scoped memory for transformer_decoder_block.1']
    #allocation10 [shape = 'u8[8192]{0}', space=vmem, size = 0x2000, scoped, tag = 'input window, operand 10, single buffered']
    #allocation11 [shape = 'u8[512]{0}', space=vmem, size = 0x400, scoped, tag = 'input window, operand 11, single buffered']
    #allocation12 [shape = 's32[1]{0}', space=sflag, size = 0x4, scoped, tag = 'scoped memory for transformer_decoder_block.1']
    #allocation13 [shape = 'u8[8192]{0}', space=vmem, size = 0x2000, scoped, tag = 'input window, operand 12, single buffered']
    #allocation14 [shape = 'u8[512]{0}', space=vmem, size = 0x400, scoped, tag = 'input window, operand 13, single buffered']
    #allocation15 [shape = 's32[1]{0}', space=sflag, size = 0x4, scoped, tag = 'scoped memory for transformer_decoder_block.1']
    #allocation16 [shape = 'u8[512]{0}', space=vmem, size = 0x400, scoped, tag = 'input window, operand 14, single buffered']
    #allocation17 [shape = 'u8[512]{0}', space=vmem, size = 0x400, scoped, tag = 'input window, operand 15, single buffered']
    #allocation18 [shape = 's32[1]{0}', space=sflag, size = 0x4, scoped, tag = 'scoped memory for transformer_decoder_block.1']
    #allocation19 [shape = 'u8[8192]{0}', space=vmem, size = 0x2000, scoped, tag = 'input window, operand 16, single buffered']
    #allocation20 [shape = 'u8[512]{0}', space=vmem, size = 0x400, scoped, tag = 'input window, operand 17, single buffered']
    #allocation21 [shape = 's32[1]{0}', space=sflag, size = 0x4, scoped, tag = 'scoped memory for transformer_decoder_block.1']
    #allocation22 [shape = 'u8[512]{0}', space=vmem, size = 0x400, scoped, tag = 'input window, operand 19, single buffered']
    #allocation23 [shape = 'u8[512]{0}', space=vmem, size = 0x400, scoped, tag = 'input window, operand 20, single buffered']
    #allocation24 [shape = 's32[1]{0}', space=sflag, size = 0x4, scoped, tag = 'scoped memory for transformer_decoder_block.1']
    #allocation25 [shape = 'u8[512]{0}', space=vmem, size = 0x400, scoped, tag = 'input window, operand 21, single buffered']
    #allocation26 [shape = 'u8[8192]{0}', space=vmem, size = 0x2000, scoped, tag = 'output window, operand 0']
    %27 = vsyncpa [#allocation3], 0
    %28 = vsyncpa [#allocation6], 0
    %29 = vsyncpa [#allocation9], 0
    %30 = vsyncpa [#allocation12], 0
    %31 = vsyncpa [#allocation15], 0
    %32 = vsyncpa [#allocation18], 0
    %33 = vsyncpa [#allocation21], 0
    %34 = vsyncpa [#allocation24], 0
    %35 = vsyncpa [#allocation4], 0
    %s36 = scalar_lea.sflag [#allocation4], 1
    %37 = vsyncpa %s36, 0
    loop: start=0, step=1, limit=4
    $region2: #{transformer_decoder_block.1} parent=1 // loop_pre_header
      _
    $region3: #{transformer_decoder_block.1} parent=1 // loop_header
      %s39 = sphi 0, %s43
      %p40 = scmp.ge.s32.totalorder %s39, 4
      %s49 = sphi 0, %s51
      %s52 = sphi 0, %s49
      %s53 = sphi 0, %s52
      %s69 = sphi 0, %s53
      %s75 = sphi 0, %s77
      %s78 = sphi 0, %s75
      %s79 = sphi 0, %s78
      %s95 = sphi 0, %s79
      %s99 = sphi 0, %s99
      %s101 = sphi 0, %s99
      %s102 = sphi 0, %s101
      %s116 = sphi 0, %s102
      %s120 = sphi 0, %s120
      %s122 = sphi 0, %s120
      %s123 = sphi 0, %s122
      %s137 = sphi 0, %s123
      %s141 = sphi 0, %s141
      %s143 = sphi 0, %s141
      %s144 = sphi 0, %s143
      %s158 = sphi 0, %s144
      %s162 = sphi 0, %s162
      %s164 = sphi 0, %s162
      %s165 = sphi 0, %s164
      %s179 = sphi 0, %s165
      %s183 = sphi 0, %s183
      %s185 = sphi 0, %s183
      %s186 = sphi 0, %s185
      %s200 = sphi 0, %s186
      %s204 = sphi 0, %s204
      %s206 = sphi 0, %s204
      %s207 = sphi 0, %s206
      %s221 = sphi 0, %s207
      %s225 = sphi 0, %s225
      %s227 = sphi 0, %s225
      %s228 = sphi 0, %s227
      %s242 = sphi 0, %s228
      %s246 = sphi 0, %s246
      %s248 = sphi 0, %s246
      %s249 = sphi 0, %s248
      %s263 = sphi 0, %s249
      %s267 = sphi 0, %s267
      %s269 = sphi 0, %s267
      %s270 = sphi 0, %s269
      %s284 = sphi 0, %s270
      %s288 = sphi 0, %s288
      %s290 = sphi 0, %s288
      %s291 = sphi 0, %s290
      %s305 = sphi 0, %s291
      %s309 = sphi 0, %s309
      %s311 = sphi 0, %s309
      %s312 = sphi 0, %s311
      %s326 = sphi 0, %s312
      %s330 = sphi 0, %s330
      %s332 = sphi 0, %s330
      %s333 = sphi 0, %s332
      %s347 = sphi 0, %s333
      %s351 = sphi 0, %s351
      %s353 = sphi 0, %s351
      %s354 = sphi 0, %s353
      %s368 = sphi 0, %s354
      %s372 = sphi 0, %s372
      %s374 = sphi 0, %s372
      %s375 = sphi 0, %s374
      %s389 = sphi 0, %s375
      %s393 = sphi 0, %s393
      %s395 = sphi 0, %s393
      %s396 = sphi 0, %s395
      %s410 = sphi 0, %s396
      %s414 = sphi 0, %s414
      %s416 = sphi 0, %s414
      %s417 = sphi 0, %s416
      %s431 = sphi 0, %s417
      %s435 = sphi 0, %s435
      %s437 = sphi 0, %s435
      %s438 = sphi 0, %s437
      %s452 = sphi 0, %s438
      %s456 = sphi 0, %s456
      %s458 = sphi 0, %s456
      %s459 = sphi 0, %s458
      %s473 = sphi 0, %s459
      %s477 = sphi 0, %s477
      %s479 = sphi 0, %s477
      %s480 = sphi 0, %s479
      %s494 = sphi 0, %s480
      %s498 = sphi 0, %s498
      %s500 = sphi 0, %s498
      %s501 = sphi 0, %s500
      %s515 = sphi 0, %s501
      %s521 = sphi 0, %s523
      %s524 = sphi 0, %s521
      %s525 = sphi 0, %s524
      %s541 = sphi 0, %s525
    $region4: #{transformer_decoder_block.1} parent=1 // loop_header_branch
      %42 = sbr.rel (%p40) target = $region8
    $region5: #{transformer_decoder_block.1} parent=1 // loop_body
      %s44 = ssub.s32 %s39, 1
      %s45 = ssub.s32 %s39, 2
      %s46 = sadd.s32 %s39, 1
      %s47 = ssub.s32 %s39, %s46
      %p48 = scmp.eq.s32.totalorder %s47, 0
      %s50 = sadd.s32 %s49, 1
      %s51 = scalar_select %p48, %s49, %s50
      %p54 = pneg %p48
      %p55 = scmp.eq.s32.totalorder %s39, 1
      %p56 = por %p54, %p55
      %p57 = scmp.ne.s32.totalorder %s49, %s52
      %p58 = scmp.eq.s32.totalorder %s39, 0
      %p59 = por %p57, %p58
      %p60 = scmp.ne.s32.totalorder %s49, %s52
      %p61 = scmp.eq.s32.totalorder %s44, 1
      %p62 = por %p60, %p61
      %p63 = scmp.ne.s32.totalorder %s52, %s53
      %p64 = scmp.eq.s32.totalorder %s44, 0
      %p65 = por %p63, %p64
      %p66 = scmp.ne.s32.totalorder %s52, %s53
      %p67 = scmp.eq.s32.totalorder %s45, 1
      %p68 = por %p66, %p67
      %p70 = scmp.ne.s32.totalorder %s53, %s69
      %p71 = scmp.eq.s32.totalorder %s45, 0
      %p72 = por %p70, %p71
      %s73 = ssub.s32 %s39, %s46
      %p74 = scmp.eq.s32.totalorder %s73, 0
      %s76 = sadd.s32 %s75, 1
      %s77 = scalar_select %p74, %s75, %s76
      %p80 = pneg %p74
      %p81 = scmp.eq.s32.totalorder %s39, 1
      %p82 = por %p80, %p81
      %p83 = scmp.ne.s32.totalorder %s75, %s78
      %p84 = scmp.eq.s32.totalorder %s39, 0
      %p85 = por %p83, %p84
      %p86 = scmp.ne.s32.totalorder %s75, %s78
      %p87 = scmp.eq.s32.totalorder %s44, 1
      %p88 = por %p86, %p87
      %p89 = scmp.ne.s32.totalorder %s78, %s79
      %p90 = scmp.eq.s32.totalorder %s44, 0
      %p91 = por %p89, %p90
      %p92 = scmp.ne.s32.totalorder %s78, %s79
      %p93 = scmp.eq.s32.totalorder %s45, 1
      %p94 = por %p92, %p93
      %p96 = scmp.ne.s32.totalorder %s79, %s95
      %p97 = scmp.eq.s32.totalorder %s45, 0
      %p98 = por %p96, %p97
      %s100 = sadd.s32 %s99, 1
      %p103 = scmp.eq.s32.totalorder %s39, 1
      %p104 = scmp.ne.s32.totalorder %s99, %s101
      %p105 = scmp.eq.s32.totalorder %s39, 0
      %p106 = por %p104, %p105
      %p107 = scmp.ne.s32.totalorder %s99, %s101
      %p108 = scmp.eq.s32.totalorder %s44, 1
      %p109 = por %p107, %p108
      %p110 = scmp.ne.s32.totalorder %s101, %s102
      %p111 = scmp.eq.s32.totalorder %s44, 0
      %p112 = por %p110, %p111
      %p113 = scmp.ne.s32.totalorder %s101, %s102
      %p114 = scmp.eq.s32.totalorder %s45, 1
      %p115 = por %p113, %p114
      %p117 = scmp.ne.s32.totalorder %s102, %s116
      %p118 = scmp.eq.s32.totalorder %s45, 0
      %p119 = por %p117, %p118
      %s121 = sadd.s32 %s120, 1
      %p124 = scmp.eq.s32.totalorder %s39, 1
      %p125 = scmp.ne.s32.totalorder %s120, %s122
      %p126 = scmp.eq.s32.totalorder %s39, 0
      %p127 = por %p125, %p126
      %p128 = scmp.ne.s32.totalorder %s120, %s122
      %p129 = scmp.eq.s32.totalorder %s44, 1
      %p130 = por %p128, %p129
      %p131 = scmp.ne.s32.totalorder %s122, %s123
      %p132 = scmp.eq.s32.totalorder %s44, 0
      %p133 = por %p131, %p132
      %p134 = scmp.ne.s32.totalorder %s122, %s123
      %p135 = scmp.eq.s32.totalorder %s45, 1
      %p136 = por %p134, %p135
      %p138 = scmp.ne.s32.totalorder %s123, %s137
      %p139 = scmp.eq.s32.totalorder %s45, 0
      %p140 = por %p138, %p139
      %s142 = sadd.s32 %s141, 1
      %p145 = scmp.eq.s32.totalorder %s39, 1
      %p146 = scmp.ne.s32.totalorder %s141, %s143
      %p147 = scmp.eq.s32.totalorder %s39, 0
      %p148 = por %p146, %p147
      %p149 = scmp.ne.s32.totalorder %s141, %s143
      %p150 = scmp.eq.s32.totalorder %s44, 1
      %p151 = por %p149, %p150
      %p152 = scmp.ne.s32.totalorder %s143, %s144
      %p153 = scmp.eq.s32.totalorder %s44, 0
      %p154 = por %p152, %p153
      %p155 = scmp.ne.s32.totalorder %s143, %s144
      %p156 = scmp.eq.s32.totalorder %s45, 1
      %p157 = por %p155, %p156
      %p159 = scmp.ne.s32.totalorder %s144, %s158
      %p160 = scmp.eq.s32.totalorder %s45, 0
      %p161 = por %p159, %p160
      %s163 = sadd.s32 %s162, 1
      %p166 = scmp.eq.s32.totalorder %s39, 1
      %p167 = scmp.ne.s32.totalorder %s162, %s164
      %p168 = scmp.eq.s32.totalorder %s39, 0
      %p169 = por %p167, %p168
      %p170 = scmp.ne.s32.totalorder %s162, %s164
      %p171 = scmp.eq.s32.totalorder %s44, 1
      %p172 = por %p170, %p171
      %p173 = scmp.ne.s32.totalorder %s164, %s165
      %p174 = scmp.eq.s32.totalorder %s44, 0
      %p175 = por %p173, %p174
      %p176 = scmp.ne.s32.totalorder %s164, %s165
      %p177 = scmp.eq.s32.totalorder %s45, 1
      %p178 = por %p176, %p177
      %p180 = scmp.ne.s32.totalorder %s165, %s179
      %p181 = scmp.eq.s32.totalorder %s45, 0
      %p182 = por %p180, %p181
      %s184 = sadd.s32 %s183, 1
      %p187 = scmp.eq.s32.totalorder %s39, 1
      %p188 = scmp.ne.s32.totalorder %s183, %s185
      %p189 = scmp.eq.s32.totalorder %s39, 0
      %p190 = por %p188, %p189
      %p191 = scmp.ne.s32.totalorder %s183, %s185
      %p192 = scmp.eq.s32.totalorder %s44, 1
      %p193 = por %p191, %p192
      %p194 = scmp.ne.s32.totalorder %s185, %s186
      %p195 = scmp.eq.s32.totalorder %s44, 0
      %p196 = por %p194, %p195
      %p197 = scmp.ne.s32.totalorder %s185, %s186
      %p198 = scmp.eq.s32.totalorder %s45, 1
      %p199 = por %p197, %p198
      %p201 = scmp.ne.s32.totalorder %s186, %s200
      %p202 = scmp.eq.s32.totalorder %s45, 0
      %p203 = por %p201, %p202
      %s205 = sadd.s32 %s204, 1
      %p208 = scmp.eq.s32.totalorder %s39, 1
      %p209 = scmp.ne.s32.totalorder %s204, %s206
      %p210 = scmp.eq.s32.totalorder %s39, 0
      %p211 = por %p209, %p210
      %p212 = scmp.ne.s32.totalorder %s204, %s206
      %p213 = scmp.eq.s32.totalorder %s44, 1
      %p214 = por %p212, %p213
      %p215 = scmp.ne.s32.totalorder %s206, %s207
      %p216 = scmp.eq.s32.totalorder %s44, 0
      %p217 = por %p215, %p216
      %p218 = scmp.ne.s32.totalorder %s206, %s207
      %p219 = scmp.eq.s32.totalorder %s45, 1
      %p220 = por %p218, %p219
      %p222 = scmp.ne.s32.totalorder %s207, %s221
      %p223 = scmp.eq.s32.totalorder %s45, 0
      %p224 = por %p222, %p223
      %s226 = sadd.s32 %s225, 1
      %p229 = scmp.eq.s32.totalorder %s39, 1
      %p230 = scmp.ne.s32.totalorder %s225, %s227
      %p231 = scmp.eq.s32.totalorder %s39, 0
      %p232 = por %p230, %p231
      %p233 = scmp.ne.s32.totalorder %s225, %s227
      %p234 = scmp.eq.s32.totalorder %s44, 1
      %p235 = por %p233, %p234
      %p236 = scmp.ne.s32.totalorder %s227, %s228
      %p237 = scmp.eq.s32.totalorder %s44, 0
      %p238 = por %p236, %p237
      %p239 = scmp.ne.s32.totalorder %s227, %s228
      %p240 = scmp.eq.s32.totalorder %s45, 1
      %p241 = por %p239, %p240
      %p243 = scmp.ne.s32.totalorder %s228, %s242
      %p244 = scmp.eq.s32.totalorder %s45, 0
      %p245 = por %p243, %p244
      %s247 = sadd.s32 %s246, 1
      %p250 = scmp.eq.s32.totalorder %s39, 1
      %p251 = scmp.ne.s32.totalorder %s246, %s248
      %p252 = scmp.eq.s32.totalorder %s39, 0
      %p253 = por %p251, %p252
      %p254 = scmp.ne.s32.totalorder %s246, %s248
      %p255 = scmp.eq.s32.totalorder %s44, 1
      %p256 = por %p254, %p255
      %p257 = scmp.ne.s32.totalorder %s248, %s249
      %p258 = scmp.eq.s32.totalorder %s44, 0
      %p259 = por %p257, %p258
      %p260 = scmp.ne.s32.totalorder %s248, %s249
      %p261 = scmp.eq.s32.totalorder %s45, 1
      %p262 = por %p260, %p261
      %p264 = scmp.ne.s32.totalorder %s249, %s263
      %p265 = scmp.eq.s32.totalorder %s45, 0
      %p266 = por %p264, %p265
      %s268 = sadd.s32 %s267, 1
      %p271 = scmp.eq.s32.totalorder %s39, 1
      %p272 = scmp.ne.s32.totalorder %s267, %s269
      %p273 = scmp.eq.s32.totalorder %s39, 0
      %p274 = por %p272, %p273
      %p275 = scmp.ne.s32.totalorder %s267, %s269
      %p276 = scmp.eq.s32.totalorder %s44, 1
      %p277 = por %p275, %p276
      %p278 = scmp.ne.s32.totalorder %s269, %s270
      %p279 = scmp.eq.s32.totalorder %s44, 0
      %p280 = por %p278, %p279
      %p281 = scmp.ne.s32.totalorder %s269, %s270
      %p282 = scmp.eq.s32.totalorder %s45, 1
      %p283 = por %p281, %p282
      %p285 = scmp.ne.s32.totalorder %s270, %s284
      %p286 = scmp.eq.s32.totalorder %s45, 0
      %p287 = por %p285, %p286
      %s289 = sadd.s32 %s288, 1
      %p292 = scmp.eq.s32.totalorder %s39, 1
      %p293 = scmp.ne.s32.totalorder %s288, %s290
      %p294 = scmp.eq.s32.totalorder %s39, 0
      %p295 = por %p293, %p294
      %p296 = scmp.ne.s32.totalorder %s288, %s290
      %p297 = scmp.eq.s32.totalorder %s44, 1
      %p298 = por %p296, %p297
      %p299 = scmp.ne.s32.totalorder %s290, %s291
      %p300 = scmp.eq.s32.totalorder %s44, 0
      %p301 = por %p299, %p300
      %p302 = scmp.ne.s32.totalorder %s290, %s291
      %p303 = scmp.eq.s32.totalorder %s45, 1
      %p304 = por %p302, %p303
      %p306 = scmp.ne.s32.totalorder %s291, %s305
      %p307 = scmp.eq.s32.totalorder %s45, 0
      %p308 = por %p306, %p307
      %s310 = sadd.s32 %s309, 1
      %p313 = scmp.eq.s32.totalorder %s39, 1
      %p314 = scmp.ne.s32.totalorder %s309, %s311
      %p315 = scmp.eq.s32.totalorder %s39, 0
      %p316 = por %p314, %p315
      %p317 = scmp.ne.s32.totalorder %s309, %s311
      %p318 = scmp.eq.s32.totalorder %s44, 1
      %p319 = por %p317, %p318
      %p320 = scmp.ne.s32.totalorder %s311, %s312
      %p321 = scmp.eq.s32.totalorder %s44, 0
      %p322 = por %p320, %p321
      %p323 = scmp.ne.s32.totalorder %s311, %s312
      %p324 = scmp.eq.s32.totalorder %s45, 1
      %p325 = por %p323, %p324
      %p327 = scmp.ne.s32.totalorder %s312, %s326
      %p328 = scmp.eq.s32.totalorder %s45, 0
      %p329 = por %p327, %p328
      %s331 = sadd.s32 %s330, 1
      %p334 = scmp.eq.s32.totalorder %s39, 1
      %p335 = scmp.ne.s32.totalorder %s330, %s332
      %p336 = scmp.eq.s32.totalorder %s39, 0
      %p337 = por %p335, %p336
      %p338 = scmp.ne.s32.totalorder %s330, %s332
      %p339 = scmp.eq.s32.totalorder %s44, 1
      %p340 = por %p338, %p339
      %p341 = scmp.ne.s32.totalorder %s332, %s333
      %p342 = scmp.eq.s32.totalorder %s44, 0
      %p343 = por %p341, %p342
      %p344 = scmp.ne.s32.totalorder %s332, %s333
      %p345 = scmp.eq.s32.totalorder %s45, 1
      %p346 = por %p344, %p345
      %p348 = scmp.ne.s32.totalorder %s333, %s347
      %p349 = scmp.eq.s32.totalorder %s45, 0
      %p350 = por %p348, %p349
      %s352 = sadd.s32 %s351, 1
      %p355 = scmp.eq.s32.totalorder %s39, 1
      %p356 = scmp.ne.s32.totalorder %s351, %s353
      %p357 = scmp.eq.s32.totalorder %s39, 0
      %p358 = por %p356, %p357
      %p359 = scmp.ne.s32.totalorder %s351, %s353
      %p360 = scmp.eq.s32.totalorder %s44, 1
      %p361 = por %p359, %p360
      %p362 = scmp.ne.s32.totalorder %s353, %s354
      %p363 = scmp.eq.s32.totalorder %s44, 0
      %p364 = por %p362, %p363
      %p365 = scmp.ne.s32.totalorder %s353, %s354
      %p366 = scmp.eq.s32.totalorder %s45, 1
      %p367 = por %p365, %p366
      %p369 = scmp.ne.s32.totalorder %s354, %s368
      %p370 = scmp.eq.s32.totalorder %s45, 0
      %p371 = por %p369, %p370
      %s373 = sadd.s32 %s372, 1
      %p376 = scmp.eq.s32.totalorder %s39, 1
      %p377 = scmp.ne.s32.totalorder %s372, %s374
      %p378 = scmp.eq.s32.totalorder %s39, 0
      %p379 = por %p377, %p378
      %p380 = scmp.ne.s32.totalorder %s372, %s374
      %p381 = scmp.eq.s32.totalorder %s44, 1
      %p382 = por %p380, %p381
      %p383 = scmp.ne.s32.totalorder %s374, %s375
      %p384 = scmp.eq.s32.totalorder %s44, 0
      %p385 = por %p383, %p384
      %p386 = scmp.ne.s32.totalorder %s374, %s375
      %p387 = scmp.eq.s32.totalorder %s45, 1
      %p388 = por %p386, %p387
      %p390 = scmp.ne.s32.totalorder %s375, %s389
      %p391 = scmp.eq.s32.totalorder %s45, 0
      %p392 = por %p390, %p391
      %s394 = sadd.s32 %s393, 1
      %p397 = scmp.eq.s32.totalorder %s39, 1
      %p398 = scmp.ne.s32.totalorder %s393, %s395
      %p399 = scmp.eq.s32.totalorder %s39, 0
      %p400 = por %p398, %p399
      %p401 = scmp.ne.s32.totalorder %s393, %s395
      %p402 = scmp.eq.s32.totalorder %s44, 1
      %p403 = por %p401, %p402
      %p404 = scmp.ne.s32.totalorder %s395, %s396
      %p405 = scmp.eq.s32.totalorder %s44, 0
      %p406 = por %p404, %p405
      %p407 = scmp.ne.s32.totalorder %s395, %s396
      %p408 = scmp.eq.s32.totalorder %s45, 1
      %p409 = por %p407, %p408
      %p411 = scmp.ne.s32.totalorder %s396, %s410
      %p412 = scmp.eq.s32.totalorder %s45, 0
      %p413 = por %p411, %p412
      %s415 = sadd.s32 %s414, 1
      %p418 = scmp.eq.s32.totalorder %s39, 1
      %p419 = scmp.ne.s32.totalorder %s414, %s416
      %p420 = scmp.eq.s32.totalorder %s39, 0
      %p421 = por %p419, %p420
      %p422 = scmp.ne.s32.totalorder %s414, %s416
      %p423 = scmp.eq.s32.totalorder %s44, 1
      %p424 = por %p422, %p423
      %p425 = scmp.ne.s32.totalorder %s416, %s417
      %p426 = scmp.eq.s32.totalorder %s44, 0
      %p427 = por %p425, %p426
      %p428 = scmp.ne.s32.totalorder %s416, %s417
      %p429 = scmp.eq.s32.totalorder %s45, 1
      %p430 = por %p428, %p429
      %p432 = scmp.ne.s32.totalorder %s417, %s431
      %p433 = scmp.eq.s32.totalorder %s45, 0
      %p434 = por %p432, %p433
      %s436 = sadd.s32 %s435, 1
      %p439 = scmp.eq.s32.totalorder %s39, 1
      %p440 = scmp.ne.s32.totalorder %s435, %s437
      %p441 = scmp.eq.s32.totalorder %s39, 0
      %p442 = por %p440, %p441
      %p443 = scmp.ne.s32.totalorder %s435, %s437
      %p444 = scmp.eq.s32.totalorder %s44, 1
      %p445 = por %p443, %p444
      %p446 = scmp.ne.s32.totalorder %s437, %s438
      %p447 = scmp.eq.s32.totalorder %s44, 0
      %p448 = por %p446, %p447
      %p449 = scmp.ne.s32.totalorder %s437, %s438
      %p450 = scmp.eq.s32.totalorder %s45, 1
      %p451 = por %p449, %p450
      %p453 = scmp.ne.s32.totalorder %s438, %s452
      %p454 = scmp.eq.s32.totalorder %s45, 0
      %p455 = por %p453, %p454
      %s457 = sadd.s32 %s456, 1
      %p460 = scmp.eq.s32.totalorder %s39, 1
      %p461 = scmp.ne.s32.totalorder %s456, %s458
      %p462 = scmp.eq.s32.totalorder %s39, 0
      %p463 = por %p461, %p462
      %p464 = scmp.ne.s32.totalorder %s456, %s458
      %p465 = scmp.eq.s32.totalorder %s44, 1
      %p466 = por %p464, %p465
      %p467 = scmp.ne.s32.totalorder %s458, %s459
      %p468 = scmp.eq.s32.totalorder %s44, 0
      %p469 = por %p467, %p468
      %p470 = scmp.ne.s32.totalorder %s458, %s459
      %p471 = scmp.eq.s32.totalorder %s45, 1
      %p472 = por %p470, %p471
      %p474 = scmp.ne.s32.totalorder %s459, %s473
      %p475 = scmp.eq.s32.totalorder %s45, 0
      %p476 = por %p474, %p475
      %s478 = sadd.s32 %s477, 1
      %p481 = scmp.eq.s32.totalorder %s39, 1
      %p482 = scmp.ne.s32.totalorder %s477, %s479
      %p483 = scmp.eq.s32.totalorder %s39, 0
      %p484 = por %p482, %p483
      %p485 = scmp.ne.s32.totalorder %s477, %s479
      %p486 = scmp.eq.s32.totalorder %s44, 1
      %p487 = por %p485, %p486
      %p488 = scmp.ne.s32.totalorder %s479, %s480
      %p489 = scmp.eq.s32.totalorder %s44, 0
      %p490 = por %p488, %p489
      %p491 = scmp.ne.s32.totalorder %s479, %s480
      %p492 = scmp.eq.s32.totalorder %s45, 1
      %p493 = por %p491, %p492
      %p495 = scmp.ne.s32.totalorder %s480, %s494
      %p496 = scmp.eq.s32.totalorder %s45, 0
      %p497 = por %p495, %p496
      %s499 = sadd.s32 %s498, 1
      %p502 = scmp.eq.s32.totalorder %s39, 1
      %p503 = scmp.ne.s32.totalorder %s498, %s500
      %p504 = scmp.eq.s32.totalorder %s39, 0
      %p505 = por %p503, %p504
      %p506 = scmp.ne.s32.totalorder %s498, %s500
      %p507 = scmp.eq.s32.totalorder %s44, 1
      %p508 = por %p506, %p507
      %p509 = scmp.ne.s32.totalorder %s500, %s501
      %p510 = scmp.eq.s32.totalorder %s44, 0
      %p511 = por %p509, %p510
      %p512 = scmp.ne.s32.totalorder %s500, %s501
      %p513 = scmp.eq.s32.totalorder %s45, 1
      %p514 = por %p512, %p513
      %p516 = scmp.ne.s32.totalorder %s501, %s515
      %p517 = scmp.eq.s32.totalorder %s45, 0
      %p518 = por %p516, %p517
      %s519 = ssub.s32 %s39, %s46
      %p520 = scmp.eq.s32.totalorder %s519, 0
      %s522 = sadd.s32 %s521, 1
      %s523 = scalar_select %p520, %s521, %s522
      %p526 = pneg %p520
      %p527 = scmp.eq.s32.totalorder %s39, 1
      %p528 = por %p526, %p527
      %p529 = scmp.ne.s32.totalorder %s521, %s524
      %p530 = scmp.eq.s32.totalorder %s39, 0
      %p531 = por %p529, %p530
      %p532 = scmp.ne.s32.totalorder %s521, %s524
      %p533 = scmp.eq.s32.totalorder %s44, 1
      %p534 = por %p532, %p533
      %p535 = scmp.ne.s32.totalorder %s524, %s525
      %p536 = scmp.eq.s32.totalorder %s44, 0
      %p537 = por %p535, %p536
      %p538 = scmp.ne.s32.totalorder %s524, %s525
      %p539 = scmp.eq.s32.totalorder %s45, 1
      %p540 = por %p538, %p539
      %p542 = scmp.ne.s32.totalorder %s525, %s541
      %p543 = scmp.eq.s32.totalorder %s45, 0
      %p544 = por %p542, %p543
      %p545 = scmp.le.s32.totalorder 1, %s39
      %p546 = scmp.lt.s32.totalorder %s39, 3
      %p547 = pnand %p545, %p546
      %p548 = pneg %p547
      // Predicated region
      $region9: #{transformer_decoder_block.1} parent=5 // pred_check
        _
      $region10: #{transformer_decoder_block.1} parent=5 // pred_check_branch
        %550 = sbr.rel (%p547) target = $region12
      $region11: #{transformer_decoder_block.1} parent=5 // pred_region
        %s551 = ssub.s32 %s39, 1
        // Predicated region
        $region13: #{transformer_decoder_block.1} parent=11 // pred_check
          %p552 = pneg %p112
        $region14: #{transformer_decoder_block.1} parent=11 // pred_check_branch
          %554 = sbr.rel (%p552) target = $region16
        $region15: #{transformer_decoder_block.1} parent=11 // pred_region
          _
        $region16: #{transformer_decoder_block.1} parent=11 // pred_fallthru
          _
        // Predicated region
        $region17: #{transformer_decoder_block.1} parent=11 // pred_check
          %p555 = pneg %p133
        $region18: #{transformer_decoder_block.1} parent=11 // pred_check_branch
          %557 = sbr.rel (%p555) target = $region20
        $region19: #{transformer_decoder_block.1} parent=11 // pred_region
          _
        $region20: #{transformer_decoder_block.1} parent=11 // pred_fallthru
          _
        // Predicated region
        $region21: #{transformer_decoder_block.1} parent=11 // pred_check
          %p558 = pneg %p154
        $region22: #{transformer_decoder_block.1} parent=11 // pred_check_branch
          %560 = sbr.rel (%p558) target = $region24
        $region23: #{transformer_decoder_block.1} parent=11 // pred_region
          _
        $region24: #{transformer_decoder_block.1} parent=11 // pred_fallthru
          _
        // Predicated region
        $region25: #{transformer_decoder_block.1} parent=11 // pred_check
          %p561 = pneg %p175
        $region26: #{transformer_decoder_block.1} parent=11 // pred_check_branch
          %563 = sbr.rel (%p561) target = $region28
        $region27: #{transformer_decoder_block.1} parent=11 // pred_region
          %565 = vsyncadd [#allocation3], 0
          %s567 = sshll.u32 %s5, 4
          %s568 = int_to_ptr.hbm [resolvable:$true] %s567
          %s569 = sshll.u32 [#allocation2], 4
          %s570 = int_to_ptr.vmem [resolvable:$true] %s569
          %572 = dma.hbm_to_vmem [thread:$0]  %s568, 16, %s570, [#allocation3]
        $region28: #{transformer_decoder_block.1} parent=11 // pred_fallthru
          _
        // Predicated region
        $region29: #{transformer_decoder_block.1} parent=11 // pred_check
          %p573 = pneg %p196
        $region30: #{transformer_decoder_block.1} parent=11 // pred_check_branch
          %575 = sbr.rel (%p573) target = $region32
        $region31: #{transformer_decoder_block.1} parent=11 // pred_region
          _
        $region32: #{transformer_decoder_block.1} parent=11 // pred_fallthru
          _
        // Predicated region
        $region33: #{transformer_decoder_block.1} parent=11 // pred_check
          %p576 = pneg %p217
        $region34: #{transformer_decoder_block.1} parent=11 // pred_check_branch
          %578 = sbr.rel (%p576) target = $region36
        $region35: #{transformer_decoder_block.1} parent=11 // pred_region
          %580 = vsyncadd [#allocation6], 0
          %s582 = sshll.u32 %s7, 4
          %s583 = int_to_ptr.hbm [resolvable:$true] %s582
          %s584 = sshll.u32 [#allocation5], 4
          %s585 = int_to_ptr.vmem [resolvable:$true] %s584
          %587 = dma.hbm_to_vmem [thread:$0]  %s583, 16, %s585, [#allocation6]
        $region36: #{transformer_decoder_block.1} parent=11 // pred_fallthru
          _
        // Predicated region
        $region37: #{transformer_decoder_block.1} parent=11 // pred_check
          %p588 = pneg %p238
        $region38: #{transformer_decoder_block.1} parent=11 // pred_check_branch
          %590 = sbr.rel (%p588) target = $region40
        $region39: #{transformer_decoder_block.1} parent=11 // pred_region
          %592 = vsyncadd [#allocation6], 0
          %s593 = sshll.u32 %s8, 4
          %s594 = int_to_ptr.hbm [resolvable:$true] %s593
          %s595 = sshll.u32 [#allocation7], 4
          %s596 = int_to_ptr.vmem [resolvable:$true] %s595
          %601 = dma.hbm_to_vmem [thread:$0]  %s594, 256, %s596, [#allocation6], 64, 64, 4
        $region40: #{transformer_decoder_block.1} parent=11 // pred_fallthru
          _
        // Predicated region
        $region41: #{transformer_decoder_block.1} parent=11 // pred_check
          %p602 = pneg %p259
        $region42: #{transformer_decoder_block.1} parent=11 // pred_check_branch
          %604 = sbr.rel (%p602) target = $region44
        $region43: #{transformer_decoder_block.1} parent=11 // pred_region
          %606 = vsyncadd [#allocation9], 0
          %s608 = sshll.u32 %s9, 4
          %s609 = int_to_ptr.hbm [resolvable:$true] %s608
          %s610 = sshll.u32 [#allocation8], 4
          %s611 = int_to_ptr.vmem [resolvable:$true] %s610
          %613 = dma.hbm_to_vmem [thread:$0]  %s609, 16, %s611, [#allocation9]
        $region44: #{transformer_decoder_block.1} parent=11 // pred_fallthru
          _
        // Predicated region
        $region45: #{transformer_decoder_block.1} parent=11 // pred_check
          %p614 = pneg %p280
        $region46: #{transformer_decoder_block.1} parent=11 // pred_check_branch
          %616 = sbr.rel (%p614) target = $region48
        $region47: #{transformer_decoder_block.1} parent=11 // pred_region
          %618 = vsyncadd [#allocation9], 0
          %s619 = sshll.u32 %s10, 4
          %s620 = int_to_ptr.hbm [resolvable:$true] %s619
          %s621 = sshll.u32 [#allocation10], 4
          %s622 = int_to_ptr.vmem [resolvable:$true] %s621
          %627 = dma.hbm_to_vmem [thread:$0]  %s620, 256, %s622, [#allocation9], 64, 64, 4
        $region48: #{transformer_decoder_block.1} parent=11 // pred_fallthru
          _
        // Predicated region
        $region49: #{transformer_decoder_block.1} parent=11 // pred_check
          %p628 = pneg %p301
        $region50: #{transformer_decoder_block.1} parent=11 // pred_check_branch
          %630 = sbr.rel (%p628) target = $region52
        $region51: #{transformer_decoder_block.1} parent=11 // pred_region
          %632 = vsyncadd [#allocation12], 0
          %s634 = sshll.u32 %s11, 4
          %s635 = int_to_ptr.hbm [resolvable:$true] %s634
          %s636 = sshll.u32 [#allocation11], 4
          %s637 = int_to_ptr.vmem [resolvable:$true] %s636
          %639 = dma.hbm_to_vmem [thread:$0]  %s635, 16, %s637, [#allocation12]
        $region52: #{transformer_decoder_block.1} parent=11 // pred_fallthru
          _
        // Predicated region
        $region53: #{transformer_decoder_block.1} parent=11 // pred_check
          %p640 = pneg %p322
        $region54: #{transformer_decoder_block.1} parent=11 // pred_check_branch
          %642 = sbr.rel (%p640) target = $region56
        $region55: #{transformer_decoder_block.1} parent=11 // pred_region
          %644 = vsyncadd [#allocation12], 0
          %s645 = sshll.u32 %s12, 4
          %s646 = int_to_ptr.hbm [resolvable:$true] %s645
          %s647 = sshll.u32 [#allocation13], 4
          %s648 = int_to_ptr.vmem [resolvable:$true] %s647
          %653 = dma.hbm_to_vmem [thread:$0]  %s646, 256, %s648, [#allocation12], 64, 64, 4
        $region56: #{transformer_decoder_block.1} parent=11 // pred_fallthru
          _
        // Predicated region
        $region57: #{transformer_decoder_block.1} parent=11 // pred_check
          %p654 = pneg %p343
        $region58: #{transformer_decoder_block.1} parent=11 // pred_check_branch
          %656 = sbr.rel (%p654) target = $region60
        $region59: #{transformer_decoder_block.1} parent=11 // pred_region
          %658 = vsyncadd [#allocation15], 0
          %s660 = sshll.u32 %s13, 4
          %s661 = int_to_ptr.hbm [resolvable:$true] %s660
          %s662 = sshll.u32 [#allocation14], 4
          %s663 = int_to_ptr.vmem [resolvable:$true] %s662
          %665 = dma.hbm_to_vmem [thread:$0]  %s661, 16, %s663, [#allocation15]
        $region60: #{transformer_decoder_block.1} parent=11 // pred_fallthru
          _
        // Predicated region
        $region61: #{transformer_decoder_block.1} parent=11 // pred_check
          %p666 = pneg %p364
        $region62: #{transformer_decoder_block.1} parent=11 // pred_check_branch
          %668 = sbr.rel (%p666) target = $region64
        $region63: #{transformer_decoder_block.1} parent=11 // pred_region
          %670 = vsyncadd [#allocation15], 0
          %s672 = sshll.u32 %s14, 4
          %s673 = int_to_ptr.hbm [resolvable:$true] %s672
          %s674 = sshll.u32 [#allocation16], 4
          %s675 = int_to_ptr.vmem [resolvable:$true] %s674
          %677 = dma.hbm_to_vmem [thread:$0]  %s673, 16, %s675, [#allocation15]
        $region64: #{transformer_decoder_block.1} parent=11 // pred_fallthru
          _
        // Predicated region
        $region65: #{transformer_decoder_block.1} parent=11 // pred_check
          %p678 = pneg %p385
        $region66: #{transformer_decoder_block.1} parent=11 // pred_check_branch
          %680 = sbr.rel (%p678) target = $region68
        $region67: #{transformer_decoder_block.1} parent=11 // pred_region
          %682 = vsyncadd [#allocation18], 0
          %s684 = sshll.u32 %s15, 4
          %s685 = int_to_ptr.hbm [resolvable:$true] %s684
          %s686 = sshll.u32 [#allocation17], 4
          %s687 = int_to_ptr.vmem [resolvable:$true] %s686
          %689 = dma.hbm_to_vmem [thread:$0]  %s685, 16, %s687, [#allocation18]
        $region68: #{transformer_decoder_block.1} parent=11 // pred_fallthru
          _
        // Predicated region
        $region69: #{transformer_decoder_block.1} parent=11 // pred_check
          %p690 = pneg %p406
        $region70: #{transformer_decoder_block.1} parent=11 // pred_check_branch
          %692 = sbr.rel (%p690) target = $region72
        $region71: #{transformer_decoder_block.1} parent=11 // pred_region
          %694 = vsyncadd [#allocation18], 0
          %s695 = sshll.u32 %s16, 4
          %s696 = int_to_ptr.hbm [resolvable:$true] %s695
          %s697 = sshll.u32 [#allocation19], 4
          %s698 = int_to_ptr.vmem [resolvable:$true] %s697
          %703 = dma.hbm_to_vmem [thread:$0]  %s696, 256, %s698, [#allocation18], 64, 64, 4
        $region72: #{transformer_decoder_block.1} parent=11 // pred_fallthru
          _
        // Predicated region
        $region73: #{transformer_decoder_block.1} parent=11 // pred_check
          %p704 = pneg %p427
        $region74: #{transformer_decoder_block.1} parent=11 // pred_check_branch
          %706 = sbr.rel (%p704) target = $region76
        $region75: #{transformer_decoder_block.1} parent=11 // pred_region
          %708 = vsyncadd [#allocation21], 0
          %s710 = sshll.u32 %s17, 4
          %s711 = int_to_ptr.hbm [resolvable:$true] %s710
          %s712 = sshll.u32 [#allocation20], 4
          %s713 = int_to_ptr.vmem [resolvable:$true] %s712
          %715 = dma.hbm_to_vmem [thread:$0]  %s711, 16, %s713, [#allocation21]
        $region76: #{transformer_decoder_block.1} parent=11 // pred_fallthru
          _
        // Predicated region
        $region77: #{transformer_decoder_block.1} parent=11 // pred_check
          %p716 = pneg %p448
        $region78: #{transformer_decoder_block.1} parent=11 // pred_check_branch
          %718 = sbr.rel (%p716) target = $region80
        $region79: #{transformer_decoder_block.1} parent=11 // pred_region
          _
        $region80: #{transformer_decoder_block.1} parent=11 // pred_fallthru
          _
        // Predicated region
        $region81: #{transformer_decoder_block.1} parent=11 // pred_check
          %p719 = pneg %p469
        $region82: #{transformer_decoder_block.1} parent=11 // pred_check_branch
          %721 = sbr.rel (%p719) target = $region84
        $region83: #{transformer_decoder_block.1} parent=11 // pred_region
          %723 = vsyncadd [#allocation21], 0
          %s725 = sshll.u32 %s19, 4
          %s726 = int_to_ptr.hbm [resolvable:$true] %s725
          %s727 = sshll.u32 [#allocation22], 4
          %s728 = int_to_ptr.vmem [resolvable:$true] %s727
          %730 = dma.hbm_to_vmem [thread:$0]  %s726, 16, %s728, [#allocation21]
        $region84: #{transformer_decoder_block.1} parent=11 // pred_fallthru
          _
        // Predicated region
        $region85: #{transformer_decoder_block.1} parent=11 // pred_check
          %p731 = pneg %p490
        $region86: #{transformer_decoder_block.1} parent=11 // pred_check_branch
          %733 = sbr.rel (%p731) target = $region88
        $region87: #{transformer_decoder_block.1} parent=11 // pred_region
          %735 = vsyncadd [#allocation24], 0
          %s737 = sshll.u32 %s20, 4
          %s738 = int_to_ptr.hbm [resolvable:$true] %s737
          %s739 = sshll.u32 [#allocation23], 4
          %s740 = int_to_ptr.vmem [resolvable:$true] %s739
          %742 = dma.hbm_to_vmem [thread:$0]  %s738, 16, %s740, [#allocation24]
        $region88: #{transformer_decoder_block.1} parent=11 // pred_fallthru
          _
        // Predicated region
        $region89: #{transformer_decoder_block.1} parent=11 // pred_check
          %p743 = pneg %p511
        $region90: #{transformer_decoder_block.1} parent=11 // pred_check_branch
          %745 = sbr.rel (%p743) target = $region92
        $region91: #{transformer_decoder_block.1} parent=11 // pred_region
          %747 = vsyncadd [#allocation24], 0
          %s749 = sshll.u32 %s21, 4
          %s750 = int_to_ptr.hbm [resolvable:$true] %s749
          %s751 = sshll.u32 [#allocation25], 4
          %s752 = int_to_ptr.vmem [resolvable:$true] %s751
          %754 = dma.hbm_to_vmem [thread:$0]  %s750, 16, %s752, [#allocation24]
        $region92: #{transformer_decoder_block.1} parent=11 // pred_fallthru
          _
      $region12: #{transformer_decoder_block.1} parent=5 // pred_fallthru
        _
      %p755 = scmp.lt.s32.totalorder %s39, 2
      // Predicated region
      $region93: #{transformer_decoder_block.1} parent=5 // pred_check
        %p756 = pneg %p755
      $region94: #{transformer_decoder_block.1} parent=5 // pred_check_branch
        %758 = sbr.rel (%p756) target = $region96
      $region95: #{transformer_decoder_block.1} parent=5 // pred_region
        // Predicated region
        $region97: #{transformer_decoder_block.1} parent=95 // pred_check
          %p759 = pneg %p59
        $region98: #{transformer_decoder_block.1} parent=95 // pred_check_branch
          %761 = sbr.rel (%p759) target = $region100
        $region99: #{transformer_decoder_block.1} parent=95 // pred_region
          %p762 = scmp.lt.s32.totalorder %s39, 1
          %s763 = scalar_select %p762, %s39, 1
          %s764 = smul.addr %s763, 8
          %s765 = scalar_lea.vmem %s0, %s764
        $region100: #{transformer_decoder_block.1} parent=95 // pred_fallthru
          _
        // Predicated region
        $region101: #{transformer_decoder_block.1} parent=95 // pred_check
          %p766 = pneg %p85
        $region102: #{transformer_decoder_block.1} parent=95 // pred_check_branch
          %768 = sbr.rel (%p766) target = $region104
        $region103: #{transformer_decoder_block.1} parent=95 // pred_region
          %p769 = scmp.lt.s32.totalorder %s39, 1
          %s770 = scalar_select %p769, %s39, 1
          %s771 = smul.addr %s770, 8
          %s772 = scalar_lea.vmem %s1, %s771
        $region104: #{transformer_decoder_block.1} parent=95 // pred_fallthru
          _
      $region96: #{transformer_decoder_block.1} parent=5 // pred_fallthru
        _
      %p773 = scmp.le.s32.totalorder 1, %s39
      %p774 = scmp.lt.s32.totalorder %s39, 3
      %p775 = pnand %p773, %p774
      %p776 = pneg %p775
      // Predicated region
      $region105: #{transformer_decoder_block.1} parent=5 // pred_check
        _
      $region106: #{transformer_decoder_block.1} parent=5 // pred_check_branch
        %778 = sbr.rel (%p775) target = $region108
      $region107: #{transformer_decoder_block.1} parent=5 // pred_region
        %s779 = ssub.s32 %s39, 1
        // Predicated region
        $region109: #{transformer_decoder_block.1} parent=107 // pred_check
          %p780 = pneg %p175
        $region110: #{transformer_decoder_block.1} parent=107 // pred_check_branch
          %782 = sbr.rel (%p780) target = $region112
        $region111: #{transformer_decoder_block.1} parent=107 // pred_region
          %784 = dma.done [#allocation3], 16
        $region112: #{transformer_decoder_block.1} parent=107 // pred_fallthru
          _
        // Predicated region
        $region113: #{transformer_decoder_block.1} parent=107 // pred_check
          %p785 = pneg %p217
        $region114: #{transformer_decoder_block.1} parent=107 // pred_check_branch
          %787 = sbr.rel (%p785) target = $region116
        $region115: #{transformer_decoder_block.1} parent=107 // pred_region
          %789 = dma.done [#allocation6], 16
        $region116: #{transformer_decoder_block.1} parent=107 // pred_fallthru
          _
        // Predicated region
        $region117: #{transformer_decoder_block.1} parent=107 // pred_check
          %p790 = pneg %p238
        $region118: #{transformer_decoder_block.1} parent=107 // pred_check_branch
          %792 = sbr.rel (%p790) target = $region120
        $region119: #{transformer_decoder_block.1} parent=107 // pred_region
          %794 = dma.done [#allocation6], 256
        $region120: #{transformer_decoder_block.1} parent=107 // pred_fallthru
          _
        // Predicated region
        $region121: #{transformer_decoder_block.1} parent=107 // pred_check
          %p795 = pneg %p259
        $region122: #{transformer_decoder_block.1} parent=107 // pred_check_branch
          %797 = sbr.rel (%p795) target = $region124
        $region123: #{transformer_decoder_block.1} parent=107 // pred_region
          %799 = dma.done [#allocation9], 16
        $region124: #{transformer_decoder_block.1} parent=107 // pred_fallthru
          _
        // Predicated region
        $region125: #{transformer_decoder_block.1} parent=107 // pred_check
          %p800 = pneg %p280
        $region126: #{transformer_decoder_block.1} parent=107 // pred_check_branch
          %802 = sbr.rel (%p800) target = $region128
        $region127: #{transformer_decoder_block.1} parent=107 // pred_region
          %804 = dma.done [#allocation9], 256
        $region128: #{transformer_decoder_block.1} parent=107 // pred_fallthru
          _
        // Predicated region
        $region129: #{transformer_decoder_block.1} parent=107 // pred_check
          %p805 = pneg %p301
        $region130: #{transformer_decoder_block.1} parent=107 // pred_check_branch
          %807 = sbr.rel (%p805) target = $region132
        $region131: #{transformer_decoder_block.1} parent=107 // pred_region
          %809 = dma.done [#allocation12], 16
        $region132: #{transformer_decoder_block.1} parent=107 // pred_fallthru
          _
        // Predicated region
        $region133: #{transformer_decoder_block.1} parent=107 // pred_check
          %p810 = pneg %p322
        $region134: #{transformer_decoder_block.1} parent=107 // pred_check_branch
          %812 = sbr.rel (%p810) target = $region136
        $region135: #{transformer_decoder_block.1} parent=107 // pred_region
          %814 = dma.done [#allocation12], 256
        $region136: #{transformer_decoder_block.1} parent=107 // pred_fallthru
          _
        // Predicated region
        $region137: #{transformer_decoder_block.1} parent=107 // pred_check
          %p815 = pneg %p343
        $region138: #{transformer_decoder_block.1} parent=107 // pred_check_branch
          %817 = sbr.rel (%p815) target = $region140
        $region139: #{transformer_decoder_block.1} parent=107 // pred_region
          %819 = dma.done [#allocation15], 16
        $region140: #{transformer_decoder_block.1} parent=107 // pred_fallthru
          _
        // Predicated region
        $region141: #{transformer_decoder_block.1} parent=107 // pred_check
          %p820 = pneg %p364
        $region142: #{transformer_decoder_block.1} parent=107 // pred_check_branch
          %822 = sbr.rel (%p820) target = $region144
        $region143: #{transformer_decoder_block.1} parent=107 // pred_region
          %824 = dma.done [#allocation15], 16
        $region144: #{transformer_decoder_block.1} parent=107 // pred_fallthru
          _
        // Predicated region
        $region145: #{transformer_decoder_block.1} parent=107 // pred_check
          %p825 = pneg %p385
        $region146: #{transformer_decoder_block.1} parent=107 // pred_check_branch
          %827 = sbr.rel (%p825) target = $region148
        $region147: #{transformer_decoder_block.1} parent=107 // pred_region
          %829 = dma.done [#allocation18], 16
        $region148: #{transformer_decoder_block.1} parent=107 // pred_fallthru
          _
        // Predicated region
        $region149: #{transformer_decoder_block.1} parent=107 // pred_check
          %p830 = pneg %p406
        $region150: #{transformer_decoder_block.1} parent=107 // pred_check_branch
          %832 = sbr.rel (%p830) target = $region152
        $region151: #{transformer_decoder_block.1} parent=107 // pred_region
          %834 = dma.done [#allocation18], 256
        $region152: #{transformer_decoder_block.1} parent=107 // pred_fallthru
          _
        // Predicated region
        $region153: #{transformer_decoder_block.1} parent=107 // pred_check
          %p835 = pneg %p427
        $region154: #{transformer_decoder_block.1} parent=107 // pred_check_branch
          %837 = sbr.rel (%p835) target = $region156
        $region155: #{transformer_decoder_block.1} parent=107 // pred_region
          %839 = dma.done [#allocation21], 16
        $region156: #{transformer_decoder_block.1} parent=107 // pred_fallthru
          _
        // Predicated region
        $region157: #{transformer_decoder_block.1} parent=107 // pred_check
          %p840 = pneg %p469
        $region158: #{transformer_decoder_block.1} parent=107 // pred_check_branch
          %842 = sbr.rel (%p840) target = $region160
        $region159: #{transformer_decoder_block.1} parent=107 // pred_region
          %844 = dma.done [#allocation21], 16
        $region160: #{transformer_decoder_block.1} parent=107 // pred_fallthru
          _
        // Predicated region
        $region161: #{transformer_decoder_block.1} parent=107 // pred_check
          %p845 = pneg %p490
        $region162: #{transformer_decoder_block.1} parent=107 // pred_check_branch
          %847 = sbr.rel (%p845) target = $region164
        $region163: #{transformer_decoder_block.1} parent=107 // pred_region
          %849 = dma.done [#allocation24], 16
        $region164: #{transformer_decoder_block.1} parent=107 // pred_fallthru
          _
        // Predicated region
        $region165: #{transformer_decoder_block.1} parent=107 // pred_check
          %p850 = pneg %p511
        $region166: #{transformer_decoder_block.1} parent=107 // pred_check_branch
          %852 = sbr.rel (%p850) target = $region168
        $region167: #{transformer_decoder_block.1} parent=107 // pred_region
          %854 = dma.done [#allocation24], 16
        $region168: #{transformer_decoder_block.1} parent=107 // pred_fallthru
          _
        %p855 = scmp.lt.s32.totalorder %s44, 1
        %s856 = scalar_select %p855, %s44, 1
        %s857 = smul.addr %s856, 8
        %s858 = scalar_lea.vmem %s0, %s857
        %p859 = pneg %p65
        %p860 = pneg %p62
        %p861 = scmp.lt.s32.totalorder %s44, 1
        %s862 = scalar_select %p861, %s44, 1
        %s863 = smul.addr %s862, 8
        %s864 = scalar_lea.vmem %s1, %s863
        %p865 = pneg %p91
        %p866 = pneg %p88
        %p867 = pneg %p112
        %p868 = pneg %p109
        %p869 = pneg %p133
        %p870 = pneg %p130
        %p871 = pneg %p154
        %p872 = pneg %p151
        %p873 = pneg %p175
        %p874 = pneg %p172
        %p875 = pneg %p196
        %p876 = pneg %p193
        %p877 = pneg %p217
        %p878 = pneg %p214
        %p879 = pneg %p238
        %p880 = pneg %p235
        %p881 = pneg %p259
        %p882 = pneg %p256
        %p883 = pneg %p280
        %p884 = pneg %p277
        %p885 = pneg %p301
        %p886 = pneg %p298
        %p887 = pneg %p322
        %p888 = pneg %p319
        %p889 = pneg %p343
        %p890 = pneg %p340
        %p891 = pneg %p364
        %p892 = pneg %p361
        %p893 = pneg %p385
        %p894 = pneg %p382
        %p895 = pneg %p406
        %p896 = pneg %p403
        %p897 = pneg %p427
        %p898 = pneg %p424
        %p899 = pneg %p448
        %p900 = pneg %p445
        %p901 = pneg %p469
        %p902 = pneg %p466
        %p903 = pneg %p490
        %p904 = pneg %p487
        %p905 = pneg %p511
        %p906 = pneg %p508
        %p907 = pneg %p537
        %p908 = pneg %p534
        %s909 = sand.u32 %s524, 1
        %s910 = scalar_lea.sflag [#allocation4], %s909
        %s911 = sand.u32 %s524, 1
        %s912 = smul.addr %s911, 8
        %s913 = scalar_lea.vmem [#allocation26], %s912
        %p914 = scmp.lt.s32.totalorder %s44, 1
        %s915 = scalar_select %p914, %s44, 1
        %s916 = smul.addr %s915, 8
        %s917 = scalar_lea.vmem %s0, %s916
        %p918 = scmp.lt.s32.totalorder %s44, 1
        %s919 = scalar_select %p918, %s44, 1
        %s920 = smul.addr %s919, 8
        %s921 = scalar_lea.vmem %s1, %s920
        %v923 = vld [vmem:[%s917] sm:$0xff]
        %v924 = vld [vmem:[%s921] sm:$0xff]
        %v925 = vld [vmem:[%s2] sm:$0xf]
        %v926 = vld [vmem:[%s2 + $0x4] sm:$0xf]
        %v927 = vld [vmem:[%s2 + $0x8] sm:$0xf]
        %v928 = vld [vmem:[%s2 + $0xc] sm:$0xf]
        %v929 = vpack.c.bf16 %v923, %v923
        %v930 = vld [vmem:[%s3] sm:$0x1]
        %v932 = vperm.slane %v930, 0
        %v938 = vunpack.c.l.b16 %v925
        %v939 = vunpack.c.l.b16 %v926
        %v940 = vunpack.c.l.b16 %v927
        %v941 = vunpack.c.l.b16 %v928
        %v942 = vpack.c.b16 %v939, %v938
        %v943 = vpack.c.b16 %v941, %v940
        %vm946 = vcmask 261120
        %v948 = vsel %vm946, %v929, 0
        %950 = vmatpush.bf16.msra.mxu0 0
        %951 = vmatpush.bf16.msra.mxu0 0
        %952 = vmatpush.bf16.msra.mxu0 0
        %953 = vmatpush.bf16.msra.mxu0 0
        %954 = vmatpush.bf16.msra.mxu0 0
        %955 = vmatpush.bf16.msra.mxu0 0
        %956 = vmatpush.bf16.msra.mxu0 %v943
        %957 = vmatpush.bf16.msra.mxu0 %v942
        %958 = vmatmul.bf16.gmra.mxu0 %v948
        %v959 = vpop.f32.mrf.mxu0
        %v960 = vadd.f32 %v932, %v959
        %v961 = vpop.f32.mrf.mxu0
        %962 = vdwg.mxu0
        %v963 = vld [vmem:[%s4] sm:$0xf]
        %v964 = vld [vmem:[%s4 + $0x4] sm:$0xf]
        %v965 = vld [vmem:[%s4 + $0x8] sm:$0xf]
        %v966 = vld [vmem:[%s4 + $0xc] sm:$0xf]
        %v967 = vld [vmem:[#allocation2] sm:$0x1]
        %v968 = vld [vmem:[%s6] sm:$0x1]
        %v969 = vld [vmem:[#allocation5] sm:$0x1]
        %v970 = vmul.f32 %v960, 0.35355338
        %972 = vrot.lane.b32.xlu0 %v970, 120
        %v973 = vpop.permute.xlu0 %972
        %975 = vrot.lane.b32.xlu0 %v970, 112
        %v976 = vpop.permute.xlu0 %975
        %978 = vrot.lane.b32.xlu0 %v970, 104
        %v979 = vpop.permute.xlu0 %978
        %v981 = vrot.slane %v976, 4
        %vm982 = vcmask 1047556
        %v983 = vsel %vm982, %v981, %v970
        %v984 = vrot.slane %v970, 4
        %v985 = vsel %vm982, %v976, %v984
        %v987 = vunpack.c.l.s4 1983009808
        %v988 = vunpack.c.0.s8 %v987
        %v989 = vperm.slane %v983, %v988
        %v991 = vunpack.c.l.s4 1983009808
        %v992 = vunpack.c.0.s8 %v991
        %v993 = vperm.slane %v985, %v992
        %v994 = vrot.slane %v979, 4
        %v995 = vsel %vm982, %v994, %v973
        %v996 = vrot.slane %v973, 4
        %v997 = vsel %vm982, %v979, %v996
        %v999 = vunpack.c.l.s4 1983009808
        %v1000 = vunpack.c.0.s8 %v999
        %v1001 = vperm.slane %v995, %v1000
        %v1003 = vunpack.c.l.s4 1983009808
        %v1004 = vunpack.c.0.s8 %v1003
        %v1005 = vperm.slane %v997, %v1004
        %v1006 = vrot.slane %v1001, 4
        %v1007 = vsel %vm982, %v1006, %v989
        %v1008 = vrot.slane %v989, 4
        %v1009 = vsel %vm982, %v1001, %v1008
        %v1011 = vunpack.c.l.s4 1934713408
        %v1012 = vunpack.c.0.s8 %v1011
        %v1013 = vperm.slane %v1007, %v1012
        %v1015 = vunpack.c.l.s4 1934713408
        %v1016 = vunpack.c.0.s8 %v1015
        %v1017 = vperm.slane %v1009, %v1016
        %v1018 = vrot.slane %v1005, 4
        %v1019 = vsel %vm982, %v1018, %v993
        %v1020 = vrot.slane %v993, 4
        %v1021 = vsel %vm982, %v1005, %v1020
        %v1023 = vunpack.c.l.s4 1934713408
        %v1024 = vunpack.c.0.s8 %v1023
        %v1025 = vperm.slane %v1019, %v1024
        %v1027 = vunpack.c.l.s4 1934713408
        %v1028 = vunpack.c.0.s8 %v1027
        %v1029 = vperm.slane %v1021, %v1028
        %v1030 = vrot.slane %v1013, 4
        %v1031 = vsel %vm982, 0.0, %v1030
        %v1032 = vrot.slane %v1017, 4
        %v1033 = vsel %vm982, 0.0, %v1032
        %v1034 = vrot.slane %v1025, 4
        %v1035 = vsel %vm982, 0.0, %v1034
        %v1036 = vrot.slane %v1029, 4
        %v1037 = vsel %vm982, 0.0, %v1036
        %v1038 = vsel %vm982, %v1032, %v1013
        %v1040 = vunpack.c.l.s4 1983009808
        %v1041 = vunpack.c.0.s8 %v1040
        %v1042 = vperm.slane %v1038, %v1041
        %v1043 = vrot.slane %v1033, 4
        %v1044 = vsel %vm982, %v1043, %v1031
        %v1046 = vunpack.c.l.s4 1983009808
        %v1047 = vunpack.c.0.s8 %v1046
        %v1048 = vperm.slane %v1044, %v1047
        %v1049 = vsel %vm982, %v1036, %v1025
        %v1051 = vunpack.c.l.s4 1983009808
        %v1052 = vunpack.c.0.s8 %v1051
        %v1053 = vperm.slane %v1049, %v1052
        %v1054 = vrot.slane %v1037, 4
        %v1055 = vsel %vm982, %v1054, %v1035
        %v1057 = vunpack.c.l.s4 1983009808
        %v1058 = vunpack.c.0.s8 %v1057
        %v1059 = vperm.slane %v1055, %v1058
        %v1060 = vrot.slane %v1048, 4
        %v1061 = vsel %vm982, %v1060, %v1042
        %v1062 = vrot.slane %v1042, 4
        %v1063 = vsel %vm982, %v1048, %v1062
        %v1065 = vunpack.c.l.s4 1934713408
        %v1066 = vunpack.c.0.s8 %v1065
        %v1067 = vperm.slane %v1061, %v1066
        %v1069 = vunpack.c.l.s4 1934713408
        %v1070 = vunpack.c.0.s8 %v1069
        %v1071 = vperm.slane %v1063, %v1070
        %v1072 = vrot.slane %v1059, 4
        %v1073 = vsel %vm982, %v1072, %v1053
        %v1074 = vrot.slane %v1053, 4
        %v1075 = vsel %vm982, %v1059, %v1074
        %v1077 = vunpack.c.l.s4 1934713408
        %v1078 = vunpack.c.0.s8 %v1077
        %v1079 = vperm.slane %v1073, %v1078
        %v1081 = vunpack.c.l.s4 1934713408
        %v1082 = vunpack.c.0.s8 %v1081
        %v1083 = vperm.slane %v1075, %v1082
        %v1084 = vrot.slane %v1079, 4
        %v1085 = vsel %vm982, %v1084, %v1067
        %v1086 = vrot.slane %v1067, 4
        %v1087 = vsel %vm982, %v1079, %v1086
        %v1088 = vrot.slane %v1083, 4
        %v1089 = vsel %vm982, %v1088, %v1071
        %v1090 = vrot.slane %v1071, 4
        %v1091 = vsel %vm982, %v1083, %v1090
        %1093 = vrot.lane.b32.xlu0 %v960, 120
        %v1094 = vpop.permute.xlu0 %1093
        %1095 = vrot.lane.b32.xlu0 %v960, 112
        %v1096 = vpop.permute.xlu0 %1095
        %1097 = vrot.lane.b32.xlu0 %v960, 104
        %v1098 = vpop.permute.xlu0 %1097
        %1099 = vrot.lane.b32.xlu0 %v960, 96
        %v1100 = vpop.permute.xlu0 %1099
        %1101 = vrot.lane.b32.xlu0 %v1094, 96
        %v1102 = vpop.permute.xlu0 %1101
        %1103 = vrot.lane.b32.xlu0 %v1096, 96
        %v1104 = vpop.permute.xlu0 %1103
        %1105 = vrot.lane.b32.xlu0 %v1098, 96
        %v1106 = vpop.permute.xlu0 %1105
        %v1111 = vrot.slane %v1104, 4
        %v1112 = vsel %vm982, %v1111, %v1100
        %v1113 = vrot.slane %v1100, 4
        %v1114 = vsel %vm982, %v1104, %v1113
        %v1116 = vunpack.c.l.s4 1983009808
        %v1117 = vunpack.c.0.s8 %v1116
        %v1118 = vperm.slane %v1112, %v1117
        %v1120 = vunpack.c.l.s4 1983009808
        %v1121 = vunpack.c.0.s8 %v1120
        %v1122 = vperm.slane %v1114, %v1121
        %v1123 = vrot.slane %v1106, 4
        %v1124 = vsel %vm982, %v1123, %v1102
        %v1125 = vrot.slane %v1102, 4
        %v1126 = vsel %vm982, %v1106, %v1125
        %v1128 = vunpack.c.l.s4 1983009808
        %v1129 = vunpack.c.0.s8 %v1128
        %v1130 = vperm.slane %v1124, %v1129
        %v1132 = vunpack.c.l.s4 1983009808
        %v1133 = vunpack.c.0.s8 %v1132
        %v1134 = vperm.slane %v1126, %v1133
        %v1135 = vrot.slane %v1130, 4
        %v1136 = vsel %vm982, %v1135, %v1118
        %v1137 = vrot.slane %v1118, 4
        %v1138 = vsel %vm982, %v1130, %v1137
        %v1140 = vunpack.c.l.s4 1934713408
        %v1141 = vunpack.c.0.s8 %v1140
        %v1142 = vperm.slane %v1136, %v1141
        %v1144 = vunpack.c.l.s4 1934713408
        %v1145 = vunpack.c.0.s8 %v1144
        %v1146 = vperm.slane %v1138, %v1145
        %v1147 = vrot.slane %v1134, 4
        %v1148 = vsel %vm982, %v1147, %v1122
        %v1149 = vrot.slane %v1122, 4
        %v1150 = vsel %vm982, %v1134, %v1149
        %v1152 = vunpack.c.l.s4 1934713408
        %v1153 = vunpack.c.0.s8 %v1152
        %v1154 = vperm.slane %v1148, %v1153
        %v1156 = vunpack.c.l.s4 1934713408
        %v1157 = vunpack.c.0.s8 %v1156
        %v1158 = vperm.slane %v1150, %v1157
        %v1159 = vrot.slane %v1142, 4
        %v1160 = vsel %vm982, 0.0, %v1159
        %v1161 = vrot.slane %v1146, 4
        %v1162 = vsel %vm982, 0.0, %v1161
        %v1163 = vrot.slane %v1154, 4
        %v1164 = vsel %vm982, 0.0, %v1163
        %v1165 = vrot.slane %v1158, 4
        %v1166 = vsel %vm982, 0.0, %v1165
        %v1167 = vsel %vm982, %v1161, %v1142
        %v1169 = vunpack.c.l.s4 1983009808
        %v1170 = vunpack.c.0.s8 %v1169
        %v1171 = vperm.slane %v1167, %v1170
        %v1172 = vrot.slane %v1162, 4
        %v1173 = vsel %vm982, %v1172, %v1160
        %v1175 = vunpack.c.l.s4 1983009808
        %v1176 = vunpack.c.0.s8 %v1175
        %v1177 = vperm.slane %v1173, %v1176
        %v1178 = vsel %vm982, %v1165, %v1154
        %v1180 = vunpack.c.l.s4 1983009808
        %v1181 = vunpack.c.0.s8 %v1180
        %v1182 = vperm.slane %v1178, %v1181
        %v1183 = vrot.slane %v1166, 4
        %v1184 = vsel %vm982, %v1183, %v1164
        %v1186 = vunpack.c.l.s4 1983009808
        %v1187 = vunpack.c.0.s8 %v1186
        %v1188 = vperm.slane %v1184, %v1187
        %v1189 = vrot.slane %v1177, 4
        %v1190 = vsel %vm982, %v1189, %v1171
        %v1191 = vrot.slane %v1171, 4
        %v1192 = vsel %vm982, %v1177, %v1191
        %v1194 = vunpack.c.l.s4 1934713408
        %v1195 = vunpack.c.0.s8 %v1194
        %v1196 = vperm.slane %v1190, %v1195
        %v1198 = vunpack.c.l.s4 1934713408
        %v1199 = vunpack.c.0.s8 %v1198
        %v1200 = vperm.slane %v1192, %v1199
        %v1201 = vrot.slane %v1188, 4
        %v1202 = vsel %vm982, %v1201, %v1182
        %v1203 = vrot.slane %v1182, 4
        %v1204 = vsel %vm982, %v1188, %v1203
        %v1206 = vunpack.c.l.s4 1934713408
        %v1207 = vunpack.c.0.s8 %v1206
        %v1208 = vperm.slane %v1202, %v1207
        %v1210 = vunpack.c.l.s4 1934713408
        %v1211 = vunpack.c.0.s8 %v1210
        %v1212 = vperm.slane %v1204, %v1211
        %v1213 = vrot.slane %v1208, 4
        %v1214 = vsel %vm982, %v1213, %v1196
        %v1215 = vrot.slane %v1196, 4
        %v1216 = vsel %vm982, %v1208, %v1215
        %v1217 = vrot.slane %v1212, 4
        %v1218 = vsel %vm982, %v1217, %v1200
        %v1219 = vrot.slane %v1200, 4
        %v1220 = vsel %vm982, %v1212, %v1219
        %1221 = vrot.lane.b32.xlu0 %v960, 64
        %v1222 = vpop.permute.xlu0 %1221
        %1223 = vrot.lane.b32.xlu0 %v1094, 64
        %v1224 = vpop.permute.xlu0 %1223
        %1225 = vrot.lane.b32.xlu0 %v1096, 64
        %v1226 = vpop.permute.xlu0 %1225
        %1227 = vrot.lane.b32.xlu0 %v1098, 64
        %v1228 = vpop.permute.xlu0 %1227
        %v1233 = vrot.slane %v1226, 4
        %v1234 = vsel %vm982, %v1233, %v1222
        %v1235 = vrot.slane %v1222, 4
        %v1236 = vsel %vm982, %v1226, %v1235
        %v1238 = vunpack.c.l.s4 1983009808
        %v1239 = vunpack.c.0.s8 %v1238
        %v1240 = vperm.slane %v1234, %v1239
        %v1242 = vunpack.c.l.s4 1983009808
        %v1243 = vunpack.c.0.s8 %v1242
        %v1244 = vperm.slane %v1236, %v1243
        %v1245 = vrot.slane %v1228, 4
        %v1246 = vsel %vm982, %v1245, %v1224
        %v1247 = vrot.slane %v1224, 4
        %v1248 = vsel %vm982, %v1228, %v1247
        %v1250 = vunpack.c.l.s4 1983009808
        %v1251 = vunpack.c.0.s8 %v1250
        %v1252 = vperm.slane %v1246, %v1251
        %v1254 = vunpack.c.l.s4 1983009808
        %v1255 = vunpack.c.0.s8 %v1254
        %v1256 = vperm.slane %v1248, %v1255
        %v1257 = vrot.slane %v1252, 4
        %v1258 = vsel %vm982, %v1257, %v1240
        %v1259 = vrot.slane %v1240, 4
        %v1260 = vsel %vm982, %v1252, %v1259
        %v1262 = vunpack.c.l.s4 1934713408
        %v1263 = vunpack.c.0.s8 %v1262
        %v1264 = vperm.slane %v1258, %v1263
        %v1266 = vunpack.c.l.s4 1934713408
        %v1267 = vunpack.c.0.s8 %v1266
        %v1268 = vperm.slane %v1260, %v1267
        %v1269 = vrot.slane %v1256, 4
        %v1270 = vsel %vm982, %v1269, %v1244
        %v1271 = vrot.slane %v1244, 4
        %v1272 = vsel %vm982, %v1256, %v1271
        %v1274 = vunpack.c.l.s4 1934713408
        %v1275 = vunpack.c.0.s8 %v1274
        %v1276 = vperm.slane %v1270, %v1275
        %v1278 = vunpack.c.l.s4 1934713408
        %v1279 = vunpack.c.0.s8 %v1278
        %v1280 = vperm.slane %v1272, %v1279
        %v1281 = vrot.slane %v1264, 4
        %v1282 = vsel %vm982, 0.0, %v1281
        %v1283 = vrot.slane %v1268, 4
        %v1284 = vsel %vm982, 0.0, %v1283
        %v1285 = vrot.slane %v1276, 4
        %v1286 = vsel %vm982, 0.0, %v1285
        %v1287 = vrot.slane %v1280, 4
        %v1288 = vsel %vm982, 0.0, %v1287
        %v1289 = vsel %vm982, %v1283, %v1264
        %v1291 = vunpack.c.l.s4 1983009808
        %v1292 = vunpack.c.0.s8 %v1291
        %v1293 = vperm.slane %v1289, %v1292
        %v1294 = vrot.slane %v1284, 4
        %v1295 = vsel %vm982, %v1294, %v1282
        %v1297 = vunpack.c.l.s4 1983009808
        %v1298 = vunpack.c.0.s8 %v1297
        %v1299 = vperm.slane %v1295, %v1298
        %v1300 = vsel %vm982, %v1287, %v1276
        %v1302 = vunpack.c.l.s4 1983009808
        %v1303 = vunpack.c.0.s8 %v1302
        %v1304 = vperm.slane %v1300, %v1303
        %v1305 = vrot.slane %v1288, 4
        %v1306 = vsel %vm982, %v1305, %v1286
        %v1308 = vunpack.c.l.s4 1983009808
        %v1309 = vunpack.c.0.s8 %v1308
        %v1310 = vperm.slane %v1306, %v1309
        %v1311 = vrot.slane %v1299, 4
        %v1312 = vsel %vm982, %v1311, %v1293
        %v1313 = vrot.slane %v1293, 4
        %v1314 = vsel %vm982, %v1299, %v1313
        %v1316 = vunpack.c.l.s4 1934713408
        %v1317 = vunpack.c.0.s8 %v1316
        %v1318 = vperm.slane %v1312, %v1317
        %v1320 = vunpack.c.l.s4 1934713408
        %v1321 = vunpack.c.0.s8 %v1320
        %v1322 = vperm.slane %v1314, %v1321
        %v1323 = vrot.slane %v1310, 4
        %v1324 = vsel %vm982, %v1323, %v1304
        %v1325 = vrot.slane %v1304, 4
        %v1326 = vsel %vm982, %v1310, %v1325
        %v1328 = vunpack.c.l.s4 1934713408
        %v1329 = vunpack.c.0.s8 %v1328
        %v1330 = vperm.slane %v1324, %v1329
        %v1332 = vunpack.c.l.s4 1934713408
        %v1333 = vunpack.c.0.s8 %v1332
        %v1334 = vperm.slane %v1326, %v1333
        %v1335 = vrot.slane %v1330, 4
        %v1336 = vsel %vm982, %v1335, %v1318
        %v1337 = vrot.slane %v1318, 4
        %v1338 = vsel %vm982, %v1330, %v1337
        %v1339 = vrot.slane %v1334, 4
        %v1340 = vsel %vm982, %v1339, %v1322
        %v1341 = vrot.slane %v1322, 4
        %v1342 = vsel %vm982, %v1334, %v1341
        %v1343 = vpack.c.bf16 %v1085, %v1085
        %v1344 = vpack.c.bf16 %v1087, %v1087
        %v1345 = vpack.c.bf16 %v1089, %v1089
        %v1346 = vpack.c.bf16 %v1091, %v1091
        %v1347 = vpack.c.bf16 %v1214, %v1214
        %v1348 = vpack.c.bf16 %v1216, %v1216
        %v1349 = vpack.c.bf16 %v1218, %v1218
        %v1350 = vpack.c.bf16 %v1220, %v1220
        %vm1351 = vcmask 64512
        %v1353 = vsel %vm1351, %v1343, 0
        %v1356 = vsel %vm1351, %v1347, 0
        %1358 = vmatpush.bf16.xpose.msra.mxu0 0
        %1359 = vmatpush.bf16.xpose.msra.mxu0 0
        %1360 = vmatpush.bf16.xpose.msra.mxu0 0
        %1361 = vmatpush.bf16.xpose.msra.mxu0 0
        %1362 = vmatpush.bf16.xpose.msra.mxu0 0
        %1363 = vmatpush.bf16.xpose.msra.mxu0 0
        %1364 = vmatpush.bf16.xpose.msra.mxu0 0
        %1365 = vmatpush.bf16.xpose.msra.mxu0 %v1356
        %1366 = vmatmul.bf16.gmra.mxu0 %v1353
        %v1367 = vpop.f32.mrf.mxu0
        %v1368 = vadd.f32 0.0, %v1367
        %v1369 = vpop.f32.mrf.mxu0
        %1370 = vdwg.mxu0
        %v1372 = vsel %vm1351, %v1344, 0
        %v1375 = vsel %vm1351, %v1348, 0
        %1377 = vmatpush.bf16.xpose.msra.mxu0 0
        %1378 = vmatpush.bf16.xpose.msra.mxu0 0
        %1379 = vmatpush.bf16.xpose.msra.mxu0 0
        %1380 = vmatpush.bf16.xpose.msra.mxu0 0
        %1381 = vmatpush.bf16.xpose.msra.mxu0 0
        %1382 = vmatpush.bf16.xpose.msra.mxu0 0
        %1383 = vmatpush.bf16.xpose.msra.mxu0 0
        %1384 = vmatpush.bf16.xpose.msra.mxu0 %v1375
        %1385 = vmatmul.bf16.gmra.mxu0 %v1372
        %v1386 = vpop.f32.mrf.mxu0
        %v1387 = vadd.f32 0.0, %v1386
        %v1388 = vpop.f32.mrf.mxu0
        %1389 = vdwg.mxu0
        %v1391 = vsel %vm1351, %v1345, 0
        %v1394 = vsel %vm1351, %v1349, 0
        %1396 = vmatpush.bf16.xpose.msra.mxu0 0
        %1397 = vmatpush.bf16.xpose.msra.mxu0 0
        %1398 = vmatpush.bf16.xpose.msra.mxu0 0
        %1399 = vmatpush.bf16.xpose.msra.mxu0 0
        %1400 = vmatpush.bf16.xpose.msra.mxu0 0
        %1401 = vmatpush.bf16.xpose.msra.mxu0 0
        %1402 = vmatpush.bf16.xpose.msra.mxu0 0
        %1403 = vmatpush.bf16.xpose.msra.mxu0 %v1394
        %1404 = vmatmul.bf16.gmra.mxu0 %v1391
        %v1405 = vpop.f32.mrf.mxu0
        %v1406 = vadd.f32 0.0, %v1405
        %v1407 = vpop.f32.mrf.mxu0
        %1408 = vdwg.mxu0
        %v1410 = vsel %vm1351, %v1346, 0
        %v1413 = vsel %vm1351, %v1350, 0
        %1415 = vmatpush.bf16.xpose.msra.mxu0 0
        %1416 = vmatpush.bf16.xpose.msra.mxu0 0
        %1417 = vmatpush.bf16.xpose.msra.mxu0 0
        %1418 = vmatpush.bf16.xpose.msra.mxu0 0
        %1419 = vmatpush.bf16.xpose.msra.mxu0 0
        %1420 = vmatpush.bf16.xpose.msra.mxu0 0
        %1421 = vmatpush.bf16.xpose.msra.mxu0 0
        %1422 = vmatpush.bf16.xpose.msra.mxu0 %v1413
        %1423 = vmatmul.bf16.gmra.mxu0 %v1410
        %v1424 = vpop.f32.mrf.mxu0
        %v1425 = vadd.f32 0.0, %v1424
        %v1426 = vpop.f32.mrf.mxu0
        %1427 = vdwg.mxu0
        %v1428 = vlaneseq
        %v1429 = vshrl.u32 %v1428, 7
        %v1430 = vlaneseq
        %v1431 = vand.u32 %v1430, 127
        %vm1432 = vcmp.gt.s32.totalorder %v1431, %v1429
        %v1433 = vsel %vm1432, 1, 0
        %vm1434 = vcmp.eq.s32.totalorder %v1433, 1
        %v1435 = vsel %vm1434, -1e+30, %v1368
        %v1436 = vsel %vm1434, -1e+30, %v1387
        %v1437 = vsel %vm1434, -1e+30, %v1406
        %v1438 = vsel %vm1434, -1e+30, %v1425
        %v1439 = vsel %vm1351, %v1435, -inf
        %1440 = vmax.xlane.f32.xlu0 %v1439
        %v1441 = vpop.xlane.xlu0 %1440
        %v1442 = vsel %vm1351, %v1436, -inf
        %1443 = vmax.xlane.f32.xlu0 %v1442
        %v1444 = vpop.xlane.xlu0 %1443
        %v1445 = vsel %vm1351, %v1437, -inf
        %1446 = vmax.xlane.f32.xlu0 %v1445
        %v1447 = vpop.xlane.xlu0 %1446
        %v1448 = vsel %vm1351, %v1438, -inf
        %1449 = vmax.xlane.f32.xlu0 %v1448
        %v1450 = vpop.xlane.xlu0 %1449
        %v1451 = vsub.f32 %v1435, %v1441
        %v1452 = vsub.f32 %v1436, %v1444
        %v1453 = vsub.f32 %v1437, %v1447
        %v1454 = vsub.f32 %v1438, %v1450
        %v1455 = vmul.f32 %v1451, 1.442695
        %v1456 = vpow.pop %v1455
        %v1457 = vmul.f32 %v1452, 1.442695
        %v1458 = vpow.pop %v1457
        %v1459 = vmul.f32 %v1453, 1.442695
        %v1460 = vpow.pop %v1459
        %v1461 = vmul.f32 %v1454, 1.442695
        %v1462 = vpow.pop %v1461
        %v1463 = vsel %vm1351, %v1456, 0.0
        %1464 = vadd.xlane.f32.xlu0 %v1463
        %v1465 = vpop.xlane.xlu0 %1464
        %v1466 = vsel %vm1351, %v1458, 0.0
        %1467 = vadd.xlane.f32.xlu0 %v1466
        %v1468 = vpop.xlane.xlu0 %1467
        %v1469 = vsel %vm1351, %v1460, 0.0
        %1470 = vadd.xlane.f32.xlu0 %v1469
        %v1471 = vpop.xlane.xlu0 %1470
        %v1472 = vsel %vm1351, %v1462, 0.0
        %1473 = vadd.xlane.f32.xlu0 %v1472
        %v1474 = vpop.xlane.xlu0 %1473
        %v1475 = vrcp.pop %v1465
        %v1476 = vrcp.pop %v1468
        %v1477 = vrcp.pop %v1471
        %v1478 = vrcp.pop %v1474
        %v1479 = vmul.f32 %v1456, %v1475
        %v1480 = vmul.f32 %v1458, %v1476
        %v1481 = vmul.f32 %v1460, %v1477
        %v1482 = vmul.f32 %v1462, %v1478
        %v1483 = vpack.c.bf16 %v1479, %v1479
        %v1484 = vpack.c.bf16 %v1480, %v1480
        %v1485 = vpack.c.bf16 %v1481, %v1481
        %v1486 = vpack.c.bf16 %v1482, %v1482
        %v1487 = vpack.c.bf16 %v1336, %v1336
        %v1488 = vpack.c.bf16 %v1338, %v1338
        %v1489 = vpack.c.bf16 %v1340, %v1340
        %v1490 = vpack.c.bf16 %v1342, %v1342
        %v1492 = vsel %vm1351, %v1483, 0
        %vm1494 = vcmask 1043456
        %v1496 = vsel %vm1494, %v1487, 0
        %1498 = vmatpush.bf16.msra.mxu0 0
        %1499 = vmatpush.bf16.msra.mxu0 0
        %1500 = vmatpush.bf16.msra.mxu0 0
        %1501 = vmatpush.bf16.msra.mxu0 0
        %1502 = vmatpush.bf16.msra.mxu0 0
        %1503 = vmatpush.bf16.msra.mxu0 0
        %1504 = vmatpush.bf16.msra.mxu0 0
        %1505 = vmatpush.bf16.msra.mxu0 %v1496
        %1506 = vmatmul.bf16.gmra.mxu0 %v1492
        %v1507 = vpop.f32.mrf.mxu0
        %v1508 = vadd.f32 0.0, %v1507
        %v1509 = vpop.f32.mrf.mxu0
        %1510 = vdwg.mxu0
        %v1512 = vsel %vm1351, %v1484, 0
        %v1515 = vsel %vm1494, %v1488, 0
        %1517 = vmatpush.bf16.msra.mxu0 0
        %1518 = vmatpush.bf16.msra.mxu0 0
        %1519 = vmatpush.bf16.msra.mxu0 0
        %1520 = vmatpush.bf16.msra.mxu0 0
        %1521 = vmatpush.bf16.msra.mxu0 0
        %1522 = vmatpush.bf16.msra.mxu0 0
        %1523 = vmatpush.bf16.msra.mxu0 0
        %1524 = vmatpush.bf16.msra.mxu0 %v1515
        %1525 = vmatmul.bf16.gmra.mxu0 %v1512
        %v1526 = vpop.f32.mrf.mxu0
        %v1527 = vadd.f32 0.0, %v1526
        %v1528 = vpop.f32.mrf.mxu0
        %1529 = vdwg.mxu0
        %v1531 = vsel %vm1351, %v1485, 0
        %v1534 = vsel %vm1494, %v1489, 0
        %1536 = vmatpush.bf16.msra.mxu0 0
        %1537 = vmatpush.bf16.msra.mxu0 0
        %1538 = vmatpush.bf16.msra.mxu0 0
        %1539 = vmatpush.bf16.msra.mxu0 0
        %1540 = vmatpush.bf16.msra.mxu0 0
        %1541 = vmatpush.bf16.msra.mxu0 0
        %1542 = vmatpush.bf16.msra.mxu0 0
        %1543 = vmatpush.bf16.msra.mxu0 %v1534
        %1544 = vmatmul.bf16.gmra.mxu0 %v1531
        %v1545 = vpop.f32.mrf.mxu0
        %v1546 = vadd.f32 0.0, %v1545
        %v1547 = vpop.f32.mrf.mxu0
        %1548 = vdwg.mxu0
        %v1550 = vsel %vm1351, %v1486, 0
        %v1553 = vsel %vm1494, %v1490, 0
        %1555 = vmatpush.bf16.msra.mxu0 0
        %1556 = vmatpush.bf16.msra.mxu0 0
        %1557 = vmatpush.bf16.msra.mxu0 0
        %1558 = vmatpush.bf16.msra.mxu0 0
        %1559 = vmatpush.bf16.msra.mxu0 0
        %1560 = vmatpush.bf16.msra.mxu0 0
        %1561 = vmatpush.bf16.msra.mxu0 0
        %1562 = vmatpush.bf16.msra.mxu0 %v1553
        %1563 = vmatmul.bf16.gmra.mxu0 %v1550
        %v1564 = vpop.f32.mrf.mxu0
        %v1565 = vadd.f32 0.0, %v1564
        %v1566 = vpop.f32.mrf.mxu0
        %1567 = vdwg.mxu0
        %v1568 = vrot.slane %v1546, 4
        %v1569 = vsel %vm982, %v1568, %v1508
        %v1570 = vrot.slane %v1508, 4
        %v1571 = vsel %vm982, %v1546, %v1570
        %v1573 = vunpack.c.l.s4 1983009808
        %v1574 = vunpack.c.0.s8 %v1573
        %v1575 = vperm.slane %v1569, %v1574
        %v1577 = vunpack.c.l.s4 1983009808
        %v1578 = vunpack.c.0.s8 %v1577
        %v1579 = vperm.slane %v1571, %v1578
        %v1580 = vrot.slane %v1565, 4
        %v1581 = vsel %vm982, %v1580, %v1527
        %v1582 = vrot.slane %v1527, 4
        %v1583 = vsel %vm982, %v1565, %v1582
        %v1585 = vunpack.c.l.s4 1983009808
        %v1586 = vunpack.c.0.s8 %v1585
        %v1587 = vperm.slane %v1581, %v1586
        %v1589 = vunpack.c.l.s4 1983009808
        %v1590 = vunpack.c.0.s8 %v1589
        %v1591 = vperm.slane %v1583, %v1590
        %v1592 = vrot.slane %v1587, 4
        %v1593 = vsel %vm982, %v1592, %v1575
        %v1594 = vrot.slane %v1575, 4
        %v1595 = vsel %vm982, %v1587, %v1594
        %v1597 = vunpack.c.l.s4 1934713408
        %v1598 = vunpack.c.0.s8 %v1597
        %v1599 = vperm.slane %v1593, %v1598
        %v1601 = vunpack.c.l.s4 1934713408
        %v1602 = vunpack.c.0.s8 %v1601
        %v1603 = vperm.slane %v1595, %v1602
        %v1604 = vrot.slane %v1591, 4
        %v1605 = vsel %vm982, %v1604, %v1579
        %v1606 = vrot.slane %v1579, 4
        %v1607 = vsel %vm982, %v1591, %v1606
        %v1609 = vunpack.c.l.s4 1934713408
        %v1610 = vunpack.c.0.s8 %v1609
        %v1611 = vperm.slane %v1605, %v1610
        %v1613 = vunpack.c.l.s4 1934713408
        %v1614 = vunpack.c.0.s8 %v1613
        %v1615 = vperm.slane %v1607, %v1614
        %v1616 = vrot.slane %v1599, 4
        %v1617 = vsel %vm982, 0.0, %v1616
        %v1618 = vrot.slane %v1603, 4
        %v1619 = vsel %vm982, 0.0, %v1618
        %v1620 = vrot.slane %v1611, 4
        %v1621 = vsel %vm982, 0.0, %v1620
        %v1622 = vrot.slane %v1615, 4
        %v1623 = vsel %vm982, 0.0, %v1622
        %v1624 = vsel %vm982, %v1618, %v1599
        %v1626 = vunpack.c.l.s4 1983009808
        %v1627 = vunpack.c.0.s8 %v1626
        %v1628 = vperm.slane %v1624, %v1627
        %v1629 = vrot.slane %v1619, 4
        %v1630 = vsel %vm982, %v1629, %v1617
        %v1632 = vunpack.c.l.s4 1983009808
        %v1633 = vunpack.c.0.s8 %v1632
        %v1634 = vperm.slane %v1630, %v1633
        %v1635 = vsel %vm982, %v1622, %v1611
        %v1637 = vunpack.c.l.s4 1983009808
        %v1638 = vunpack.c.0.s8 %v1637
        %v1639 = vperm.slane %v1635, %v1638
        %v1640 = vrot.slane %v1623, 4
        %v1641 = vsel %vm982, %v1640, %v1621
        %v1643 = vunpack.c.l.s4 1983009808
        %v1644 = vunpack.c.0.s8 %v1643
        %v1645 = vperm.slane %v1641, %v1644
        %v1646 = vrot.slane %v1634, 4
        %v1647 = vsel %vm982, %v1646, %v1628
        %v1648 = vrot.slane %v1628, 4
        %v1649 = vsel %vm982, %v1634, %v1648
        %v1651 = vunpack.c.l.s4 1934713408
        %v1652 = vunpack.c.0.s8 %v1651
        %v1653 = vperm.slane %v1647, %v1652
        %v1655 = vunpack.c.l.s4 1934713408
        %v1656 = vunpack.c.0.s8 %v1655
        %v1657 = vperm.slane %v1649, %v1656
        %v1658 = vrot.slane %v1645, 4
        %v1659 = vsel %vm982, %v1658, %v1639
        %v1660 = vrot.slane %v1639, 4
        %v1661 = vsel %vm982, %v1645, %v1660
        %v1663 = vunpack.c.l.s4 1934713408
        %v1664 = vunpack.c.0.s8 %v1663
        %v1665 = vperm.slane %v1659, %v1664
        %v1667 = vunpack.c.l.s4 1934713408
        %v1668 = vunpack.c.0.s8 %v1667
        %v1669 = vperm.slane %v1661, %v1668
        %v1670 = vrot.slane %v1665, 4
        %v1671 = vsel %vm982, %v1670, %v1653
        %v1672 = vrot.slane %v1653, 4
        %v1673 = vsel %vm982, %v1665, %v1672
        %v1674 = vrot.slane %v1669, 4
        %v1675 = vsel %vm982, %v1674, %v1657
        %v1676 = vrot.slane %v1657, 4
        %v1677 = vsel %vm982, %v1669, %v1676
        %1679 = vrot.lane.b32.xlu0 %v1673, 8
        %v1680 = vpop.permute.xlu0 %1679
        %1683 = vrot.lane.b32.xlu0 %v1675, 16
        %v1684 = vpop.permute.xlu0 %1683
        %1687 = vrot.lane.b32.xlu0 %v1677, 24
        %v1688 = vpop.permute.xlu0 %1687
        %v1690 = vsel %vm1351, %v1671, %v1680
        %vm1691 = vcmask 130048
        %v1692 = vsel %vm1691, %v1690, %v1684
        %vm1693 = vcmask 195584
        %v1694 = vsel %vm1693, %v1692, %v1688
        %v1695 = vpack.c.bf16 %v1694, %v1694
        %v1697 = vperm.slane %v967, 0
        %v1703 = vunpack.c.l.b16 %v963
        %v1704 = vunpack.c.l.b16 %v964
        %v1705 = vunpack.c.l.b16 %v965
        %v1706 = vunpack.c.l.b16 %v966
        %v1707 = vpack.c.b16 %v1704, %v1703
        %v1708 = vpack.c.b16 %v1706, %v1705
        %v1712 = vsel %vm946, %v1695, 0
        %1714 = vmatpush.bf16.msra.mxu0 0
        %1715 = vmatpush.bf16.msra.mxu0 0
        %1716 = vmatpush.bf16.msra.mxu0 0
        %1717 = vmatpush.bf16.msra.mxu0 0
        %1718 = vmatpush.bf16.msra.mxu0 0
        %1719 = vmatpush.bf16.msra.mxu0 0
        %1720 = vmatpush.bf16.msra.mxu0 %v1708
        %1721 = vmatpush.bf16.msra.mxu0 %v1707
        %1722 = vmatmul.bf16.gmra.mxu0 %v1712
        %v1723 = vpop.f32.mrf.mxu0
        %v1724 = vadd.f32 %v1697, %v1723
        %v1725 = vpop.f32.mrf.mxu0
        %1726 = vdwg.mxu0
        %v1727 = vadd.f32 %v923, %v1724
        %v1728 = vsel %vm946, %v1727, 0.0
        %1729 = vadd.xlane.f32.xlu0 %v1728
        %v1730 = vpop.xlane.xlu0 %1729
        %v1731 = vrcp.pop 32.0
        %v1732 = vmul.f32 32.0, %v1731
        %v1733 = vsub.f32 1.0, %v1732
        %v1734 = vmul.f32 %v1731, %v1733
        %v1735 = vadd.f32 %v1731, %v1734
        %vm1736 = vweird.f32 %v1731
        %v1737 = vsel %vm1736, %v1731, %v1735
        %v1738 = vmul.f32 %v1730, %v1737
        %v1739 = vsub.f32 %v1727, %v1738
        %v1740 = vmul.f32 %v1739, %v1739
        %v1741 = vsel %vm946, %v1740, 0.0
        %1742 = vadd.xlane.f32.xlu0 %v1741
        %v1743 = vpop.xlane.xlu0 %1742
        %v1744 = vmul.f32 %v1743, %v1737
        %v1745 = vadd.f32 %v1744, 1e-05
        %v1746 = vrsqrt.pop %v1745
        %v1747 = vmul.f32 %v1746, %v1745
        %v1748 = vmul.f32 %v1747, %v1746
        %v1749 = vmul.f32 0.5, %v1748
        %v1750 = vsub.f32 1.5, %v1749
        %v1751 = vmul.f32 %v1746, %v1750
        %vm1752 = vweird.f32 %v1745
        %vm1753 = vweird.f32 %v1746
        %vm1754 = vmor %vm1752, %vm1753
        %v1755 = vsel %vm1754, %v1746, %v1751
        %v1756 = vmul.f32 %v1739, %v1755
        %v1758 = vperm.slane %v968, 0
        %v1760 = vmul.f32 %v1756, %v1758
        %v1762 = vperm.slane %v969, 0
        %v1764 = vadd.f32 %v1760, %v1762
        %v1765 = vld [vmem:[#allocation7] sm:$0xf]
        %v1766 = vld [vmem:[#allocation7 + $0x4] sm:$0xf]
        %v1767 = vld [vmem:[#allocation7 + $0x8] sm:$0xf]
        %v1768 = vld [vmem:[#allocation7 + $0xc] sm:$0xf]
        %v1769 = vpack.c.bf16 %v1764, %v1764
        %v1770 = vld [vmem:[#allocation8] sm:$0x1]
        %v1772 = vperm.slane %v1770, 0
        %v1778 = vunpack.c.l.b16 %v1765
        %v1779 = vunpack.c.l.b16 %v1766
        %v1780 = vunpack.c.l.b16 %v1767
        %v1781 = vunpack.c.l.b16 %v1768
        %v1782 = vpack.c.b16 %v1779, %v1778
        %v1783 = vpack.c.b16 %v1781, %v1780
        %v1787 = vsel %vm946, %v1769, 0
        %1789 = vmatpush.bf16.msra.mxu0 0
        %1790 = vmatpush.bf16.msra.mxu0 0
        %1791 = vmatpush.bf16.msra.mxu0 0
        %1792 = vmatpush.bf16.msra.mxu0 0
        %1793 = vmatpush.bf16.msra.mxu0 0
        %1794 = vmatpush.bf16.msra.mxu0 0
        %1795 = vmatpush.bf16.msra.mxu0 %v1783
        %1796 = vmatpush.bf16.msra.mxu0 %v1782
        %1797 = vmatmul.bf16.gmra.mxu0 %v1787
        %v1798 = vpop.f32.mrf.mxu0
        %v1799 = vadd.f32 %v1772, %v1798
        %v1800 = vpop.f32.mrf.mxu0
        %1801 = vdwg.mxu0
        %v1802 = vld [vmem:[#allocation10] sm:$0xf]
        %v1803 = vld [vmem:[#allocation10 + $0x4] sm:$0xf]
        %v1804 = vld [vmem:[#allocation10 + $0x8] sm:$0xf]
        %v1805 = vld [vmem:[#allocation10 + $0xc] sm:$0xf]
        %v1806 = vpack.c.bf16 %v924, %v924
        %v1807 = vld [vmem:[#allocation11] sm:$0x1]
        %v1809 = vperm.slane %v1807, 0
        %v1815 = vunpack.c.l.b16 %v1802
        %v1816 = vunpack.c.l.b16 %v1803
        %v1817 = vunpack.c.l.b16 %v1804
        %v1818 = vunpack.c.l.b16 %v1805
        %v1819 = vpack.c.b16 %v1816, %v1815
        %v1820 = vpack.c.b16 %v1818, %v1817
        %v1824 = vsel %vm946, %v1806, 0
        %1826 = vmatpush.bf16.msra.mxu0 0
        %1827 = vmatpush.bf16.msra.mxu0 0
        %1828 = vmatpush.bf16.msra.mxu0 0
        %1829 = vmatpush.bf16.msra.mxu0 0
        %1830 = vmatpush.bf16.msra.mxu0 0
        %1831 = vmatpush.bf16.msra.mxu0 0
        %1832 = vmatpush.bf16.msra.mxu0 %v1820
        %1833 = vmatpush.bf16.msra.mxu0 %v1819
        %1834 = vmatmul.bf16.gmra.mxu0 %v1824
        %v1835 = vpop.f32.mrf.mxu0
        %v1836 = vadd.f32 %v1809, %v1835
        %v1837 = vpop.f32.mrf.mxu0
        %1838 = vdwg.mxu0
        %v1839 = vld [vmem:[#allocation13] sm:$0xf]
        %v1840 = vld [vmem:[#allocation13 + $0x4] sm:$0xf]
        %v1841 = vld [vmem:[#allocation13 + $0x8] sm:$0xf]
        %v1842 = vld [vmem:[#allocation13 + $0xc] sm:$0xf]
        %v1843 = vld [vmem:[#allocation14] sm:$0x1]
        %v1844 = vld [vmem:[#allocation16] sm:$0x1]
        %v1845 = vld [vmem:[#allocation17] sm:$0x1]
        %v1846 = vmul.f32 %v1799, 0.35355338
        %1848 = vrot.lane.b32.xlu0 %v1846, 120
        %v1849 = vpop.permute.xlu0 %1848
        %1851 = vrot.lane.b32.xlu0 %v1846, 112
        %v1852 = vpop.permute.xlu0 %1851
        %1854 = vrot.lane.b32.xlu0 %v1846, 104
        %v1855 = vpop.permute.xlu0 %1854
        %v1857 = vrot.slane %v1852, 4
        %v1858 = vsel %vm982, %v1857, %v1846
        %v1859 = vrot.slane %v1846, 4
        %v1860 = vsel %vm982, %v1852, %v1859
        %v1862 = vunpack.c.l.s4 1983009808
        %v1863 = vunpack.c.0.s8 %v1862
        %v1864 = vperm.slane %v1858, %v1863
        %v1866 = vunpack.c.l.s4 1983009808
        %v1867 = vunpack.c.0.s8 %v1866
        %v1868 = vperm.slane %v1860, %v1867
        %v1869 = vrot.slane %v1855, 4
        %v1870 = vsel %vm982, %v1869, %v1849
        %v1871 = vrot.slane %v1849, 4
        %v1872 = vsel %vm982, %v1855, %v1871
        %v1874 = vunpack.c.l.s4 1983009808
        %v1875 = vunpack.c.0.s8 %v1874
        %v1876 = vperm.slane %v1870, %v1875
        %v1878 = vunpack.c.l.s4 1983009808
        %v1879 = vunpack.c.0.s8 %v1878
        %v1880 = vperm.slane %v1872, %v1879
        %v1881 = vrot.slane %v1876, 4
        %v1882 = vsel %vm982, %v1881, %v1864
        %v1883 = vrot.slane %v1864, 4
        %v1884 = vsel %vm982, %v1876, %v1883
        %v1886 = vunpack.c.l.s4 1934713408
        %v1887 = vunpack.c.0.s8 %v1886
        %v1888 = vperm.slane %v1882, %v1887
        %v1890 = vunpack.c.l.s4 1934713408
        %v1891 = vunpack.c.0.s8 %v1890
        %v1892 = vperm.slane %v1884, %v1891
        %v1893 = vrot.slane %v1880, 4
        %v1894 = vsel %vm982, %v1893, %v1868
        %v1895 = vrot.slane %v1868, 4
        %v1896 = vsel %vm982, %v1880, %v1895
        %v1898 = vunpack.c.l.s4 1934713408
        %v1899 = vunpack.c.0.s8 %v1898
        %v1900 = vperm.slane %v1894, %v1899
        %v1902 = vunpack.c.l.s4 1934713408
        %v1903 = vunpack.c.0.s8 %v1902
        %v1904 = vperm.slane %v1896, %v1903
        %v1905 = vrot.slane %v1888, 4
        %v1906 = vsel %vm982, 0.0, %v1905
        %v1907 = vrot.slane %v1892, 4
        %v1908 = vsel %vm982, 0.0, %v1907
        %v1909 = vrot.slane %v1900, 4
        %v1910 = vsel %vm982, 0.0, %v1909
        %v1911 = vrot.slane %v1904, 4
        %v1912 = vsel %vm982, 0.0, %v1911
        %v1913 = vsel %vm982, %v1907, %v1888
        %v1915 = vunpack.c.l.s4 1983009808
        %v1916 = vunpack.c.0.s8 %v1915
        %v1917 = vperm.slane %v1913, %v1916
        %v1918 = vrot.slane %v1908, 4
        %v1919 = vsel %vm982, %v1918, %v1906
        %v1921 = vunpack.c.l.s4 1983009808
        %v1922 = vunpack.c.0.s8 %v1921
        %v1923 = vperm.slane %v1919, %v1922
        %v1924 = vsel %vm982, %v1911, %v1900
        %v1926 = vunpack.c.l.s4 1983009808
        %v1927 = vunpack.c.0.s8 %v1926
        %v1928 = vperm.slane %v1924, %v1927
        %v1929 = vrot.slane %v1912, 4
        %v1930 = vsel %vm982, %v1929, %v1910
        %v1932 = vunpack.c.l.s4 1983009808
        %v1933 = vunpack.c.0.s8 %v1932
        %v1934 = vperm.slane %v1930, %v1933
        %v1935 = vrot.slane %v1923, 4
        %v1936 = vsel %vm982, %v1935, %v1917
        %v1937 = vrot.slane %v1917, 4
        %v1938 = vsel %vm982, %v1923, %v1937
        %v1940 = vunpack.c.l.s4 1934713408
        %v1941 = vunpack.c.0.s8 %v1940
        %v1942 = vperm.slane %v1936, %v1941
        %v1944 = vunpack.c.l.s4 1934713408
        %v1945 = vunpack.c.0.s8 %v1944
        %v1946 = vperm.slane %v1938, %v1945
        %v1947 = vrot.slane %v1934, 4
        %v1948 = vsel %vm982, %v1947, %v1928
        %v1949 = vrot.slane %v1928, 4
        %v1950 = vsel %vm982, %v1934, %v1949
        %v1952 = vunpack.c.l.s4 1934713408
        %v1953 = vunpack.c.0.s8 %v1952
        %v1954 = vperm.slane %v1948, %v1953
        %v1956 = vunpack.c.l.s4 1934713408
        %v1957 = vunpack.c.0.s8 %v1956
        %v1958 = vperm.slane %v1950, %v1957
        %v1959 = vrot.slane %v1954, 4
        %v1960 = vsel %vm982, %v1959, %v1942
        %v1961 = vrot.slane %v1942, 4
        %v1962 = vsel %vm982, %v1954, %v1961
        %v1963 = vrot.slane %v1958, 4
        %v1964 = vsel %vm982, %v1963, %v1946
        %v1965 = vrot.slane %v1946, 4
        %v1966 = vsel %vm982, %v1958, %v1965
        %1968 = vrot.lane.b32.xlu0 %v1836, 120
        %v1969 = vpop.permute.xlu0 %1968
        %1971 = vrot.lane.b32.xlu0 %v1836, 112
        %v1972 = vpop.permute.xlu0 %1971
        %1974 = vrot.lane.b32.xlu0 %v1836, 104
        %v1975 = vpop.permute.xlu0 %1974
        %v1977 = vrot.slane %v1972, 4
        %v1978 = vsel %vm982, %v1977, %v1836
        %v1979 = vrot.slane %v1836, 4
        %v1980 = vsel %vm982, %v1972, %v1979
        %v1982 = vunpack.c.l.s4 1983009808
        %v1983 = vunpack.c.0.s8 %v1982
        %v1984 = vperm.slane %v1978, %v1983
        %v1986 = vunpack.c.l.s4 1983009808
        %v1987 = vunpack.c.0.s8 %v1986
        %v1988 = vperm.slane %v1980, %v1987
        %v1989 = vrot.slane %v1975, 4
        %v1990 = vsel %vm982, %v1989, %v1969
        %v1991 = vrot.slane %v1969, 4
        %v1992 = vsel %vm982, %v1975, %v1991
        %v1994 = vunpack.c.l.s4 1983009808
        %v1995 = vunpack.c.0.s8 %v1994
        %v1996 = vperm.slane %v1990, %v1995
        %v1998 = vunpack.c.l.s4 1983009808
        %v1999 = vunpack.c.0.s8 %v1998
        %v2000 = vperm.slane %v1992, %v1999
        %v2001 = vrot.slane %v1996, 4
        %v2002 = vsel %vm982, %v2001, %v1984
        %v2003 = vrot.slane %v1984, 4
        %v2004 = vsel %vm982, %v1996, %v2003
        %v2006 = vunpack.c.l.s4 1934713408
        %v2007 = vunpack.c.0.s8 %v2006
        %v2008 = vperm.slane %v2002, %v2007
        %v2010 = vunpack.c.l.s4 1934713408
        %v2011 = vunpack.c.0.s8 %v2010
        %v2012 = vperm.slane %v2004, %v2011
        %v2013 = vrot.slane %v2000, 4
        %v2014 = vsel %vm982, %v2013, %v1988
        %v2015 = vrot.slane %v1988, 4
        %v2016 = vsel %vm982, %v2000, %v2015
        %v2018 = vunpack.c.l.s4 1934713408
        %v2019 = vunpack.c.0.s8 %v2018
        %v2020 = vperm.slane %v2014, %v2019
        %v2022 = vunpack.c.l.s4 1934713408
        %v2023 = vunpack.c.0.s8 %v2022
        %v2024 = vperm.slane %v2016, %v2023
        %v2025 = vrot.slane %v2008, 4
        %v2026 = vsel %vm982, 0.0, %v2025
        %v2027 = vrot.slane %v2012, 4
        %v2028 = vsel %vm982, 0.0, %v2027
        %v2029 = vrot.slane %v2020, 4
        %v2030 = vsel %vm982, 0.0, %v2029
        %v2031 = vrot.slane %v2024, 4
        %v2032 = vsel %vm982, 0.0, %v2031
        %v2033 = vsel %vm982, %v2027, %v2008
        %v2035 = vunpack.c.l.s4 1983009808
        %v2036 = vunpack.c.0.s8 %v2035
        %v2037 = vperm.slane %v2033, %v2036
        %v2038 = vrot.slane %v2028, 4
        %v2039 = vsel %vm982, %v2038, %v2026
        %v2041 = vunpack.c.l.s4 1983009808
        %v2042 = vunpack.c.0.s8 %v2041
        %v2043 = vperm.slane %v2039, %v2042
        %v2044 = vsel %vm982, %v2031, %v2020
        %v2046 = vunpack.c.l.s4 1983009808
        %v2047 = vunpack.c.0.s8 %v2046
        %v2048 = vperm.slane %v2044, %v2047
        %v2049 = vrot.slane %v2032, 4
        %v2050 = vsel %vm982, %v2049, %v2030
        %v2052 = vunpack.c.l.s4 1983009808
        %v2053 = vunpack.c.0.s8 %v2052
        %v2054 = vperm.slane %v2050, %v2053
        %v2055 = vrot.slane %v2043, 4
        %v2056 = vsel %vm982, %v2055, %v2037
        %v2057 = vrot.slane %v2037, 4
        %v2058 = vsel %vm982, %v2043, %v2057
        %v2060 = vunpack.c.l.s4 1934713408
        %v2061 = vunpack.c.0.s8 %v2060
        %v2062 = vperm.slane %v2056, %v2061
        %v2064 = vunpack.c.l.s4 1934713408
        %v2065 = vunpack.c.0.s8 %v2064
        %v2066 = vperm.slane %v2058, %v2065
        %v2067 = vrot.slane %v2054, 4
        %v2068 = vsel %vm982, %v2067, %v2048
        %v2069 = vrot.slane %v2048, 4
        %v2070 = vsel %vm982, %v2054, %v2069
        %v2072 = vunpack.c.l.s4 1934713408
        %v2073 = vunpack.c.0.s8 %v2072
        %v2074 = vperm.slane %v2068, %v2073
        %v2076 = vunpack.c.l.s4 1934713408
        %v2077 = vunpack.c.0.s8 %v2076
        %v2078 = vperm.slane %v2070, %v2077
        %v2079 = vrot.slane %v2074, 4
        %v2080 = vsel %vm982, %v2079, %v2062
        %v2081 = vrot.slane %v2062, 4
        %v2082 = vsel %vm982, %v2074, %v2081
        %v2083 = vrot.slane %v2078, 4
        %v2084 = vsel %vm982, %v2083, %v2066
        %v2085 = vrot.slane %v2066, 4
        %v2086 = vsel %vm982, %v2078, %v2085
        %2087 = vrot.lane.b32.xlu0 %v1836, 96
        %v2088 = vpop.permute.xlu0 %2087
        %2089 = vrot.lane.b32.xlu0 %v1969, 96
        %v2090 = vpop.permute.xlu0 %2089
        %2091 = vrot.lane.b32.xlu0 %v1972, 96
        %v2092 = vpop.permute.xlu0 %2091
        %2093 = vrot.lane.b32.xlu0 %v1975, 96
        %v2094 = vpop.permute.xlu0 %2093
        %v2099 = vrot.slane %v2092, 4
        %v2100 = vsel %vm982, %v2099, %v2088
        %v2101 = vrot.slane %v2088, 4
        %v2102 = vsel %vm982, %v2092, %v2101
        %v2104 = vunpack.c.l.s4 1983009808
        %v2105 = vunpack.c.0.s8 %v2104
        %v2106 = vperm.slane %v2100, %v2105
        %v2108 = vunpack.c.l.s4 1983009808
        %v2109 = vunpack.c.0.s8 %v2108
        %v2110 = vperm.slane %v2102, %v2109
        %v2111 = vrot.slane %v2094, 4
        %v2112 = vsel %vm982, %v2111, %v2090
        %v2113 = vrot.slane %v2090, 4
        %v2114 = vsel %vm982, %v2094, %v2113
        %v2116 = vunpack.c.l.s4 1983009808
        %v2117 = vunpack.c.0.s8 %v2116
        %v2118 = vperm.slane %v2112, %v2117
        %v2120 = vunpack.c.l.s4 1983009808
        %v2121 = vunpack.c.0.s8 %v2120
        %v2122 = vperm.slane %v2114, %v2121
        %v2123 = vrot.slane %v2118, 4
        %v2124 = vsel %vm982, %v2123, %v2106
        %v2125 = vrot.slane %v2106, 4
        %v2126 = vsel %vm982, %v2118, %v2125
        %v2128 = vunpack.c.l.s4 1934713408
        %v2129 = vunpack.c.0.s8 %v2128
        %v2130 = vperm.slane %v2124, %v2129
        %v2132 = vunpack.c.l.s4 1934713408
        %v2133 = vunpack.c.0.s8 %v2132
        %v2134 = vperm.slane %v2126, %v2133
        %v2135 = vrot.slane %v2122, 4
        %v2136 = vsel %vm982, %v2135, %v2110
        %v2137 = vrot.slane %v2110, 4
        %v2138 = vsel %vm982, %v2122, %v2137
        %v2140 = vunpack.c.l.s4 1934713408
        %v2141 = vunpack.c.0.s8 %v2140
        %v2142 = vperm.slane %v2136, %v2141
        %v2144 = vunpack.c.l.s4 1934713408
        %v2145 = vunpack.c.0.s8 %v2144
        %v2146 = vperm.slane %v2138, %v2145
        %v2147 = vrot.slane %v2130, 4
        %v2148 = vsel %vm982, 0.0, %v2147
        %v2149 = vrot.slane %v2134, 4
        %v2150 = vsel %vm982, 0.0, %v2149
        %v2151 = vrot.slane %v2142, 4
        %v2152 = vsel %vm982, 0.0, %v2151
        %v2153 = vrot.slane %v2146, 4
        %v2154 = vsel %vm982, 0.0, %v2153
        %v2155 = vsel %vm982, %v2149, %v2130
        %v2157 = vunpack.c.l.s4 1983009808
        %v2158 = vunpack.c.0.s8 %v2157
        %v2159 = vperm.slane %v2155, %v2158
        %v2160 = vrot.slane %v2150, 4
        %v2161 = vsel %vm982, %v2160, %v2148
        %v2163 = vunpack.c.l.s4 1983009808
        %v2164 = vunpack.c.0.s8 %v2163
        %v2165 = vperm.slane %v2161, %v2164
        %v2166 = vsel %vm982, %v2153, %v2142
        %v2168 = vunpack.c.l.s4 1983009808
        %v2169 = vunpack.c.0.s8 %v2168
        %v2170 = vperm.slane %v2166, %v2169
        %v2171 = vrot.slane %v2154, 4
        %v2172 = vsel %vm982, %v2171, %v2152
        %v2174 = vunpack.c.l.s4 1983009808
        %v2175 = vunpack.c.0.s8 %v2174
        %v2176 = vperm.slane %v2172, %v2175
        %v2177 = vrot.slane %v2165, 4
        %v2178 = vsel %vm982, %v2177, %v2159
        %v2179 = vrot.slane %v2159, 4
        %v2180 = vsel %vm982, %v2165, %v2179
        %v2182 = vunpack.c.l.s4 1934713408
        %v2183 = vunpack.c.0.s8 %v2182
        %v2184 = vperm.slane %v2178, %v2183
        %v2186 = vunpack.c.l.s4 1934713408
        %v2187 = vunpack.c.0.s8 %v2186
        %v2188 = vperm.slane %v2180, %v2187
        %v2189 = vrot.slane %v2176, 4
        %v2190 = vsel %vm982, %v2189, %v2170
        %v2191 = vrot.slane %v2170, 4
        %v2192 = vsel %vm982, %v2176, %v2191
        %v2194 = vunpack.c.l.s4 1934713408
        %v2195 = vunpack.c.0.s8 %v2194
        %v2196 = vperm.slane %v2190, %v2195
        %v2198 = vunpack.c.l.s4 1934713408
        %v2199 = vunpack.c.0.s8 %v2198
        %v2200 = vperm.slane %v2192, %v2199
        %v2201 = vrot.slane %v2196, 4
        %v2202 = vsel %vm982, %v2201, %v2184
        %v2203 = vrot.slane %v2184, 4
        %v2204 = vsel %vm982, %v2196, %v2203
        %v2205 = vrot.slane %v2200, 4
        %v2206 = vsel %vm982, %v2205, %v2188
        %v2207 = vrot.slane %v2188, 4
        %v2208 = vsel %vm982, %v2200, %v2207
        %v2209 = vpack.c.bf16 %v1960, %v1960
        %v2210 = vpack.c.bf16 %v1962, %v1962
        %v2211 = vpack.c.bf16 %v1964, %v1964
        %v2212 = vpack.c.bf16 %v1966, %v1966
        %v2213 = vpack.c.bf16 %v2080, %v2080
        %v2214 = vpack.c.bf16 %v2082, %v2082
        %v2215 = vpack.c.bf16 %v2084, %v2084
        %v2216 = vpack.c.bf16 %v2086, %v2086
        %v2218 = vsel %vm1351, %v2209, 0
        %v2221 = vsel %vm1351, %v2213, 0
        %2223 = vmatpush.bf16.xpose.msra.mxu0 0
        %2224 = vmatpush.bf16.xpose.msra.mxu0 0
        %2225 = vmatpush.bf16.xpose.msra.mxu0 0
        %2226 = vmatpush.bf16.xpose.msra.mxu0 0
        %2227 = vmatpush.bf16.xpose.msra.mxu0 0
        %2228 = vmatpush.bf16.xpose.msra.mxu0 0
        %2229 = vmatpush.bf16.xpose.msra.mxu0 0
        %2230 = vmatpush.bf16.xpose.msra.mxu0 %v2221
        %2231 = vmatmul.bf16.gmra.mxu0 %v2218
        %v2232 = vpop.f32.mrf.mxu0
        %v2233 = vadd.f32 0.0, %v2232
        %v2234 = vpop.f32.mrf.mxu0
        %2235 = vdwg.mxu0
        %v2237 = vsel %vm1351, %v2210, 0
        %v2240 = vsel %vm1351, %v2214, 0
        %2242 = vmatpush.bf16.xpose.msra.mxu0 0
        %2243 = vmatpush.bf16.xpose.msra.mxu0 0
        %2244 = vmatpush.bf16.xpose.msra.mxu0 0
        %2245 = vmatpush.bf16.xpose.msra.mxu0 0
        %2246 = vmatpush.bf16.xpose.msra.mxu0 0
        %2247 = vmatpush.bf16.xpose.msra.mxu0 0
        %2248 = vmatpush.bf16.xpose.msra.mxu0 0
        %2249 = vmatpush.bf16.xpose.msra.mxu0 %v2240
        %2250 = vmatmul.bf16.gmra.mxu0 %v2237
        %v2251 = vpop.f32.mrf.mxu0
        %v2252 = vadd.f32 0.0, %v2251
        %v2253 = vpop.f32.mrf.mxu0
        %2254 = vdwg.mxu0
        %v2256 = vsel %vm1351, %v2211, 0
        %v2259 = vsel %vm1351, %v2215, 0
        %2261 = vmatpush.bf16.xpose.msra.mxu0 0
        %2262 = vmatpush.bf16.xpose.msra.mxu0 0
        %2263 = vmatpush.bf16.xpose.msra.mxu0 0
        %2264 = vmatpush.bf16.xpose.msra.mxu0 0
        %2265 = vmatpush.bf16.xpose.msra.mxu0 0
        %2266 = vmatpush.bf16.xpose.msra.mxu0 0
        %2267 = vmatpush.bf16.xpose.msra.mxu0 0
        %2268 = vmatpush.bf16.xpose.msra.mxu0 %v2259
        %2269 = vmatmul.bf16.gmra.mxu0 %v2256
        %v2270 = vpop.f32.mrf.mxu0
        %v2271 = vadd.f32 0.0, %v2270
        %v2272 = vpop.f32.mrf.mxu0
        %2273 = vdwg.mxu0
        %v2275 = vsel %vm1351, %v2212, 0
        %v2278 = vsel %vm1351, %v2216, 0
        %2280 = vmatpush.bf16.xpose.msra.mxu0 0
        %2281 = vmatpush.bf16.xpose.msra.mxu0 0
        %2282 = vmatpush.bf16.xpose.msra.mxu0 0
        %2283 = vmatpush.bf16.xpose.msra.mxu0 0
        %2284 = vmatpush.bf16.xpose.msra.mxu0 0
        %2285 = vmatpush.bf16.xpose.msra.mxu0 0
        %2286 = vmatpush.bf16.xpose.msra.mxu0 0
        %2287 = vmatpush.bf16.xpose.msra.mxu0 %v2278
        %2288 = vmatmul.bf16.gmra.mxu0 %v2275
        %v2289 = vpop.f32.mrf.mxu0
        %v2290 = vadd.f32 0.0, %v2289
        %v2291 = vpop.f32.mrf.mxu0
        %2292 = vdwg.mxu0
        %v2293 = vsel %vm1351, %v2233, -inf
        %2294 = vmax.xlane.f32.xlu0 %v2293
        %v2295 = vpop.xlane.xlu0 %2294
        %v2296 = vsel %vm1351, %v2252, -inf
        %2297 = vmax.xlane.f32.xlu0 %v2296
        %v2298 = vpop.xlane.xlu0 %2297
        %v2299 = vsel %vm1351, %v2271, -inf
        %2300 = vmax.xlane.f32.xlu0 %v2299
        %v2301 = vpop.xlane.xlu0 %2300
        %v2302 = vsel %vm1351, %v2290, -inf
        %2303 = vmax.xlane.f32.xlu0 %v2302
        %v2304 = vpop.xlane.xlu0 %2303
        %v2305 = vsub.f32 %v2233, %v2295
        %v2306 = vsub.f32 %v2252, %v2298
        %v2307 = vsub.f32 %v2271, %v2301
        %v2308 = vsub.f32 %v2290, %v2304
        %v2309 = vmul.f32 %v2305, 1.442695
        %v2310 = vpow.pop %v2309
        %v2311 = vmul.f32 %v2306, 1.442695
        %v2312 = vpow.pop %v2311
        %v2313 = vmul.f32 %v2307, 1.442695
        %v2314 = vpow.pop %v2313
        %v2315 = vmul.f32 %v2308, 1.442695
        %v2316 = vpow.pop %v2315
        %v2317 = vsel %vm1351, %v2310, 0.0
        %2318 = vadd.xlane.f32.xlu0 %v2317
        %v2319 = vpop.xlane.xlu0 %2318
        %v2320 = vsel %vm1351, %v2312, 0.0
        %2321 = vadd.xlane.f32.xlu0 %v2320
        %v2322 = vpop.xlane.xlu0 %2321
        %v2323 = vsel %vm1351, %v2314, 0.0
        %2324 = vadd.xlane.f32.xlu0 %v2323
        %v2325 = vpop.xlane.xlu0 %2324
        %v2326 = vsel %vm1351, %v2316, 0.0
        %2327 = vadd.xlane.f32.xlu0 %v2326
        %v2328 = vpop.xlane.xlu0 %2327
        %v2329 = vrcp.pop %v2319
        %v2330 = vrcp.pop %v2322
        %v2331 = vrcp.pop %v2325
        %v2332 = vrcp.pop %v2328
        %v2333 = vmul.f32 %v2310, %v2329
        %v2334 = vmul.f32 %v2312, %v2330
        %v2335 = vmul.f32 %v2314, %v2331
        %v2336 = vmul.f32 %v2316, %v2332
        %v2337 = vpack.c.bf16 %v2333, %v2333
        %v2338 = vpack.c.bf16 %v2334, %v2334
        %v2339 = vpack.c.bf16 %v2335, %v2335
        %v2340 = vpack.c.bf16 %v2336, %v2336
        %v2341 = vpack.c.bf16 %v2202, %v2202
        %v2342 = vpack.c.bf16 %v2204, %v2204
        %v2343 = vpack.c.bf16 %v2206, %v2206
        %v2344 = vpack.c.bf16 %v2208, %v2208
        %v2346 = vsel %vm1351, %v2337, 0
        %v2349 = vsel %vm1494, %v2341, 0
        %2351 = vmatpush.bf16.msra.mxu0 0
        %2352 = vmatpush.bf16.msra.mxu0 0
        %2353 = vmatpush.bf16.msra.mxu0 0
        %2354 = vmatpush.bf16.msra.mxu0 0
        %2355 = vmatpush.bf16.msra.mxu0 0
        %2356 = vmatpush.bf16.msra.mxu0 0
        %2357 = vmatpush.bf16.msra.mxu0 0
        %2358 = vmatpush.bf16.msra.mxu0 %v2349
        %2359 = vmatmul.bf16.gmra.mxu0 %v2346
        %v2360 = vpop.f32.mrf.mxu0
        %v2361 = vadd.f32 0.0, %v2360
        %v2362 = vpop.f32.mrf.mxu0
        %2363 = vdwg.mxu0
        %v2365 = vsel %vm1351, %v2338, 0
        %v2368 = vsel %vm1494, %v2342, 0
        %2370 = vmatpush.bf16.msra.mxu0 0
        %2371 = vmatpush.bf16.msra.mxu0 0
        %2372 = vmatpush.bf16.msra.mxu0 0
        %2373 = vmatpush.bf16.msra.mxu0 0
        %2374 = vmatpush.bf16.msra.mxu0 0
        %2375 = vmatpush.bf16.msra.mxu0 0
        %2376 = vmatpush.bf16.msra.mxu0 0
        %2377 = vmatpush.bf16.msra.mxu0 %v2368
        %2378 = vmatmul.bf16.gmra.mxu0 %v2365
        %v2379 = vpop.f32.mrf.mxu0
        %v2380 = vadd.f32 0.0, %v2379
        %v2381 = vpop.f32.mrf.mxu0
        %2382 = vdwg.mxu0
        %v2384 = vsel %vm1351, %v2339, 0
        %v2387 = vsel %vm1494, %v2343, 0
        %2389 = vmatpush.bf16.msra.mxu0 0
        %2390 = vmatpush.bf16.msra.mxu0 0
        %2391 = vmatpush.bf16.msra.mxu0 0
        %2392 = vmatpush.bf16.msra.mxu0 0
        %2393 = vmatpush.bf16.msra.mxu0 0
        %2394 = vmatpush.bf16.msra.mxu0 0
        %2395 = vmatpush.bf16.msra.mxu0 0
        %2396 = vmatpush.bf16.msra.mxu0 %v2387
        %2397 = vmatmul.bf16.gmra.mxu0 %v2384
        %v2398 = vpop.f32.mrf.mxu0
        %v2399 = vadd.f32 0.0, %v2398
        %v2400 = vpop.f32.mrf.mxu0
        %2401 = vdwg.mxu0
        %v2403 = vsel %vm1351, %v2340, 0
        %v2406 = vsel %vm1494, %v2344, 0
        %2408 = vmatpush.bf16.msra.mxu0 0
        %2409 = vmatpush.bf16.msra.mxu0 0
        %2410 = vmatpush.bf16.msra.mxu0 0
        %2411 = vmatpush.bf16.msra.mxu0 0
        %2412 = vmatpush.bf16.msra.mxu0 0
        %2413 = vmatpush.bf16.msra.mxu0 0
        %2414 = vmatpush.bf16.msra.mxu0 0
        %2415 = vmatpush.bf16.msra.mxu0 %v2406
        %2416 = vmatmul.bf16.gmra.mxu0 %v2403
        %v2417 = vpop.f32.mrf.mxu0
        %v2418 = vadd.f32 0.0, %v2417
        %v2419 = vpop.f32.mrf.mxu0
        %2420 = vdwg.mxu0
        %v2421 = vrot.slane %v2399, 4
        %v2422 = vsel %vm982, %v2421, %v2361
        %v2423 = vrot.slane %v2361, 4
        %v2424 = vsel %vm982, %v2399, %v2423
        %v2426 = vunpack.c.l.s4 1983009808
        %v2427 = vunpack.c.0.s8 %v2426
        %v2428 = vperm.slane %v2422, %v2427
        %v2430 = vunpack.c.l.s4 1983009808
        %v2431 = vunpack.c.0.s8 %v2430
        %v2432 = vperm.slane %v2424, %v2431
        %v2433 = vrot.slane %v2418, 4
        %v2434 = vsel %vm982, %v2433, %v2380
        %v2435 = vrot.slane %v2380, 4
        %v2436 = vsel %vm982, %v2418, %v2435
        %v2438 = vunpack.c.l.s4 1983009808
        %v2439 = vunpack.c.0.s8 %v2438
        %v2440 = vperm.slane %v2434, %v2439
        %v2442 = vunpack.c.l.s4 1983009808
        %v2443 = vunpack.c.0.s8 %v2442
        %v2444 = vperm.slane %v2436, %v2443
        %v2445 = vrot.slane %v2440, 4
        %v2446 = vsel %vm982, %v2445, %v2428
        %v2447 = vrot.slane %v2428, 4
        %v2448 = vsel %vm982, %v2440, %v2447
        %v2450 = vunpack.c.l.s4 1934713408
        %v2451 = vunpack.c.0.s8 %v2450
        %v2452 = vperm.slane %v2446, %v2451
        %v2454 = vunpack.c.l.s4 1934713408
        %v2455 = vunpack.c.0.s8 %v2454
        %v2456 = vperm.slane %v2448, %v2455
        %v2457 = vrot.slane %v2444, 4
        %v2458 = vsel %vm982, %v2457, %v2432
        %v2459 = vrot.slane %v2432, 4
        %v2460 = vsel %vm982, %v2444, %v2459
        %v2462 = vunpack.c.l.s4 1934713408
        %v2463 = vunpack.c.0.s8 %v2462
        %v2464 = vperm.slane %v2458, %v2463
        %v2466 = vunpack.c.l.s4 1934713408
        %v2467 = vunpack.c.0.s8 %v2466
        %v2468 = vperm.slane %v2460, %v2467
        %v2469 = vrot.slane %v2452, 4
        %v2470 = vsel %vm982, 0.0, %v2469
        %v2471 = vrot.slane %v2456, 4
        %v2472 = vsel %vm982, 0.0, %v2471
        %v2473 = vrot.slane %v2464, 4
        %v2474 = vsel %vm982, 0.0, %v2473
        %v2475 = vrot.slane %v2468, 4
        %v2476 = vsel %vm982, 0.0, %v2475
        %v2477 = vsel %vm982, %v2471, %v2452
        %v2479 = vunpack.c.l.s4 1983009808
        %v2480 = vunpack.c.0.s8 %v2479
        %v2481 = vperm.slane %v2477, %v2480
        %v2482 = vrot.slane %v2472, 4
        %v2483 = vsel %vm982, %v2482, %v2470
        %v2485 = vunpack.c.l.s4 1983009808
        %v2486 = vunpack.c.0.s8 %v2485
        %v2487 = vperm.slane %v2483, %v2486
        %v2488 = vsel %vm982, %v2475, %v2464
        %v2490 = vunpack.c.l.s4 1983009808
        %v2491 = vunpack.c.0.s8 %v2490
        %v2492 = vperm.slane %v2488, %v2491
        %v2493 = vrot.slane %v2476, 4
        %v2494 = vsel %vm982, %v2493, %v2474
        %v2496 = vunpack.c.l.s4 1983009808
        %v2497 = vunpack.c.0.s8 %v2496
        %v2498 = vperm.slane %v2494, %v2497
        %v2499 = vrot.slane %v2487, 4
        %v2500 = vsel %vm982, %v2499, %v2481
        %v2501 = vrot.slane %v2481, 4
        %v2502 = vsel %vm982, %v2487, %v2501
        %v2504 = vunpack.c.l.s4 1934713408
        %v2505 = vunpack.c.0.s8 %v2504
        %v2506 = vperm.slane %v2500, %v2505
        %v2508 = vunpack.c.l.s4 1934713408
        %v2509 = vunpack.c.0.s8 %v2508
        %v2510 = vperm.slane %v2502, %v2509
        %v2511 = vrot.slane %v2498, 4
        %v2512 = vsel %vm982, %v2511, %v2492
        %v2513 = vrot.slane %v2492, 4
        %v2514 = vsel %vm982, %v2498, %v2513
        %v2516 = vunpack.c.l.s4 1934713408
        %v2517 = vunpack.c.0.s8 %v2516
        %v2518 = vperm.slane %v2512, %v2517
        %v2520 = vunpack.c.l.s4 1934713408
        %v2521 = vunpack.c.0.s8 %v2520
        %v2522 = vperm.slane %v2514, %v2521
        %v2523 = vrot.slane %v2518, 4
        %v2524 = vsel %vm982, %v2523, %v2506
        %v2525 = vrot.slane %v2506, 4
        %v2526 = vsel %vm982, %v2518, %v2525
        %v2527 = vrot.slane %v2522, 4
        %v2528 = vsel %vm982, %v2527, %v2510
        %v2529 = vrot.slane %v2510, 4
        %v2530 = vsel %vm982, %v2522, %v2529
        %2532 = vrot.lane.b32.xlu0 %v2526, 8
        %v2533 = vpop.permute.xlu0 %2532
        %2536 = vrot.lane.b32.xlu0 %v2528, 16
        %v2537 = vpop.permute.xlu0 %2536
        %2540 = vrot.lane.b32.xlu0 %v2530, 24
        %v2541 = vpop.permute.xlu0 %2540
        %v2543 = vsel %vm1351, %v2524, %v2533
        %v2544 = vsel %vm1691, %v2543, %v2537
        %v2545 = vsel %vm1693, %v2544, %v2541
        %v2546 = vpack.c.bf16 %v2545, %v2545
        %v2548 = vperm.slane %v1843, 0
        %v2554 = vunpack.c.l.b16 %v1839
        %v2555 = vunpack.c.l.b16 %v1840
        %v2556 = vunpack.c.l.b16 %v1841
        %v2557 = vunpack.c.l.b16 %v1842
        %v2558 = vpack.c.b16 %v2555, %v2554
        %v2559 = vpack.c.b16 %v2557, %v2556
        %v2563 = vsel %vm946, %v2546, 0
        %2565 = vmatpush.bf16.msra.mxu0 0
        %2566 = vmatpush.bf16.msra.mxu0 0
        %2567 = vmatpush.bf16.msra.mxu0 0
        %2568 = vmatpush.bf16.msra.mxu0 0
        %2569 = vmatpush.bf16.msra.mxu0 0
        %2570 = vmatpush.bf16.msra.mxu0 0
        %2571 = vmatpush.bf16.msra.mxu0 %v2559
        %2572 = vmatpush.bf16.msra.mxu0 %v2558
        %2573 = vmatmul.bf16.gmra.mxu0 %v2563
        %v2574 = vpop.f32.mrf.mxu0
        %v2575 = vadd.f32 %v2548, %v2574
        %v2576 = vpop.f32.mrf.mxu0
        %2577 = vdwg.mxu0
        %v2578 = vadd.f32 %v1764, %v2575
        %v2579 = vsel %vm946, %v2578, 0.0
        %2580 = vadd.xlane.f32.xlu0 %v2579
        %v2581 = vpop.xlane.xlu0 %2580
        %v2582 = vmul.f32 %v2581, %v1737
        %v2583 = vsub.f32 %v2578, %v2582
        %v2584 = vmul.f32 %v2583, %v2583
        %v2585 = vsel %vm946, %v2584, 0.0
        %2586 = vadd.xlane.f32.xlu0 %v2585
        %v2587 = vpop.xlane.xlu0 %2586
        %v2588 = vmul.f32 %v2587, %v1737
        %v2589 = vadd.f32 %v2588, 1e-05
        %v2590 = vrsqrt.pop %v2589
        %v2591 = vmul.f32 %v2590, %v2589
        %v2592 = vmul.f32 %v2591, %v2590
        %v2593 = vmul.f32 0.5, %v2592
        %v2594 = vsub.f32 1.5, %v2593
        %v2595 = vmul.f32 %v2590, %v2594
        %vm2596 = vweird.f32 %v2589
        %vm2597 = vweird.f32 %v2590
        %vm2598 = vmor %vm2596, %vm2597
        %v2599 = vsel %vm2598, %v2590, %v2595
        %v2600 = vmul.f32 %v2583, %v2599
        %v2602 = vperm.slane %v1844, 0
        %v2604 = vmul.f32 %v2600, %v2602
        %v2606 = vperm.slane %v1845, 0
        %v2608 = vadd.f32 %v2604, %v2606
        %v2609 = vld [vmem:[#allocation19] sm:$0xf]
        %v2610 = vld [vmem:[#allocation19 + $0x4] sm:$0xf]
        %v2611 = vld [vmem:[#allocation19 + $0x8] sm:$0xf]
        %v2612 = vld [vmem:[#allocation19 + $0xc] sm:$0xf]
        %v2613 = vpack.c.bf16 %v2608, %v2608
        %v2614 = vld [vmem:[#allocation20] sm:$0x1]
        %v2616 = vperm.slane %v2614, 0
        %v2622 = vunpack.c.l.b16 %v2609
        %v2623 = vunpack.c.l.b16 %v2610
        %v2624 = vunpack.c.l.b16 %v2611
        %v2625 = vunpack.c.l.b16 %v2612
        %v2626 = vpack.c.b16 %v2623, %v2622
        %v2627 = vpack.c.b16 %v2625, %v2624
        %v2631 = vsel %vm946, %v2613, 0
        %2633 = vmatpush.bf16.msra.mxu0 0
        %2634 = vmatpush.bf16.msra.mxu0 0
        %2635 = vmatpush.bf16.msra.mxu0 0
        %2636 = vmatpush.bf16.msra.mxu0 0
        %2637 = vmatpush.bf16.msra.mxu0 0
        %2638 = vmatpush.bf16.msra.mxu0 0
        %2639 = vmatpush.bf16.msra.mxu0 %v2627
        %2640 = vmatpush.bf16.msra.mxu0 %v2626
        %2641 = vmatmul.bf16.gmra.mxu0 %v2631
        %v2642 = vpop.f32.mrf.mxu0
        %v2643 = vadd.f32 %v2616, %v2642
        %v2644 = vpop.f32.mrf.mxu0
        %2645 = vdwg.mxu0
        %v2646 = vmax.f32 %v2643, 0.0
        %v2647 = vld [vmem:[%s18] sm:$0xf]
        %v2648 = vld [vmem:[%s18 + $0x4] sm:$0xf]
        %v2649 = vld [vmem:[%s18 + $0x8] sm:$0xf]
        %v2650 = vld [vmem:[%s18 + $0xc] sm:$0xf]
        %v2651 = vld [vmem:[%s18 + $0x10] sm:$0xf]
        %v2652 = vld [vmem:[%s18 + $0x14] sm:$0xf]
        %v2653 = vld [vmem:[%s18 + $0x18] sm:$0xf]
        %v2654 = vld [vmem:[%s18 + $0x1c] sm:$0xf]
        %v2655 = vpack.c.bf16 %v2646, %v2646
        %v2656 = vld [vmem:[#allocation22] sm:$0x1]
        %v2658 = vperm.slane %v2656, 0
        %v2668 = vunpack.c.l.b16 %v2647
        %v2669 = vunpack.c.l.b16 %v2648
        %v2670 = vunpack.c.l.b16 %v2649
        %v2671 = vunpack.c.l.b16 %v2650
        %v2672 = vunpack.c.l.b16 %v2651
        %v2673 = vunpack.c.l.b16 %v2652
        %v2674 = vunpack.c.l.b16 %v2653
        %v2675 = vunpack.c.l.b16 %v2654
        %v2676 = vpack.c.b16 %v2669, %v2668
        %v2677 = vpack.c.b16 %v2671, %v2670
        %v2678 = vpack.c.b16 %v2673, %v2672
        %v2679 = vpack.c.b16 %v2675, %v2674
        %vm2684 = vcmask 523264
        %v2686 = vsel %vm2684, %v2655, 0
        %2688 = vmatpush.bf16.msra.mxu0 0
        %2689 = vmatpush.bf16.msra.mxu0 0
        %2690 = vmatpush.bf16.msra.mxu0 0
        %2691 = vmatpush.bf16.msra.mxu0 0
        %2692 = vmatpush.bf16.msra.mxu0 %v2679
        %2693 = vmatpush.bf16.msra.mxu0 %v2678
        %2694 = vmatpush.bf16.msra.mxu0 %v2677
        %2695 = vmatpush.bf16.msra.mxu0 %v2676
        %2696 = vmatmul.bf16.gmra.mxu0 %v2686
        %v2697 = vpop.f32.mrf.mxu0
        %v2698 = vadd.f32 %v2658, %v2697
        %v2699 = vpop.f32.mrf.mxu0
        %2700 = vdwg.mxu0
        %v2701 = vadd.f32 %v2608, %v2698
        %v2702 = vld [vmem:[#allocation23] sm:$0x1]
        %v2703 = vld [vmem:[#allocation25] sm:$0x1]
        %v2704 = vsel %vm946, %v2701, 0.0
        %2705 = vadd.xlane.f32.xlu0 %v2704
        %v2706 = vpop.xlane.xlu0 %2705
        %v2707 = vmul.f32 %v2706, %v1737
        %v2708 = vsub.f32 %v2701, %v2707
        %v2709 = vmul.f32 %v2708, %v2708
        %v2710 = vsel %vm946, %v2709, 0.0
        %2711 = vadd.xlane.f32.xlu0 %v2710
        %v2712 = vpop.xlane.xlu0 %2711
        %v2713 = vmul.f32 %v2712, %v1737
        %v2714 = vadd.f32 %v2713, 1e-05
        %v2715 = vrsqrt.pop %v2714
        %v2716 = vmul.f32 %v2715, %v2714
        %v2717 = vmul.f32 %v2716, %v2715
        %v2718 = vmul.f32 0.5, %v2717
        %v2719 = vsub.f32 1.5, %v2718
        %v2720 = vmul.f32 %v2715, %v2719
        %vm2721 = vweird.f32 %v2714
        %vm2722 = vweird.f32 %v2715
        %vm2723 = vmor %vm2721, %vm2722
        %v2724 = vsel %vm2723, %v2715, %v2720
        %v2725 = vmul.f32 %v2708, %v2724
        %v2727 = vperm.slane %v2702, 0
        %v2729 = vmul.f32 %v2725, %v2727
        %v2731 = vperm.slane %v2703, 0
        %v2733 = vadd.f32 %v2729, %v2731
        %2734 = vst.msk [vmem:[%s913] sm:$0xff] %vm946, %v2733
        %s2735 = sand.u32 %s524, 1
        %s2736 = scalar_lea.sflag [#allocation4], %s2735
        %s2737 = sand.u32 %s524, 1
        %s2738 = smul.addr %s2737, 8
        %s2739 = scalar_lea.vmem [#allocation26], %s2738
        // Predicated region
        $region169: #{transformer_decoder_block.1} parent=107 // pred_check
          %p2740 = pneg %p534
        $region170: #{transformer_decoder_block.1} parent=107 // pred_check_branch
          %2742 = sbr.rel (%p2740) target = $region172
        $region171: #{transformer_decoder_block.1} parent=107 // pred_region
          %2744 = vsyncadd %s2736, 0
          %s2745 = smul.addr %s44, 8
          %s2746 = scalar_lea.hbm %s22, %s2745
          %s2748 = sshll.u32 %s2739, 4
          %s2749 = int_to_ptr.vmem [resolvable:$true] %s2748
          %s2750 = sshll.u32 %s2746, 4
          %s2751 = int_to_ptr.hbm [resolvable:$true] %s2750
          %2753 = dma.vmem_to_hbm [thread:$0]  %s2749, 128, %s2751, %s2736
        $region172: #{transformer_decoder_block.1} parent=107 // pred_fallthru
          _
      $region108: #{transformer_decoder_block.1} parent=5 // pred_fallthru
        _
      %p2754 = scmp.le.s32.totalorder 2, %s39
      // Predicated region
      $region173: #{transformer_decoder_block.1} parent=5 // pred_check
        %p2755 = pneg %p2754
      $region174: #{transformer_decoder_block.1} parent=5 // pred_check_branch
        %2757 = sbr.rel (%p2755) target = $region176
      $region175: #{transformer_decoder_block.1} parent=5 // pred_region
        %s2758 = ssub.s32 %s39, 2
        // Predicated region
        $region177: #{transformer_decoder_block.1} parent=175 // pred_check
          %p2759 = pneg %p540
        $region178: #{transformer_decoder_block.1} parent=175 // pred_check_branch
          %2761 = sbr.rel (%p2759) target = $region180
        $region179: #{transformer_decoder_block.1} parent=175 // pred_region
          %s2762 = sand.u32 %s525, 1
          %s2763 = scalar_lea.sflag [#allocation4], %s2762
          %s2764 = sand.u32 %s525, 1
          %s2765 = smul.addr %s2764, 8
          %s2766 = scalar_lea.vmem [#allocation26], %s2765
          %2768 = dma.done %s2763, 128
        $region180: #{transformer_decoder_block.1} parent=175 // pred_fallthru
          _
      $region176: #{transformer_decoder_block.1} parent=5 // pred_fallthru
        _
    $region6: #{transformer_decoder_block.1} parent=1 // loop_footer
      %s43 = sadd.s32 1, %s39
    $region7: #{transformer_decoder_block.1} parent=1 // loop_footer_branch
      %38 = sbr.rel target = $region3
    $region8: #{transformer_decoder_block.1} parent=1 // loop_exit
      _
    %2769 = vsyncpa [#allocation3], 1
    %s2770 = scalar_lea.sflag [#allocation3], 1
    %2771 = vsyncpa %s2770, 1
    %2772 = vsyncpa [#allocation6], 1
    %2773 = vsyncpa [#allocation9], 1
    %2774 = vsyncpa [#allocation12], 1
    %2775 = vsyncpa [#allocation15], 1
    %2776 = vsyncpa [#allocation18], 1
    %2777 = vsyncpa [#allocation21], 1
    %2778 = vsyncpa [#allocation24], 1
    %2779 = vsyncpa [#allocation4], 1
    %s2780 = scalar_lea.sflag [#allocation4], 1
    %2781 = vsyncpa %s2780, 1

</llo_original>
